<compile_context>
chip_gen: v7x
topology: tpu7x:2x2x1
jax: 0.10.0
libtpu: 0.0.40
codegen_flags: <defaults>
</compile_context>

<pallas_src>
import math
import functools

import jax
import jax.numpy as jnp
from jax import lax
from jax.experimental import pallas as pl
from jax.experimental.pallas import tpu as pltpu

EPS = 1e-5  # PyTorch LayerNorm default eps


def _layer_norm(x, w, b):
    mu = jnp.mean(x, axis=-1, keepdims=True)
    d = x - mu
    var = jnp.mean(d * d, axis=-1, keepdims=True)
    return d * lax.rsqrt(var + EPS) * w + b


def _bf16_dot(a_f32, w_bf16):
    """MXU matmul with bf16 inputs and f32 accumulation."""
    return jnp.dot(a_f32.astype(jnp.bfloat16), w_bf16,
                   preferred_element_type=jnp.float32)


def _swap_tokens(x, b):
    """Swap the two B-row token halves of a (2B, H) activation (sublane swap)."""
    return jnp.concatenate([x[b:], x[:b]], axis=0)


def _detail_au_transformer_kernel(
    num_layers, hidden_dim, num_heads, batch,
    # refs (inputs)
    detail_ref, au_ref,
    wde_ref, wau_ref, bpos_ref,
    wq_ref, wk_ref, wv_ref, bq_ref, bk_ref, bv_ref,
    wo_ref, bo_ref,
    ln1w_ref, ln1b_ref,
    w1_ref, b1_ref, w2_ref, b2_ref,
    ln2w_ref, ln2b_ref,
    wd1_ref, bd1_ref, wd2_ref, bd2_ref,
    magg_ref, maggT_ref,
    # refs (outputs)
    out_ref,
):
    H = hidden_dim
    B = batch
    nh = num_heads
    dh = H // nh
    scale = 1.0 / math.sqrt(dh)

    magg = magg_ref[...]    # (H, nh)  head aggregation (0/1)
    maggT = maggT_ref[...]  # (nh, H)  head broadcast   (0/1)

    # --- embeddings + positional embedding, fused token layout (2B, H) ----
    e_det = _bf16_dot(detail_ref[...], wde_ref[...])          # (B, H)
    e_au = _bf16_dot(au_ref[...], wau_ref[...])               # (B, H)
    x = jnp.concatenate([e_det, e_au], axis=0) + bpos_ref[...]  # (2B, H)

    # --- post-norm transformer encoder layers (dropout = identity) --------
    for l in range(num_layers):
        xb = x.astype(jnp.bfloat16)
        q = jnp.dot(xb, wq_ref[l], preferred_element_type=jnp.float32) + bq_ref[l]
        k = jnp.dot(xb, wk_ref[l], preferred_element_type=jnp.float32) + bk_ref[l]
        v = jnp.dot(xb, wv_ref[l], preferred_element_type=jnp.float32) + bv_ref[l]

        k_swap = _swap_tokens(k, B)   # [k1; k0]
        v_swap = _swap_tokens(v, B)   # [v1; v0]

        # All four per-head score sets in ONE (4B, H) @ (H, nh) matmul:
        # rows [0,2B)  : q*k       -> s00 (detail rows), s11 (au rows)
        # rows [2B,4B) : q*k_swap  -> s01 (detail rows), s10 (au rows)
        prod = jnp.concatenate([q * k, q * k_swap], axis=0)            # (4B, H)
        s = jnp.dot(prod, magg, preferred_element_type=jnp.float32) * scale  # (4B, nh)
        s_d = s[:2 * B]
        s_c = s[2 * B:]

        # softmax over the 2 keys (per head), f32
        m = jnp.maximum(s_d, s_c)
        e_d = jnp.exp(s_d - m)
        e_c = jnp.exp(s_c - m)
        inv = pl.reciprocal(e_d + e_c, approx=True)
        p = jnp.concatenate([e_d * inv, e_c * inv], axis=0)            # (4B, nh)

        # broadcast per-head probs back to feature width in ONE matmul
        pb = jnp.dot(p, maggT, preferred_element_type=jnp.float32)     # (4B, H)
        attn = pb[:2 * B] * v + pb[2 * B:] * v_swap                    # (2B, H)

        a = _bf16_dot(attn, wo_ref[l]) + bo_ref[l]
        y = _layer_norm(x + a, ln1w_ref[l], ln1b_ref[l])

        h1 = jnp.maximum(_bf16_dot(y, w1_ref[l]) + b1_ref[l], 0.0)
        f = _bf16_dot(h1, w2_ref[l]) + b2_ref[l]
        x = _layer_norm(y + f, ln2w_ref[l], ln2b_ref[l])

    # --- decoder on the detail token (rows [0, B) of the fused layout) ----
    x0 = x[:B]
    h = jnp.maximum(_bf16_dot(x0, wd1_ref[...]) + bd1_ref[...], 0.0)
    out_ref[...] = _bf16_dot(h, wd2_ref[...]) + bd2_ref[...]


def detail_au_transformer(detail, au, params, *, num_layers, hidden_dim,
                          num_heads, output_dim):
    B = detail.shape[0]
    H = hidden_dim
    nh = num_heads
    dh = H // nh
    f32, bf16 = jnp.float32, jnp.bfloat16

    # head aggregation matrices (0/1 constants, exact in any dtype)
    heads = jnp.arange(H, dtype=jnp.int32) // dh
    magg = (heads[:, None] == jnp.arange(nh, dtype=jnp.int32)[None, :]).astype(f32)
    maggT = magg.T

    # embedding bias + positional embedding, pre-tiled to the fused (2B, H) layout
    bpos = jnp.concatenate([
        jnp.broadcast_to(params["bde"] + params["pos"][0:1], (B, H)),
        jnp.broadcast_to(params["bau"] + params["pos"][1:2], (B, H)),
    ], axis=0).astype(f32)

    # split the fused QKV projection so every matmul output is lane-aligned
    wqkv, bqkv = params["wqkv"], params["bqkv"]            # (L,H,3H), (L,1,3H)
    wq, wk, wv = wqkv[:, :, :H], wqkv[:, :, H:2 * H], wqkv[:, :, 2 * H:]
    bq, bk, bv = bqkv[:, :, :H], bqkv[:, :, H:2 * H], bqkv[:, :, 2 * H:]

    inputs = (
        detail.astype(f32), au.astype(f32),
        params["wde"].astype(bf16), params["wau"].astype(bf16), bpos,
        wq.astype(bf16), wk.astype(bf16), wv.astype(bf16),
        bq.astype(f32), bk.astype(f32), bv.astype(f32),
        params["wo"].astype(bf16), params["bo"].astype(f32),
        params["ln1w"].astype(f32), params["ln1b"].astype(f32),
        params["w1"].astype(bf16), params["b1"].astype(f32),
        params["w2"].astype(bf16), params["b2"].astype(f32),
        params["ln2w"].astype(f32), params["ln2b"].astype(f32),
        params["wd1"].astype(bf16), params["bd1"].astype(f32),
        params["wd2"].astype(bf16), params["bd2"].astype(f32),
        magg, maggT,
    )

    vmem_spec = pl.BlockSpec(memory_space=pltpu.MemorySpace.VMEM)
    kernel = functools.partial(
        _detail_au_transformer_kernel, num_layers, hidden_dim, num_heads, B)

    # TODO(synk): at production sizes (H=256, B>=128, detail_dim=2048) add a
    # parallel batch grid (v7x 2nd TensorCore) and a layer-streaming grid for
    # the stacked weights instead of whole-array VMEM residency.
    return pl.pallas_call(
        kernel,
        out_shape=jax.ShapeDtypeStruct((B, output_dim), jnp.float32),
        in_specs=[vmem_spec] * len(inputs),
        out_specs=vmem_spec,
    )(*inputs)


# ---------------------------------------------------------------------------
# pure-JAX f32 reference (standard multi-head attention) for correctness check
# ---------------------------------------------------------------------------
def reference(detail, au, params, *, num_layers, hidden_dim, num_heads):
    H, nh = hidden_dim, num_heads
    dh = H // nh
    B = detail.shape[0]

    x0 = detail @ params["wde"] + params["bde"] + params["pos"][0]
    x1 = au @ params["wau"] + params["bau"] + params["pos"][1]
    x = jnp.stack([x0, x1], axis=1)                       # (B, 2, H)

    for l in range(num_layers):
        qkv = x @ params["wqkv"][l] + params["bqkv"][l]   # (B, 2, 3H)
        q, k, v = jnp.split(qkv, 3, axis=-1)
        qh = q.reshape(B, 2, nh, dh).transpose(0, 2, 1, 3)
        kh = k.reshape(B, 2, nh, dh).transpose(0, 2, 1, 3)
        vh = v.reshape(B, 2, nh, dh).transpose(0, 2, 1, 3)
        s = jnp.einsum("bhqd,bhkd->bhqk", qh, kh) / math.sqrt(dh)
        p = jax.nn.softmax(s, axis=-1)
        o = jnp.einsum("bhqk,bhkd->bhqd", p, vh).transpose(0, 2, 1, 3).reshape(B, 2, H)
        a = o @ params["wo"][l] + params["bo"][l]
        y = _layer_norm(x + a, params["ln1w"][l], params["ln1b"][l])
        f = (jnp.maximum(y @ params["w1"][l] + params["b1"][l], 0.0)
             @ params["w2"][l] + params["b2"][l])
        x = _layer_norm(y + f, params["ln2w"][l], params["ln2b"][l])

    x0 = x[:, 0, :]
    h = jnp.maximum(x0 @ params["wd1"] + params["bd1"], 0.0)
    return h @ params["wd2"] + params["bd2"]


def init_params(key, *, detail_dim, au_dim, hidden_dim, ff_dim, output_dim,
                num_layers):
    H, F, L = hidden_dim, ff_dim, num_layers
    ks = iter(jax.random.split(key, 32))
    n = lambda shape, s=0.05: s * jax.random.normal(next(ks), shape, jnp.float32)
    return {
        # embeddings (weights stored transposed: x @ W)
        "wde": n((detail_dim, H)), "bde": n((1, H)),
        "wau": n((au_dim, H)),     "bau": n((1, H)),
        "pos": n((2, H), 1.0),
        # per-layer transformer params (stacked on leading layer axis)
        "wqkv": n((L, H, 3 * H)),  "bqkv": n((L, 1, 3 * H)),
        "wo":   n((L, H, H)),      "bo":   n((L, 1, H)),
        "ln1w": 1.0 + n((L, 1, H)), "ln1b": n((L, 1, H)),
        "w1":   n((L, H, F)),      "b1":   n((L, 1, F)),
        "w2":   n((L, F, H)),      "b2":   n((L, 1, H)),
        "ln2w": 1.0 + n((L, 1, H)), "ln2b": n((L, 1, H)),
        # decoder
        "wd1": n((H, H)),          "bd1": n((1, H)),
        "wd2": n((H, output_dim)), "bd2": n((1, output_dim)),
    }


if __name__ == "__main__":
    # small shapes consistent with the module's forward
    B = 4
    DETAIL_DIM = 64
    AU_DIM = 48
    HIDDEN_DIM = 32
    FF_DIM = 64        # (nn.TransformerEncoderLayer dim_feedforward, scaled down)
    OUTPUT_DIM = 16
    NUM_LAYERS = 4
    NUM_HEADS = 8

    key = jax.random.PRNGKey(0)
    k_d, k_a, k_p = jax.random.split(key, 3)
    detail = jax.random.normal(k_d, (B, DETAIL_DIM), jnp.float32)
    au = jax.random.normal(k_a, (B, AU_DIM), jnp.float32)
    params = init_params(
        k_p, detail_dim=DETAIL_DIM, au_dim=AU_DIM, hidden_dim=HIDDEN_DIM,
        ff_dim=FF_DIM, output_dim=OUTPUT_DIM, num_layers=NUM_LAYERS)

    out = detail_au_transformer(
        detail, au, params,
        num_layers=NUM_LAYERS, hidden_dim=HIDDEN_DIM,
        num_heads=NUM_HEADS, output_dim=OUTPUT_DIM)
    out = jax.block_until_ready(out)

    ref = reference(detail, au, params,
                    num_layers=NUM_LAYERS, hidden_dim=HIDDEN_DIM,
                    num_heads=NUM_HEADS)
    assert out.shape == (B, OUTPUT_DIM)
    # kernel uses bf16 matmul inputs (f32 accumulation) + approx reciprocal,
    # so tolerance vs. the pure-f32 reference is correspondingly loosened.
    err = float(jnp.max(jnp.abs(out - ref)))
    assert err < 3e-2, err

    print("KERNEL_OK")
</pallas_src>

<mosaic_0001>
module attributes {stable_mosaic.version = 11 : i64} {
  func.func @_detail_au_transformer_kernel(%arg0: memref<4x64xf32, #tpu.memory_space<vmem>>, %arg1: memref<4x48xf32, #tpu.memory_space<vmem>>, %arg2: memref<64x32xbf16, #tpu.memory_space<vmem>>, %arg3: memref<48x32xbf16, #tpu.memory_space<vmem>>, %arg4: memref<8x32xf32, #tpu.memory_space<vmem>>, %arg5: memref<4x32x32xbf16, #tpu.memory_space<vmem>>, %arg6: memref<4x32x32xbf16, #tpu.memory_space<vmem>>, %arg7: memref<4x32x32xbf16, #tpu.memory_space<vmem>>, %arg8: memref<4x1x32xf32, #tpu.memory_space<vmem>>, %arg9: memref<4x1x32xf32, #tpu.memory_space<vmem>>, %arg10: memref<4x1x32xf32, #tpu.memory_space<vmem>>, %arg11: memref<4x32x32xbf16, #tpu.memory_space<vmem>>, %arg12: memref<4x1x32xf32, #tpu.memory_space<vmem>>, %arg13: memref<4x1x32xf32, #tpu.memory_space<vmem>>, %arg14: memref<4x1x32xf32, #tpu.memory_space<vmem>>, %arg15: memref<4x32x64xbf16, #tpu.memory_space<vmem>>, %arg16: memref<4x1x64xf32, #tpu.memory_space<vmem>>, %arg17: memref<4x64x32xbf16, #tpu.memory_space<vmem>>, %arg18: memref<4x1x32xf32, #tpu.memory_space<vmem>>, %arg19: memref<4x1x32xf32, #tpu.memory_space<vmem>>, %arg20: memref<4x1x32xf32, #tpu.memory_space<vmem>>, %arg21: memref<32x32xbf16, #tpu.memory_space<vmem>>, %arg22: memref<1x32xf32, #tpu.memory_space<vmem>>, %arg23: memref<32x16xbf16, #tpu.memory_space<vmem>>, %arg24: memref<1x16xf32, #tpu.memory_space<vmem>>, %arg25: memref<32x8xf32, #tpu.memory_space<vmem>>, %arg26: memref<8x32xf32, #tpu.memory_space<vmem>>, %arg27: memref<4x16xf32, #tpu.memory_space<vmem>>) attributes {dimension_semantics = [], scalar_prefetch = 0 : i64, scratch_operands = 0 : i64, tpu.core_type = #tpu.core_type<tc>} {
    %c0 = arith.constant 0 : index
    %c0_0 = arith.constant 0 : index
    %0 = vector.load %arg25[%c0, %c0_0] : memref<32x8xf32, #tpu.memory_space<vmem>>, vector<32x8xf32>
    %c0_1 = arith.constant 0 : index
    %c0_2 = arith.constant 0 : index
    %1 = vector.load %arg26[%c0_1, %c0_2] : memref<8x32xf32, #tpu.memory_space<vmem>>, vector<8x32xf32>
    %c0_3 = arith.constant 0 : index
    %c0_4 = arith.constant 0 : index
    %2 = vector.load %arg0[%c0_3, %c0_4] : memref<4x64xf32, #tpu.memory_space<vmem>>, vector<4x64xf32>
    %c0_5 = arith.constant 0 : index
    %c0_6 = arith.constant 0 : index
    %3 = vector.load %arg2[%c0_5, %c0_6] : memref<64x32xbf16, #tpu.memory_space<vmem>>, vector<64x32xbf16>
    %4 = arith.truncf %2 : vector<4x64xf32> to vector<4x64xbf16>
    %cst = arith.constant dense<0.000000e+00> : vector<4x32xf32>
    %5 = tpu.matmul %4, %3, %cst {dimension_numbers = #tpu.dot_dimension_numbers<[1], [0], [0], [1], [0, 0, 1, 1], [], []>} : vector<4x64xbf16>, vector<64x32xbf16>, vector<4x32xf32> -> vector<4x32xf32>
    %c0_7 = arith.constant 0 : index
    %c0_8 = arith.constant 0 : index
    %6 = vector.load %arg1[%c0_7, %c0_8] : memref<4x48xf32, #tpu.memory_space<vmem>>, vector<4x48xf32>
    %c0_9 = arith.constant 0 : index
    %c0_10 = arith.constant 0 : index
    %7 = vector.load %arg3[%c0_9, %c0_10] : memref<48x32xbf16, #tpu.memory_space<vmem>>, vector<48x32xbf16>
    %8 = arith.truncf %6 : vector<4x48xf32> to vector<4x48xbf16>
    %cst_11 = arith.constant dense<0.000000e+00> : vector<4x32xf32>
    %9 = tpu.matmul %8, %7, %cst_11 {dimension_numbers = #tpu.dot_dimension_numbers<[1], [0], [0], [1], [0, 0, 1, 1], [], []>} : vector<4x48xbf16>, vector<48x32xbf16>, vector<4x32xf32> -> vector<4x32xf32>
    %10 = tpu.concatenate %5, %9 in 0 : vector<4x32xf32>, vector<4x32xf32> -> vector<8x32xf32>
    %c0_12 = arith.constant 0 : index
    %c0_13 = arith.constant 0 : index
    %11 = vector.load %arg4[%c0_12, %c0_13] : memref<8x32xf32, #tpu.memory_space<vmem>>, vector<8x32xf32>
    %12 = arith.addf %10, %11 : vector<8x32xf32>
    %13 = arith.truncf %12 : vector<8x32xf32> to vector<8x32xbf16>
    %c0_14 = arith.constant 0 : index
    %c0_15 = arith.constant 0 : index
    %c0_16 = arith.constant 0 : index
    %14 = vector.load %arg5[%c0_14, %c0_15, %c0_16] : memref<4x32x32xbf16, #tpu.memory_space<vmem>>, vector<1x32x32xbf16>
    %15 = vector.shape_cast %14 : vector<1x32x32xbf16> to vector<32x32xbf16>
    %cst_17 = arith.constant dense<0.000000e+00> : vector<8x32xf32>
    %16 = tpu.matmul %13, %15, %cst_17 {dimension_numbers = #tpu.dot_dimension_numbers<[1], [0], [0], [1], [0, 0, 1, 1], [], []>} : vector<8x32xbf16>, vector<32x32xbf16>, vector<8x32xf32> -> vector<8x32xf32>
    %c0_18 = arith.constant 0 : index
    %c0_19 = arith.constant 0 : index
    %c0_20 = arith.constant 0 : index
    %17 = vector.load %arg8[%c0_18, %c0_19, %c0_20] : memref<4x1x32xf32, #tpu.memory_space<vmem>>, vector<1x1x32xf32>
    %18 = vector.shape_cast %17 : vector<1x1x32xf32> to vector<1x32xf32>
    %19 = vector.broadcast %18 : vector<1x32xf32> to vector<8x32xf32>
    %20 = arith.addf %16, %19 : vector<8x32xf32>
    %c0_21 = arith.constant 0 : index
    %c0_22 = arith.constant 0 : index
    %c0_23 = arith.constant 0 : index
    %21 = vector.load %arg6[%c0_21, %c0_22, %c0_23] : memref<4x32x32xbf16, #tpu.memory_space<vmem>>, vector<1x32x32xbf16>
    %22 = vector.shape_cast %21 : vector<1x32x32xbf16> to vector<32x32xbf16>
    %cst_24 = arith.constant dense<0.000000e+00> : vector<8x32xf32>
    %23 = tpu.matmul %13, %22, %cst_24 {dimension_numbers = #tpu.dot_dimension_numbers<[1], [0], [0], [1], [0, 0, 1, 1], [], []>} : vector<8x32xbf16>, vector<32x32xbf16>, vector<8x32xf32> -> vector<8x32xf32>
    %c0_25 = arith.constant 0 : index
    %c0_26 = arith.constant 0 : index
    %c0_27 = arith.constant 0 : index
    %24 = vector.load %arg9[%c0_25, %c0_26, %c0_27] : memref<4x1x32xf32, #tpu.memory_space<vmem>>, vector<1x1x32xf32>
    %25 = vector.shape_cast %24 : vector<1x1x32xf32> to vector<1x32xf32>
    %26 = vector.broadcast %25 : vector<1x32xf32> to vector<8x32xf32>
    %27 = arith.addf %23, %26 : vector<8x32xf32>
    %c0_28 = arith.constant 0 : index
    %c0_29 = arith.constant 0 : index
    %c0_30 = arith.constant 0 : index
    %28 = vector.load %arg7[%c0_28, %c0_29, %c0_30] : memref<4x32x32xbf16, #tpu.memory_space<vmem>>, vector<1x32x32xbf16>
    %29 = vector.shape_cast %28 : vector<1x32x32xbf16> to vector<32x32xbf16>
    %cst_31 = arith.constant dense<0.000000e+00> : vector<8x32xf32>
    %30 = tpu.matmul %13, %29, %cst_31 {dimension_numbers = #tpu.dot_dimension_numbers<[1], [0], [0], [1], [0, 0, 1, 1], [], []>} : vector<8x32xbf16>, vector<32x32xbf16>, vector<8x32xf32> -> vector<8x32xf32>
    %c0_32 = arith.constant 0 : index
    %c0_33 = arith.constant 0 : index
    %c0_34 = arith.constant 0 : index
    %31 = vector.load %arg10[%c0_32, %c0_33, %c0_34] : memref<4x1x32xf32, #tpu.memory_space<vmem>>, vector<1x1x32xf32>
    %32 = vector.shape_cast %31 : vector<1x1x32xf32> to vector<1x32xf32>
    %33 = vector.broadcast %32 : vector<1x32xf32> to vector<8x32xf32>
    %34 = arith.addf %30, %33 : vector<8x32xf32>
    %35 = vector.extract_strided_slice %27 {offsets = [4, 0], sizes = [4, 32], strides = [1, 1]} : vector<8x32xf32> to vector<4x32xf32>
    %36 = vector.extract_strided_slice %27 {offsets = [0, 0], sizes = [4, 32], strides = [1, 1]} : vector<8x32xf32> to vector<4x32xf32>
    %37 = tpu.concatenate %35, %36 in 0 : vector<4x32xf32>, vector<4x32xf32> -> vector<8x32xf32>
    %38 = vector.extract_strided_slice %34 {offsets = [4, 0], sizes = [4, 32], strides = [1, 1]} : vector<8x32xf32> to vector<4x32xf32>
    %39 = vector.extract_strided_slice %34 {offsets = [0, 0], sizes = [4, 32], strides = [1, 1]} : vector<8x32xf32> to vector<4x32xf32>
    %40 = tpu.concatenate %38, %39 in 0 : vector<4x32xf32>, vector<4x32xf32> -> vector<8x32xf32>
    %41 = arith.mulf %20, %27 : vector<8x32xf32>
    %42 = arith.mulf %20, %37 : vector<8x32xf32>
    %43 = tpu.concatenate %41, %42 in 0 : vector<8x32xf32>, vector<8x32xf32> -> vector<16x32xf32>
    %cst_35 = arith.constant dense<0.000000e+00> : vector<16x8xf32>
    %44 = tpu.matmul %43, %0, %cst_35 {dimension_numbers = #tpu.dot_dimension_numbers<[1], [0], [0], [1], [0, 0, 1, 1], [], []>} : vector<16x32xf32>, vector<32x8xf32>, vector<16x8xf32> -> vector<16x8xf32>
    %cst_36 = arith.constant 5.000000e-01 : f32
    %45 = vector.broadcast %cst_36 : f32 to vector<16x8xf32>
    %46 = arith.mulf %44, %45 : vector<16x8xf32>
    %47 = vector.extract_strided_slice %46 {offsets = [0, 0], sizes = [8, 8], strides = [1, 1]} : vector<16x8xf32> to vector<8x8xf32>
    %48 = vector.extract_strided_slice %46 {offsets = [8, 0], sizes = [8, 8], strides = [1, 1]} : vector<16x8xf32> to vector<8x8xf32>
    %49 = arith.maximumf %47, %48 : vector<8x8xf32>
    %50 = arith.subf %47, %49 : vector<8x8xf32>
    %51 = math.exp %50 : vector<8x8xf32>
    %52 = arith.subf %48, %49 : vector<8x8xf32>
    %53 = math.exp %52 : vector<8x8xf32>
    %54 = arith.addf %51, %53 : vector<8x8xf32>
    %55 = tpu.reciprocal %54 {approx = true} : vector<8x8xf32> -> vector<8x8xf32>
    %56 = arith.mulf %51, %55 : vector<8x8xf32>
    %57 = arith.mulf %53, %55 : vector<8x8xf32>
    %58 = tpu.concatenate %56, %57 in 0 : vector<8x8xf32>, vector<8x8xf32> -> vector<16x8xf32>
    %cst_37 = arith.constant dense<0.000000e+00> : vector<16x32xf32>
    %59 = tpu.matmul %58, %1, %cst_37 {dimension_numbers = #tpu.dot_dimension_numbers<[1], [0], [0], [1], [0, 0, 1, 1], [], []>} : vector<16x8xf32>, vector<8x32xf32>, vector<16x32xf32> -> vector<16x32xf32>
    %60 = vector.extract_strided_slice %59 {offsets = [0, 0], sizes = [8, 32], strides = [1, 1]} : vector<16x32xf32> to vector<8x32xf32>
    %61 = arith.mulf %60, %34 : vector<8x32xf32>
    %62 = vector.extract_strided_slice %59 {offsets = [8, 0], sizes = [8, 32], strides = [1, 1]} : vector<16x32xf32> to vector<8x32xf32>
    %63 = arith.mulf %62, %40 : vector<8x32xf32>
    %64 = arith.addf %61, %63 : vector<8x32xf32>
    %c0_38 = arith.constant 0 : index
    %c0_39 = arith.constant 0 : index
    %c0_40 = arith.constant 0 : index
    %65 = vector.load %arg11[%c0_38, %c0_39, %c0_40] : memref<4x32x32xbf16, #tpu.memory_space<vmem>>, vector<1x32x32xbf16>
    %66 = vector.shape_cast %65 : vector<1x32x32xbf16> to vector<32x32xbf16>
    %67 = arith.truncf %64 : vector<8x32xf32> to vector<8x32xbf16>
    %cst_41 = arith.constant dense<0.000000e+00> : vector<8x32xf32>
    %68 = tpu.matmul %67, %66, %cst_41 {dimension_numbers = #tpu.dot_dimension_numbers<[1], [0], [0], [1], [0, 0, 1, 1], [], []>} : vector<8x32xbf16>, vector<32x32xbf16>, vector<8x32xf32> -> vector<8x32xf32>
    %c0_42 = arith.constant 0 : index
    %c0_43 = arith.constant 0 : index
    %c0_44 = arith.constant 0 : index
    %69 = vector.load %arg12[%c0_42, %c0_43, %c0_44] : memref<4x1x32xf32, #tpu.memory_space<vmem>>, vector<1x1x32xf32>
    %70 = vector.shape_cast %69 : vector<1x1x32xf32> to vector<1x32xf32>
    %71 = vector.broadcast %70 : vector<1x32xf32> to vector<8x32xf32>
    %72 = arith.addf %68, %71 : vector<8x32xf32>
    %73 = arith.addf %12, %72 : vector<8x32xf32>
    %c0_45 = arith.constant 0 : index
    %c0_46 = arith.constant 0 : index
    %c0_47 = arith.constant 0 : index
    %74 = vector.load %arg13[%c0_45, %c0_46, %c0_47] : memref<4x1x32xf32, #tpu.memory_space<vmem>>, vector<1x1x32xf32>
    %75 = vector.shape_cast %74 : vector<1x1x32xf32> to vector<1x32xf32>
    %c0_48 = arith.constant 0 : index
    %c0_49 = arith.constant 0 : index
    %c0_50 = arith.constant 0 : index
    %76 = vector.load %arg14[%c0_48, %c0_49, %c0_50] : memref<4x1x32xf32, #tpu.memory_space<vmem>>, vector<1x1x32xf32>
    %77 = vector.shape_cast %76 : vector<1x1x32xf32> to vector<1x32xf32>
    %cst_51 = arith.constant dense<0.000000e+00> : vector<8xf32>
    %78 = vector.multi_reduction <add>, %73, %cst_51 [1] : vector<8x32xf32> to vector<8xf32>
    %79 = vector.shape_cast %78 : vector<8xf32> to vector<8x1xf32>
    %cst_52 = arith.constant 3.200000e+01 : f32
    %80 = vector.broadcast %cst_52 : f32 to vector<8x1xf32>
    %81 = arith.divf %79, %80 : vector<8x1xf32>
    %82 = vector.broadcast %81 : vector<8x1xf32> to vector<8x32xf32>
    %83 = arith.subf %73, %82 : vector<8x32xf32>
    %84 = arith.mulf %83, %83 : vector<8x32xf32>
    %cst_53 = arith.constant dense<0.000000e+00> : vector<8xf32>
    %85 = vector.multi_reduction <add>, %84, %cst_53 [1] : vector<8x32xf32> to vector<8xf32>
    %86 = vector.shape_cast %85 : vector<8xf32> to vector<8x1xf32>
    %cst_54 = arith.constant 3.200000e+01 : f32
    %87 = vector.broadcast %cst_54 : f32 to vector<8x1xf32>
    %88 = arith.divf %86, %87 : vector<8x1xf32>
    %cst_55 = arith.constant 9.99999974E-6 : f32
    %89 = vector.broadcast %cst_55 : f32 to vector<8x1xf32>
    %90 = arith.addf %88, %89 : vector<8x1xf32>
    %91 = math.rsqrt %90 : vector<8x1xf32>
    %92 = vector.broadcast %91 : vector<8x1xf32> to vector<8x32xf32>
    %93 = arith.mulf %83, %92 : vector<8x32xf32>
    %94 = vector.broadcast %75 : vector<1x32xf32> to vector<8x32xf32>
    %95 = arith.mulf %93, %94 : vector<8x32xf32>
    %96 = vector.broadcast %77 : vector<1x32xf32> to vector<8x32xf32>
    %97 = arith.addf %95, %96 : vector<8x32xf32>
    %c0_56 = arith.constant 0 : index
    %c0_57 = arith.constant 0 : index
    %c0_58 = arith.constant 0 : index
    %98 = vector.load %arg15[%c0_56, %c0_57, %c0_58] : memref<4x32x64xbf16, #tpu.memory_space<vmem>>, vector<1x32x64xbf16>
    %99 = vector.shape_cast %98 : vector<1x32x64xbf16> to vector<32x64xbf16>
    %100 = arith.truncf %97 : vector<8x32xf32> to vector<8x32xbf16>
    %cst_59 = arith.constant dense<0.000000e+00> : vector<8x64xf32>
    %101 = tpu.matmul %100, %99, %cst_59 {dimension_numbers = #tpu.dot_dimension_numbers<[1], [0], [0], [1], [0, 0, 1, 1], [], []>} : vector<8x32xbf16>, vector<32x64xbf16>, vector<8x64xf32> -> vector<8x64xf32>
    %c0_60 = arith.constant 0 : index
    %c0_61 = arith.constant 0 : index
    %c0_62 = arith.constant 0 : index
    %102 = vector.load %arg16[%c0_60, %c0_61, %c0_62] : memref<4x1x64xf32, #tpu.memory_space<vmem>>, vector<1x1x64xf32>
    %103 = vector.shape_cast %102 : vector<1x1x64xf32> to vector<1x64xf32>
    %104 = vector.broadcast %103 : vector<1x64xf32> to vector<8x64xf32>
    %105 = arith.addf %101, %104 : vector<8x64xf32>
    %cst_63 = arith.constant 0.000000e+00 : f32
    %106 = vector.broadcast %cst_63 : f32 to vector<8x64xf32>
    %107 = arith.maximumf %105, %106 : vector<8x64xf32>
    %c0_64 = arith.constant 0 : index
    %c0_65 = arith.constant 0 : index
    %c0_66 = arith.constant 0 : index
    %108 = vector.load %arg17[%c0_64, %c0_65, %c0_66] : memref<4x64x32xbf16, #tpu.memory_space<vmem>>, vector<1x64x32xbf16>
    %109 = vector.shape_cast %108 : vector<1x64x32xbf16> to vector<64x32xbf16>
    %110 = arith.truncf %107 : vector<8x64xf32> to vector<8x64xbf16>
    %cst_67 = arith.constant dense<0.000000e+00> : vector<8x32xf32>
    %111 = tpu.matmul %110, %109, %cst_67 {dimension_numbers = #tpu.dot_dimension_numbers<[1], [0], [0], [1], [0, 0, 1, 1], [], []>} : vector<8x64xbf16>, vector<64x32xbf16>, vector<8x32xf32> -> vector<8x32xf32>
    %c0_68 = arith.constant 0 : index
    %c0_69 = arith.constant 0 : index
    %c0_70 = arith.constant 0 : index
    %112 = vector.load %arg18[%c0_68, %c0_69, %c0_70] : memref<4x1x32xf32, #tpu.memory_space<vmem>>, vector<1x1x32xf32>
    %113 = vector.shape_cast %112 : vector<1x1x32xf32> to vector<1x32xf32>
    %114 = vector.broadcast %113 : vector<1x32xf32> to vector<8x32xf32>
    %115 = arith.addf %111, %114 : vector<8x32xf32>
    %116 = arith.addf %97, %115 : vector<8x32xf32>
    %c0_71 = arith.constant 0 : index
    %c0_72 = arith.constant 0 : index
    %c0_73 = arith.constant 0 : index
    %117 = vector.load %arg19[%c0_71, %c0_72, %c0_73] : memref<4x1x32xf32, #tpu.memory_space<vmem>>, vector<1x1x32xf32>
    %118 = vector.shape_cast %117 : vector<1x1x32xf32> to vector<1x32xf32>
    %c0_74 = arith.constant 0 : index
    %c0_75 = arith.constant 0 : index
    %c0_76 = arith.constant 0 : index
    %119 = vector.load %arg20[%c0_74, %c0_75, %c0_76] : memref<4x1x32xf32, #tpu.memory_space<vmem>>, vector<1x1x32xf32>
    %120 = vector.shape_cast %119 : vector<1x1x32xf32> to vector<1x32xf32>
    %cst_77 = arith.constant dense<0.000000e+00> : vector<8xf32>
    %121 = vector.multi_reduction <add>, %116, %cst_77 [1] : vector<8x32xf32> to vector<8xf32>
    %122 = vector.shape_cast %121 : vector<8xf32> to vector<8x1xf32>
    %cst_78 = arith.constant 3.200000e+01 : f32
    %123 = vector.broadcast %cst_78 : f32 to vector<8x1xf32>
    %124 = arith.divf %122, %123 : vector<8x1xf32>
    %125 = vector.broadcast %124 : vector<8x1xf32> to vector<8x32xf32>
    %126 = arith.subf %116, %125 : vector<8x32xf32>
    %127 = arith.mulf %126, %126 : vector<8x32xf32>
    %cst_79 = arith.constant dense<0.000000e+00> : vector<8xf32>
    %128 = vector.multi_reduction <add>, %127, %cst_79 [1] : vector<8x32xf32> to vector<8xf32>
    %129 = vector.shape_cast %128 : vector<8xf32> to vector<8x1xf32>
    %cst_80 = arith.constant 3.200000e+01 : f32
    %130 = vector.broadcast %cst_80 : f32 to vector<8x1xf32>
    %131 = arith.divf %129, %130 : vector<8x1xf32>
    %cst_81 = arith.constant 9.99999974E-6 : f32
    %132 = vector.broadcast %cst_81 : f32 to vector<8x1xf32>
    %133 = arith.addf %131, %132 : vector<8x1xf32>
    %134 = math.rsqrt %133 : vector<8x1xf32>
    %135 = vector.broadcast %134 : vector<8x1xf32> to vector<8x32xf32>
    %136 = arith.mulf %126, %135 : vector<8x32xf32>
    %137 = vector.broadcast %118 : vector<1x32xf32> to vector<8x32xf32>
    %138 = arith.mulf %136, %137 : vector<8x32xf32>
    %139 = vector.broadcast %120 : vector<1x32xf32> to vector<8x32xf32>
    %140 = arith.addf %138, %139 : vector<8x32xf32>
    %141 = arith.truncf %140 : vector<8x32xf32> to vector<8x32xbf16>
    %c1 = arith.constant 1 : index
    %c0_82 = arith.constant 0 : index
    %c0_83 = arith.constant 0 : index
    %142 = vector.load %arg5[%c1, %c0_82, %c0_83] : memref<4x32x32xbf16, #tpu.memory_space<vmem>>, vector<1x32x32xbf16>
    %143 = vector.shape_cast %142 : vector<1x32x32xbf16> to vector<32x32xbf16>
    %cst_84 = arith.constant dense<0.000000e+00> : vector<8x32xf32>
    %144 = tpu.matmul %141, %143, %cst_84 {dimension_numbers = #tpu.dot_dimension_numbers<[1], [0], [0], [1], [0, 0, 1, 1], [], []>} : vector<8x32xbf16>, vector<32x32xbf16>, vector<8x32xf32> -> vector<8x32xf32>
    %c1_85 = arith.constant 1 : index
    %c0_86 = arith.constant 0 : index
    %c0_87 = arith.constant 0 : index
    %145 = vector.load %arg8[%c1_85, %c0_86, %c0_87] : memref<4x1x32xf32, #tpu.memory_space<vmem>>, vector<1x1x32xf32>
    %146 = vector.shape_cast %145 : vector<1x1x32xf32> to vector<1x32xf32>
    %147 = vector.broadcast %146 : vector<1x32xf32> to vector<8x32xf32>
    %148 = arith.addf %144, %147 : vector<8x32xf32>
    %c1_88 = arith.constant 1 : index
    %c0_89 = arith.constant 0 : index
    %c0_90 = arith.constant 0 : index
    %149 = vector.load %arg6[%c1_88, %c0_89, %c0_90] : memref<4x32x32xbf16, #tpu.memory_space<vmem>>, vector<1x32x32xbf16>
    %150 = vector.shape_cast %149 : vector<1x32x32xbf16> to vector<32x32xbf16>
    %cst_91 = arith.constant dense<0.000000e+00> : vector<8x32xf32>
    %151 = tpu.matmul %141, %150, %cst_91 {dimension_numbers = #tpu.dot_dimension_numbers<[1], [0], [0], [1], [0, 0, 1, 1], [], []>} : vector<8x32xbf16>, vector<32x32xbf16>, vector<8x32xf32> -> vector<8x32xf32>
    %c1_92 = arith.constant 1 : index
    %c0_93 = arith.constant 0 : index
    %c0_94 = arith.constant 0 : index
    %152 = vector.load %arg9[%c1_92, %c0_93, %c0_94] : memref<4x1x32xf32, #tpu.memory_space<vmem>>, vector<1x1x32xf32>
    %153 = vector.shape_cast %152 : vector<1x1x32xf32> to vector<1x32xf32>
    %154 = vector.broadcast %153 : vector<1x32xf32> to vector<8x32xf32>
    %155 = arith.addf %151, %154 : vector<8x32xf32>
    %c1_95 = arith.constant 1 : index
    %c0_96 = arith.constant 0 : index
    %c0_97 = arith.constant 0 : index
    %156 = vector.load %arg7[%c1_95, %c0_96, %c0_97] : memref<4x32x32xbf16, #tpu.memory_space<vmem>>, vector<1x32x32xbf16>
    %157 = vector.shape_cast %156 : vector<1x32x32xbf16> to vector<32x32xbf16>
    %cst_98 = arith.constant dense<0.000000e+00> : vector<8x32xf32>
    %158 = tpu.matmul %141, %157, %cst_98 {dimension_numbers = #tpu.dot_dimension_numbers<[1], [0], [0], [1], [0, 0, 1, 1], [], []>} : vector<8x32xbf16>, vector<32x32xbf16>, vector<8x32xf32> -> vector<8x32xf32>
    %c1_99 = arith.constant 1 : index
    %c0_100 = arith.constant 0 : index
    %c0_101 = arith.constant 0 : index
    %159 = vector.load %arg10[%c1_99, %c0_100, %c0_101] : memref<4x1x32xf32, #tpu.memory_space<vmem>>, vector<1x1x32xf32>
    %160 = vector.shape_cast %159 : vector<1x1x32xf32> to vector<1x32xf32>
    %161 = vector.broadcast %160 : vector<1x32xf32> to vector<8x32xf32>
    %162 = arith.addf %158, %161 : vector<8x32xf32>
    %163 = vector.extract_strided_slice %155 {offsets = [4, 0], sizes = [4, 32], strides = [1, 1]} : vector<8x32xf32> to vector<4x32xf32>
    %164 = vector.extract_strided_slice %155 {offsets = [0, 0], sizes = [4, 32], strides = [1, 1]} : vector<8x32xf32> to vector<4x32xf32>
    %165 = tpu.concatenate %163, %164 in 0 : vector<4x32xf32>, vector<4x32xf32> -> vector<8x32xf32>
    %166 = vector.extract_strided_slice %162 {offsets = [4, 0], sizes = [4, 32], strides = [1, 1]} : vector<8x32xf32> to vector<4x32xf32>
    %167 = vector.extract_strided_slice %162 {offsets = [0, 0], sizes = [4, 32], strides = [1, 1]} : vector<8x32xf32> to vector<4x32xf32>
    %168 = tpu.concatenate %166, %167 in 0 : vector<4x32xf32>, vector<4x32xf32> -> vector<8x32xf32>
    %169 = arith.mulf %148, %155 : vector<8x32xf32>
    %170 = arith.mulf %148, %165 : vector<8x32xf32>
    %171 = tpu.concatenate %169, %170 in 0 : vector<8x32xf32>, vector<8x32xf32> -> vector<16x32xf32>
    %cst_102 = arith.constant dense<0.000000e+00> : vector<16x8xf32>
    %172 = tpu.matmul %171, %0, %cst_102 {dimension_numbers = #tpu.dot_dimension_numbers<[1], [0], [0], [1], [0, 0, 1, 1], [], []>} : vector<16x32xf32>, vector<32x8xf32>, vector<16x8xf32> -> vector<16x8xf32>
    %cst_103 = arith.constant 5.000000e-01 : f32
    %173 = vector.broadcast %cst_103 : f32 to vector<16x8xf32>
    %174 = arith.mulf %172, %173 : vector<16x8xf32>
    %175 = vector.extract_strided_slice %174 {offsets = [0, 0], sizes = [8, 8], strides = [1, 1]} : vector<16x8xf32> to vector<8x8xf32>
    %176 = vector.extract_strided_slice %174 {offsets = [8, 0], sizes = [8, 8], strides = [1, 1]} : vector<16x8xf32> to vector<8x8xf32>
    %177 = arith.maximumf %175, %176 : vector<8x8xf32>
    %178 = arith.subf %175, %177 : vector<8x8xf32>
    %179 = math.exp %178 : vector<8x8xf32>
    %180 = arith.subf %176, %177 : vector<8x8xf32>
    %181 = math.exp %180 : vector<8x8xf32>
    %182 = arith.addf %179, %181 : vector<8x8xf32>
    %183 = tpu.reciprocal %182 {approx = true} : vector<8x8xf32> -> vector<8x8xf32>
    %184 = arith.mulf %179, %183 : vector<8x8xf32>
    %185 = arith.mulf %181, %183 : vector<8x8xf32>
    %186 = tpu.concatenate %184, %185 in 0 : vector<8x8xf32>, vector<8x8xf32> -> vector<16x8xf32>
    %cst_104 = arith.constant dense<0.000000e+00> : vector<16x32xf32>
    %187 = tpu.matmul %186, %1, %cst_104 {dimension_numbers = #tpu.dot_dimension_numbers<[1], [0], [0], [1], [0, 0, 1, 1], [], []>} : vector<16x8xf32>, vector<8x32xf32>, vector<16x32xf32> -> vector<16x32xf32>
    %188 = vector.extract_strided_slice %187 {offsets = [0, 0], sizes = [8, 32], strides = [1, 1]} : vector<16x32xf32> to vector<8x32xf32>
    %189 = arith.mulf %188, %162 : vector<8x32xf32>
    %190 = vector.extract_strided_slice %187 {offsets = [8, 0], sizes = [8, 32], strides = [1, 1]} : vector<16x32xf32> to vector<8x32xf32>
    %191 = arith.mulf %190, %168 : vector<8x32xf32>
    %192 = arith.addf %189, %191 : vector<8x32xf32>
    %c1_105 = arith.constant 1 : index
    %c0_106 = arith.constant 0 : index
    %c0_107 = arith.constant 0 : index
    %193 = vector.load %arg11[%c1_105, %c0_106, %c0_107] : memref<4x32x32xbf16, #tpu.memory_space<vmem>>, vector<1x32x32xbf16>
    %194 = vector.shape_cast %193 : vector<1x32x32xbf16> to vector<32x32xbf16>
    %195 = arith.truncf %192 : vector<8x32xf32> to vector<8x32xbf16>
    %cst_108 = arith.constant dense<0.000000e+00> : vector<8x32xf32>
    %196 = tpu.matmul %195, %194, %cst_108 {dimension_numbers = #tpu.dot_dimension_numbers<[1], [0], [0], [1], [0, 0, 1, 1], [], []>} : vector<8x32xbf16>, vector<32x32xbf16>, vector<8x32xf32> -> vector<8x32xf32>
    %c1_109 = arith.constant 1 : index
    %c0_110 = arith.constant 0 : index
    %c0_111 = arith.constant 0 : index
    %197 = vector.load %arg12[%c1_109, %c0_110, %c0_111] : memref<4x1x32xf32, #tpu.memory_space<vmem>>, vector<1x1x32xf32>
    %198 = vector.shape_cast %197 : vector<1x1x32xf32> to vector<1x32xf32>
    %199 = vector.broadcast %198 : vector<1x32xf32> to vector<8x32xf32>
    %200 = arith.addf %196, %199 : vector<8x32xf32>
    %201 = arith.addf %140, %200 : vector<8x32xf32>
    %c1_112 = arith.constant 1 : index
    %c0_113 = arith.constant 0 : index
    %c0_114 = arith.constant 0 : index
    %202 = vector.load %arg13[%c1_112, %c0_113, %c0_114] : memref<4x1x32xf32, #tpu.memory_space<vmem>>, vector<1x1x32xf32>
    %203 = vector.shape_cast %202 : vector<1x1x32xf32> to vector<1x32xf32>
    %c1_115 = arith.constant 1 : index
    %c0_116 = arith.constant 0 : index
    %c0_117 = arith.constant 0 : index
    %204 = vector.load %arg14[%c1_115, %c0_116, %c0_117] : memref<4x1x32xf32, #tpu.memory_space<vmem>>, vector<1x1x32xf32>
    %205 = vector.shape_cast %204 : vector<1x1x32xf32> to vector<1x32xf32>
    %cst_118 = arith.constant dense<0.000000e+00> : vector<8xf32>
    %206 = vector.multi_reduction <add>, %201, %cst_118 [1] : vector<8x32xf32> to vector<8xf32>
    %207 = vector.shape_cast %206 : vector<8xf32> to vector<8x1xf32>
    %cst_119 = arith.constant 3.200000e+01 : f32
    %208 = vector.broadcast %cst_119 : f32 to vector<8x1xf32>
    %209 = arith.divf %207, %208 : vector<8x1xf32>
    %210 = vector.broadcast %209 : vector<8x1xf32> to vector<8x32xf32>
    %211 = arith.subf %201, %210 : vector<8x32xf32>
    %212 = arith.mulf %211, %211 : vector<8x32xf32>
    %cst_120 = arith.constant dense<0.000000e+00> : vector<8xf32>
    %213 = vector.multi_reduction <add>, %212, %cst_120 [1] : vector<8x32xf32> to vector<8xf32>
    %214 = vector.shape_cast %213 : vector<8xf32> to vector<8x1xf32>
    %cst_121 = arith.constant 3.200000e+01 : f32
    %215 = vector.broadcast %cst_121 : f32 to vector<8x1xf32>
    %216 = arith.divf %214, %215 : vector<8x1xf32>
    %cst_122 = arith.constant 9.99999974E-6 : f32
    %217 = vector.broadcast %cst_122 : f32 to vector<8x1xf32>
    %218 = arith.addf %216, %217 : vector<8x1xf32>
    %219 = math.rsqrt %218 : vector<8x1xf32>
    %220 = vector.broadcast %219 : vector<8x1xf32> to vector<8x32xf32>
    %221 = arith.mulf %211, %220 : vector<8x32xf32>
    %222 = vector.broadcast %203 : vector<1x32xf32> to vector<8x32xf32>
    %223 = arith.mulf %221, %222 : vector<8x32xf32>
    %224 = vector.broadcast %205 : vector<1x32xf32> to vector<8x32xf32>
    %225 = arith.addf %223, %224 : vector<8x32xf32>
    %c1_123 = arith.constant 1 : index
    %c0_124 = arith.constant 0 : index
    %c0_125 = arith.constant 0 : index
    %226 = vector.load %arg15[%c1_123, %c0_124, %c0_125] : memref<4x32x64xbf16, #tpu.memory_space<vmem>>, vector<1x32x64xbf16>
    %227 = vector.shape_cast %226 : vector<1x32x64xbf16> to vector<32x64xbf16>
    %228 = arith.truncf %225 : vector<8x32xf32> to vector<8x32xbf16>
    %cst_126 = arith.constant dense<0.000000e+00> : vector<8x64xf32>
    %229 = tpu.matmul %228, %227, %cst_126 {dimension_numbers = #tpu.dot_dimension_numbers<[1], [0], [0], [1], [0, 0, 1, 1], [], []>} : vector<8x32xbf16>, vector<32x64xbf16>, vector<8x64xf32> -> vector<8x64xf32>
    %c1_127 = arith.constant 1 : index
    %c0_128 = arith.constant 0 : index
    %c0_129 = arith.constant 0 : index
    %230 = vector.load %arg16[%c1_127, %c0_128, %c0_129] : memref<4x1x64xf32, #tpu.memory_space<vmem>>, vector<1x1x64xf32>
    %231 = vector.shape_cast %230 : vector<1x1x64xf32> to vector<1x64xf32>
    %232 = vector.broadcast %231 : vector<1x64xf32> to vector<8x64xf32>
    %233 = arith.addf %229, %232 : vector<8x64xf32>
    %cst_130 = arith.constant 0.000000e+00 : f32
    %234 = vector.broadcast %cst_130 : f32 to vector<8x64xf32>
    %235 = arith.maximumf %233, %234 : vector<8x64xf32>
    %c1_131 = arith.constant 1 : index
    %c0_132 = arith.constant 0 : index
    %c0_133 = arith.constant 0 : index
    %236 = vector.load %arg17[%c1_131, %c0_132, %c0_133] : memref<4x64x32xbf16, #tpu.memory_space<vmem>>, vector<1x64x32xbf16>
    %237 = vector.shape_cast %236 : vector<1x64x32xbf16> to vector<64x32xbf16>
    %238 = arith.truncf %235 : vector<8x64xf32> to vector<8x64xbf16>
    %cst_134 = arith.constant dense<0.000000e+00> : vector<8x32xf32>
    %239 = tpu.matmul %238, %237, %cst_134 {dimension_numbers = #tpu.dot_dimension_numbers<[1], [0], [0], [1], [0, 0, 1, 1], [], []>} : vector<8x64xbf16>, vector<64x32xbf16>, vector<8x32xf32> -> vector<8x32xf32>
    %c1_135 = arith.constant 1 : index
    %c0_136 = arith.constant 0 : index
    %c0_137 = arith.constant 0 : index
    %240 = vector.load %arg18[%c1_135, %c0_136, %c0_137] : memref<4x1x32xf32, #tpu.memory_space<vmem>>, vector<1x1x32xf32>
    %241 = vector.shape_cast %240 : vector<1x1x32xf32> to vector<1x32xf32>
    %242 = vector.broadcast %241 : vector<1x32xf32> to vector<8x32xf32>
    %243 = arith.addf %239, %242 : vector<8x32xf32>
    %244 = arith.addf %225, %243 : vector<8x32xf32>
    %c1_138 = arith.constant 1 : index
    %c0_139 = arith.constant 0 : index
    %c0_140 = arith.constant 0 : index
    %245 = vector.load %arg19[%c1_138, %c0_139, %c0_140] : memref<4x1x32xf32, #tpu.memory_space<vmem>>, vector<1x1x32xf32>
    %246 = vector.shape_cast %245 : vector<1x1x32xf32> to vector<1x32xf32>
    %c1_141 = arith.constant 1 : index
    %c0_142 = arith.constant 0 : index
    %c0_143 = arith.constant 0 : index
    %247 = vector.load %arg20[%c1_141, %c0_142, %c0_143] : memref<4x1x32xf32, #tpu.memory_space<vmem>>, vector<1x1x32xf32>
    %248 = vector.shape_cast %247 : vector<1x1x32xf32> to vector<1x32xf32>
    %cst_144 = arith.constant dense<0.000000e+00> : vector<8xf32>
    %249 = vector.multi_reduction <add>, %244, %cst_144 [1] : vector<8x32xf32> to vector<8xf32>
    %250 = vector.shape_cast %249 : vector<8xf32> to vector<8x1xf32>
    %cst_145 = arith.constant 3.200000e+01 : f32
    %251 = vector.broadcast %cst_145 : f32 to vector<8x1xf32>
    %252 = arith.divf %250, %251 : vector<8x1xf32>
    %253 = vector.broadcast %252 : vector<8x1xf32> to vector<8x32xf32>
    %254 = arith.subf %244, %253 : vector<8x32xf32>
    %255 = arith.mulf %254, %254 : vector<8x32xf32>
    %cst_146 = arith.constant dense<0.000000e+00> : vector<8xf32>
    %256 = vector.multi_reduction <add>, %255, %cst_146 [1] : vector<8x32xf32> to vector<8xf32>
    %257 = vector.shape_cast %256 : vector<8xf32> to vector<8x1xf32>
    %cst_147 = arith.constant 3.200000e+01 : f32
    %258 = vector.broadcast %cst_147 : f32 to vector<8x1xf32>
    %259 = arith.divf %257, %258 : vector<8x1xf32>
    %cst_148 = arith.constant 9.99999974E-6 : f32
    %260 = vector.broadcast %cst_148 : f32 to vector<8x1xf32>
    %261 = arith.addf %259, %260 : vector<8x1xf32>
    %262 = math.rsqrt %261 : vector<8x1xf32>
    %263 = vector.broadcast %262 : vector<8x1xf32> to vector<8x32xf32>
    %264 = arith.mulf %254, %263 : vector<8x32xf32>
    %265 = vector.broadcast %246 : vector<1x32xf32> to vector<8x32xf32>
    %266 = arith.mulf %264, %265 : vector<8x32xf32>
    %267 = vector.broadcast %248 : vector<1x32xf32> to vector<8x32xf32>
    %268 = arith.addf %266, %267 : vector<8x32xf32>
    %269 = arith.truncf %268 : vector<8x32xf32> to vector<8x32xbf16>
    %c2 = arith.constant 2 : index
    %c0_149 = arith.constant 0 : index
    %c0_150 = arith.constant 0 : index
    %270 = vector.load %arg5[%c2, %c0_149, %c0_150] : memref<4x32x32xbf16, #tpu.memory_space<vmem>>, vector<1x32x32xbf16>
    %271 = vector.shape_cast %270 : vector<1x32x32xbf16> to vector<32x32xbf16>
    %cst_151 = arith.constant dense<0.000000e+00> : vector<8x32xf32>
    %272 = tpu.matmul %269, %271, %cst_151 {dimension_numbers = #tpu.dot_dimension_numbers<[1], [0], [0], [1], [0, 0, 1, 1], [], []>} : vector<8x32xbf16>, vector<32x32xbf16>, vector<8x32xf32> -> vector<8x32xf32>
    %c2_152 = arith.constant 2 : index
    %c0_153 = arith.constant 0 : index
    %c0_154 = arith.constant 0 : index
    %273 = vector.load %arg8[%c2_152, %c0_153, %c0_154] : memref<4x1x32xf32, #tpu.memory_space<vmem>>, vector<1x1x32xf32>
    %274 = vector.shape_cast %273 : vector<1x1x32xf32> to vector<1x32xf32>
    %275 = vector.broadcast %274 : vector<1x32xf32> to vector<8x32xf32>
    %276 = arith.addf %272, %275 : vector<8x32xf32>
    %c2_155 = arith.constant 2 : index
    %c0_156 = arith.constant 0 : index
    %c0_157 = arith.constant 0 : index
    %277 = vector.load %arg6[%c2_155, %c0_156, %c0_157] : memref<4x32x32xbf16, #tpu.memory_space<vmem>>, vector<1x32x32xbf16>
    %278 = vector.shape_cast %277 : vector<1x32x32xbf16> to vector<32x32xbf16>
    %cst_158 = arith.constant dense<0.000000e+00> : vector<8x32xf32>
    %279 = tpu.matmul %269, %278, %cst_158 {dimension_numbers = #tpu.dot_dimension_numbers<[1], [0], [0], [1], [0, 0, 1, 1], [], []>} : vector<8x32xbf16>, vector<32x32xbf16>, vector<8x32xf32> -> vector<8x32xf32>
    %c2_159 = arith.constant 2 : index
    %c0_160 = arith.constant 0 : index
    %c0_161 = arith.constant 0 : index
    %280 = vector.load %arg9[%c2_159, %c0_160, %c0_161] : memref<4x1x32xf32, #tpu.memory_space<vmem>>, vector<1x1x32xf32>
    %281 = vector.shape_cast %280 : vector<1x1x32xf32> to vector<1x32xf32>
    %282 = vector.broadcast %281 : vector<1x32xf32> to vector<8x32xf32>
    %283 = arith.addf %279, %282 : vector<8x32xf32>
    %c2_162 = arith.constant 2 : index
    %c0_163 = arith.constant 0 : index
    %c0_164 = arith.constant 0 : index
    %284 = vector.load %arg7[%c2_162, %c0_163, %c0_164] : memref<4x32x32xbf16, #tpu.memory_space<vmem>>, vector<1x32x32xbf16>
    %285 = vector.shape_cast %284 : vector<1x32x32xbf16> to vector<32x32xbf16>
    %cst_165 = arith.constant dense<0.000000e+00> : vector<8x32xf32>
    %286 = tpu.matmul %269, %285, %cst_165 {dimension_numbers = #tpu.dot_dimension_numbers<[1], [0], [0], [1], [0, 0, 1, 1], [], []>} : vector<8x32xbf16>, vector<32x32xbf16>, vector<8x32xf32> -> vector<8x32xf32>
    %c2_166 = arith.constant 2 : index
    %c0_167 = arith.constant 0 : index
    %c0_168 = arith.constant 0 : index
    %287 = vector.load %arg10[%c2_166, %c0_167, %c0_168] : memref<4x1x32xf32, #tpu.memory_space<vmem>>, vector<1x1x32xf32>
    %288 = vector.shape_cast %287 : vector<1x1x32xf32> to vector<1x32xf32>
    %289 = vector.broadcast %288 : vector<1x32xf32> to vector<8x32xf32>
    %290 = arith.addf %286, %289 : vector<8x32xf32>
    %291 = vector.extract_strided_slice %283 {offsets = [4, 0], sizes = [4, 32], strides = [1, 1]} : vector<8x32xf32> to vector<4x32xf32>
    %292 = vector.extract_strided_slice %283 {offsets = [0, 0], sizes = [4, 32], strides = [1, 1]} : vector<8x32xf32> to vector<4x32xf32>
    %293 = tpu.concatenate %291, %292 in 0 : vector<4x32xf32>, vector<4x32xf32> -> vector<8x32xf32>
    %294 = vector.extract_strided_slice %290 {offsets = [4, 0], sizes = [4, 32], strides = [1, 1]} : vector<8x32xf32> to vector<4x32xf32>
    %295 = vector.extract_strided_slice %290 {offsets = [0, 0], sizes = [4, 32], strides = [1, 1]} : vector<8x32xf32> to vector<4x32xf32>
    %296 = tpu.concatenate %294, %295 in 0 : vector<4x32xf32>, vector<4x32xf32> -> vector<8x32xf32>
    %297 = arith.mulf %276, %283 : vector<8x32xf32>
    %298 = arith.mulf %276, %293 : vector<8x32xf32>
    %299 = tpu.concatenate %297, %298 in 0 : vector<8x32xf32>, vector<8x32xf32> -> vector<16x32xf32>
    %cst_169 = arith.constant dense<0.000000e+00> : vector<16x8xf32>
    %300 = tpu.matmul %299, %0, %cst_169 {dimension_numbers = #tpu.dot_dimension_numbers<[1], [0], [0], [1], [0, 0, 1, 1], [], []>} : vector<16x32xf32>, vector<32x8xf32>, vector<16x8xf32> -> vector<16x8xf32>
    %cst_170 = arith.constant 5.000000e-01 : f32
    %301 = vector.broadcast %cst_170 : f32 to vector<16x8xf32>
    %302 = arith.mulf %300, %301 : vector<16x8xf32>
    %303 = vector.extract_strided_slice %302 {offsets = [0, 0], sizes = [8, 8], strides = [1, 1]} : vector<16x8xf32> to vector<8x8xf32>
    %304 = vector.extract_strided_slice %302 {offsets = [8, 0], sizes = [8, 8], strides = [1, 1]} : vector<16x8xf32> to vector<8x8xf32>
    %305 = arith.maximumf %303, %304 : vector<8x8xf32>
    %306 = arith.subf %303, %305 : vector<8x8xf32>
    %307 = math.exp %306 : vector<8x8xf32>
    %308 = arith.subf %304, %305 : vector<8x8xf32>
    %309 = math.exp %308 : vector<8x8xf32>
    %310 = arith.addf %307, %309 : vector<8x8xf32>
    %311 = tpu.reciprocal %310 {approx = true} : vector<8x8xf32> -> vector<8x8xf32>
    %312 = arith.mulf %307, %311 : vector<8x8xf32>
    %313 = arith.mulf %309, %311 : vector<8x8xf32>
    %314 = tpu.concatenate %312, %313 in 0 : vector<8x8xf32>, vector<8x8xf32> -> vector<16x8xf32>
    %cst_171 = arith.constant dense<0.000000e+00> : vector<16x32xf32>
    %315 = tpu.matmul %314, %1, %cst_171 {dimension_numbers = #tpu.dot_dimension_numbers<[1], [0], [0], [1], [0, 0, 1, 1], [], []>} : vector<16x8xf32>, vector<8x32xf32>, vector<16x32xf32> -> vector<16x32xf32>
    %316 = vector.extract_strided_slice %315 {offsets = [0, 0], sizes = [8, 32], strides = [1, 1]} : vector<16x32xf32> to vector<8x32xf32>
    %317 = arith.mulf %316, %290 : vector<8x32xf32>
    %318 = vector.extract_strided_slice %315 {offsets = [8, 0], sizes = [8, 32], strides = [1, 1]} : vector<16x32xf32> to vector<8x32xf32>
    %319 = arith.mulf %318, %296 : vector<8x32xf32>
    %320 = arith.addf %317, %319 : vector<8x32xf32>
    %c2_172 = arith.constant 2 : index
    %c0_173 = arith.constant 0 : index
    %c0_174 = arith.constant 0 : index
    %321 = vector.load %arg11[%c2_172, %c0_173, %c0_174] : memref<4x32x32xbf16, #tpu.memory_space<vmem>>, vector<1x32x32xbf16>
    %322 = vector.shape_cast %321 : vector<1x32x32xbf16> to vector<32x32xbf16>
    %323 = arith.truncf %320 : vector<8x32xf32> to vector<8x32xbf16>
    %cst_175 = arith.constant dense<0.000000e+00> : vector<8x32xf32>
    %324 = tpu.matmul %323, %322, %cst_175 {dimension_numbers = #tpu.dot_dimension_numbers<[1], [0], [0], [1], [0, 0, 1, 1], [], []>} : vector<8x32xbf16>, vector<32x32xbf16>, vector<8x32xf32> -> vector<8x32xf32>
    %c2_176 = arith.constant 2 : index
    %c0_177 = arith.constant 0 : index
    %c0_178 = arith.constant 0 : index
    %325 = vector.load %arg12[%c2_176, %c0_177, %c0_178] : memref<4x1x32xf32, #tpu.memory_space<vmem>>, vector<1x1x32xf32>
    %326 = vector.shape_cast %325 : vector<1x1x32xf32> to vector<1x32xf32>
    %327 = vector.broadcast %326 : vector<1x32xf32> to vector<8x32xf32>
    %328 = arith.addf %324, %327 : vector<8x32xf32>
    %329 = arith.addf %268, %328 : vector<8x32xf32>
    %c2_179 = arith.constant 2 : index
    %c0_180 = arith.constant 0 : index
    %c0_181 = arith.constant 0 : index
    %330 = vector.load %arg13[%c2_179, %c0_180, %c0_181] : memref<4x1x32xf32, #tpu.memory_space<vmem>>, vector<1x1x32xf32>
    %331 = vector.shape_cast %330 : vector<1x1x32xf32> to vector<1x32xf32>
    %c2_182 = arith.constant 2 : index
    %c0_183 = arith.constant 0 : index
    %c0_184 = arith.constant 0 : index
    %332 = vector.load %arg14[%c2_182, %c0_183, %c0_184] : memref<4x1x32xf32, #tpu.memory_space<vmem>>, vector<1x1x32xf32>
    %333 = vector.shape_cast %332 : vector<1x1x32xf32> to vector<1x32xf32>
    %cst_185 = arith.constant dense<0.000000e+00> : vector<8xf32>
    %334 = vector.multi_reduction <add>, %329, %cst_185 [1] : vector<8x32xf32> to vector<8xf32>
    %335 = vector.shape_cast %334 : vector<8xf32> to vector<8x1xf32>
    %cst_186 = arith.constant 3.200000e+01 : f32
    %336 = vector.broadcast %cst_186 : f32 to vector<8x1xf32>
    %337 = arith.divf %335, %336 : vector<8x1xf32>
    %338 = vector.broadcast %337 : vector<8x1xf32> to vector<8x32xf32>
    %339 = arith.subf %329, %338 : vector<8x32xf32>
    %340 = arith.mulf %339, %339 : vector<8x32xf32>
    %cst_187 = arith.constant dense<0.000000e+00> : vector<8xf32>
    %341 = vector.multi_reduction <add>, %340, %cst_187 [1] : vector<8x32xf32> to vector<8xf32>
    %342 = vector.shape_cast %341 : vector<8xf32> to vector<8x1xf32>
    %cst_188 = arith.constant 3.200000e+01 : f32
    %343 = vector.broadcast %cst_188 : f32 to vector<8x1xf32>
    %344 = arith.divf %342, %343 : vector<8x1xf32>
    %cst_189 = arith.constant 9.99999974E-6 : f32
    %345 = vector.broadcast %cst_189 : f32 to vector<8x1xf32>
    %346 = arith.addf %344, %345 : vector<8x1xf32>
    %347 = math.rsqrt %346 : vector<8x1xf32>
    %348 = vector.broadcast %347 : vector<8x1xf32> to vector<8x32xf32>
    %349 = arith.mulf %339, %348 : vector<8x32xf32>
    %350 = vector.broadcast %331 : vector<1x32xf32> to vector<8x32xf32>
    %351 = arith.mulf %349, %350 : vector<8x32xf32>
    %352 = vector.broadcast %333 : vector<1x32xf32> to vector<8x32xf32>
    %353 = arith.addf %351, %352 : vector<8x32xf32>
    %c2_190 = arith.constant 2 : index
    %c0_191 = arith.constant 0 : index
    %c0_192 = arith.constant 0 : index
    %354 = vector.load %arg15[%c2_190, %c0_191, %c0_192] : memref<4x32x64xbf16, #tpu.memory_space<vmem>>, vector<1x32x64xbf16>
    %355 = vector.shape_cast %354 : vector<1x32x64xbf16> to vector<32x64xbf16>
    %356 = arith.truncf %353 : vector<8x32xf32> to vector<8x32xbf16>
    %cst_193 = arith.constant dense<0.000000e+00> : vector<8x64xf32>
    %357 = tpu.matmul %356, %355, %cst_193 {dimension_numbers = #tpu.dot_dimension_numbers<[1], [0], [0], [1], [0, 0, 1, 1], [], []>} : vector<8x32xbf16>, vector<32x64xbf16>, vector<8x64xf32> -> vector<8x64xf32>
    %c2_194 = arith.constant 2 : index
    %c0_195 = arith.constant 0 : index
    %c0_196 = arith.constant 0 : index
    %358 = vector.load %arg16[%c2_194, %c0_195, %c0_196] : memref<4x1x64xf32, #tpu.memory_space<vmem>>, vector<1x1x64xf32>
    %359 = vector.shape_cast %358 : vector<1x1x64xf32> to vector<1x64xf32>
    %360 = vector.broadcast %359 : vector<1x64xf32> to vector<8x64xf32>
    %361 = arith.addf %357, %360 : vector<8x64xf32>
    %cst_197 = arith.constant 0.000000e+00 : f32
    %362 = vector.broadcast %cst_197 : f32 to vector<8x64xf32>
    %363 = arith.maximumf %361, %362 : vector<8x64xf32>
    %c2_198 = arith.constant 2 : index
    %c0_199 = arith.constant 0 : index
    %c0_200 = arith.constant 0 : index
    %364 = vector.load %arg17[%c2_198, %c0_199, %c0_200] : memref<4x64x32xbf16, #tpu.memory_space<vmem>>, vector<1x64x32xbf16>
    %365 = vector.shape_cast %364 : vector<1x64x32xbf16> to vector<64x32xbf16>
    %366 = arith.truncf %363 : vector<8x64xf32> to vector<8x64xbf16>
    %cst_201 = arith.constant dense<0.000000e+00> : vector<8x32xf32>
    %367 = tpu.matmul %366, %365, %cst_201 {dimension_numbers = #tpu.dot_dimension_numbers<[1], [0], [0], [1], [0, 0, 1, 1], [], []>} : vector<8x64xbf16>, vector<64x32xbf16>, vector<8x32xf32> -> vector<8x32xf32>
    %c2_202 = arith.constant 2 : index
    %c0_203 = arith.constant 0 : index
    %c0_204 = arith.constant 0 : index
    %368 = vector.load %arg18[%c2_202, %c0_203, %c0_204] : memref<4x1x32xf32, #tpu.memory_space<vmem>>, vector<1x1x32xf32>
    %369 = vector.shape_cast %368 : vector<1x1x32xf32> to vector<1x32xf32>
    %370 = vector.broadcast %369 : vector<1x32xf32> to vector<8x32xf32>
    %371 = arith.addf %367, %370 : vector<8x32xf32>
    %372 = arith.addf %353, %371 : vector<8x32xf32>
    %c2_205 = arith.constant 2 : index
    %c0_206 = arith.constant 0 : index
    %c0_207 = arith.constant 0 : index
    %373 = vector.load %arg19[%c2_205, %c0_206, %c0_207] : memref<4x1x32xf32, #tpu.memory_space<vmem>>, vector<1x1x32xf32>
    %374 = vector.shape_cast %373 : vector<1x1x32xf32> to vector<1x32xf32>
    %c2_208 = arith.constant 2 : index
    %c0_209 = arith.constant 0 : index
    %c0_210 = arith.constant 0 : index
    %375 = vector.load %arg20[%c2_208, %c0_209, %c0_210] : memref<4x1x32xf32, #tpu.memory_space<vmem>>, vector<1x1x32xf32>
    %376 = vector.shape_cast %375 : vector<1x1x32xf32> to vector<1x32xf32>
    %cst_211 = arith.constant dense<0.000000e+00> : vector<8xf32>
    %377 = vector.multi_reduction <add>, %372, %cst_211 [1] : vector<8x32xf32> to vector<8xf32>
    %378 = vector.shape_cast %377 : vector<8xf32> to vector<8x1xf32>
    %cst_212 = arith.constant 3.200000e+01 : f32
    %379 = vector.broadcast %cst_212 : f32 to vector<8x1xf32>
    %380 = arith.divf %378, %379 : vector<8x1xf32>
    %381 = vector.broadcast %380 : vector<8x1xf32> to vector<8x32xf32>
    %382 = arith.subf %372, %381 : vector<8x32xf32>
    %383 = arith.mulf %382, %382 : vector<8x32xf32>
    %cst_213 = arith.constant dense<0.000000e+00> : vector<8xf32>
    %384 = vector.multi_reduction <add>, %383, %cst_213 [1] : vector<8x32xf32> to vector<8xf32>
    %385 = vector.shape_cast %384 : vector<8xf32> to vector<8x1xf32>
    %cst_214 = arith.constant 3.200000e+01 : f32
    %386 = vector.broadcast %cst_214 : f32 to vector<8x1xf32>
    %387 = arith.divf %385, %386 : vector<8x1xf32>
    %cst_215 = arith.constant 9.99999974E-6 : f32
    %388 = vector.broadcast %cst_215 : f32 to vector<8x1xf32>
    %389 = arith.addf %387, %388 : vector<8x1xf32>
    %390 = math.rsqrt %389 : vector<8x1xf32>
    %391 = vector.broadcast %390 : vector<8x1xf32> to vector<8x32xf32>
    %392 = arith.mulf %382, %391 : vector<8x32xf32>
    %393 = vector.broadcast %374 : vector<1x32xf32> to vector<8x32xf32>
    %394 = arith.mulf %392, %393 : vector<8x32xf32>
    %395 = vector.broadcast %376 : vector<1x32xf32> to vector<8x32xf32>
    %396 = arith.addf %394, %395 : vector<8x32xf32>
    %397 = arith.truncf %396 : vector<8x32xf32> to vector<8x32xbf16>
    %c3 = arith.constant 3 : index
    %c0_216 = arith.constant 0 : index
    %c0_217 = arith.constant 0 : index
    %398 = vector.load %arg5[%c3, %c0_216, %c0_217] : memref<4x32x32xbf16, #tpu.memory_space<vmem>>, vector<1x32x32xbf16>
    %399 = vector.shape_cast %398 : vector<1x32x32xbf16> to vector<32x32xbf16>
    %cst_218 = arith.constant dense<0.000000e+00> : vector<8x32xf32>
    %400 = tpu.matmul %397, %399, %cst_218 {dimension_numbers = #tpu.dot_dimension_numbers<[1], [0], [0], [1], [0, 0, 1, 1], [], []>} : vector<8x32xbf16>, vector<32x32xbf16>, vector<8x32xf32> -> vector<8x32xf32>
    %c3_219 = arith.constant 3 : index
    %c0_220 = arith.constant 0 : index
    %c0_221 = arith.constant 0 : index
    %401 = vector.load %arg8[%c3_219, %c0_220, %c0_221] : memref<4x1x32xf32, #tpu.memory_space<vmem>>, vector<1x1x32xf32>
    %402 = vector.shape_cast %401 : vector<1x1x32xf32> to vector<1x32xf32>
    %403 = vector.broadcast %402 : vector<1x32xf32> to vector<8x32xf32>
    %404 = arith.addf %400, %403 : vector<8x32xf32>
    %c3_222 = arith.constant 3 : index
    %c0_223 = arith.constant 0 : index
    %c0_224 = arith.constant 0 : index
    %405 = vector.load %arg6[%c3_222, %c0_223, %c0_224] : memref<4x32x32xbf16, #tpu.memory_space<vmem>>, vector<1x32x32xbf16>
    %406 = vector.shape_cast %405 : vector<1x32x32xbf16> to vector<32x32xbf16>
    %cst_225 = arith.constant dense<0.000000e+00> : vector<8x32xf32>
    %407 = tpu.matmul %397, %406, %cst_225 {dimension_numbers = #tpu.dot_dimension_numbers<[1], [0], [0], [1], [0, 0, 1, 1], [], []>} : vector<8x32xbf16>, vector<32x32xbf16>, vector<8x32xf32> -> vector<8x32xf32>
    %c3_226 = arith.constant 3 : index
    %c0_227 = arith.constant 0 : index
    %c0_228 = arith.constant 0 : index
    %408 = vector.load %arg9[%c3_226, %c0_227, %c0_228] : memref<4x1x32xf32, #tpu.memory_space<vmem>>, vector<1x1x32xf32>
    %409 = vector.shape_cast %408 : vector<1x1x32xf32> to vector<1x32xf32>
    %410 = vector.broadcast %409 : vector<1x32xf32> to vector<8x32xf32>
    %411 = arith.addf %407, %410 : vector<8x32xf32>
    %c3_229 = arith.constant 3 : index
    %c0_230 = arith.constant 0 : index
    %c0_231 = arith.constant 0 : index
    %412 = vector.load %arg7[%c3_229, %c0_230, %c0_231] : memref<4x32x32xbf16, #tpu.memory_space<vmem>>, vector<1x32x32xbf16>
    %413 = vector.shape_cast %412 : vector<1x32x32xbf16> to vector<32x32xbf16>
    %cst_232 = arith.constant dense<0.000000e+00> : vector<8x32xf32>
    %414 = tpu.matmul %397, %413, %cst_232 {dimension_numbers = #tpu.dot_dimension_numbers<[1], [0], [0], [1], [0, 0, 1, 1], [], []>} : vector<8x32xbf16>, vector<32x32xbf16>, vector<8x32xf32> -> vector<8x32xf32>
    %c3_233 = arith.constant 3 : index
    %c0_234 = arith.constant 0 : index
    %c0_235 = arith.constant 0 : index
    %415 = vector.load %arg10[%c3_233, %c0_234, %c0_235] : memref<4x1x32xf32, #tpu.memory_space<vmem>>, vector<1x1x32xf32>
    %416 = vector.shape_cast %415 : vector<1x1x32xf32> to vector<1x32xf32>
    %417 = vector.broadcast %416 : vector<1x32xf32> to vector<8x32xf32>
    %418 = arith.addf %414, %417 : vector<8x32xf32>
    %419 = vector.extract_strided_slice %411 {offsets = [4, 0], sizes = [4, 32], strides = [1, 1]} : vector<8x32xf32> to vector<4x32xf32>
    %420 = vector.extract_strided_slice %411 {offsets = [0, 0], sizes = [4, 32], strides = [1, 1]} : vector<8x32xf32> to vector<4x32xf32>
    %421 = tpu.concatenate %419, %420 in 0 : vector<4x32xf32>, vector<4x32xf32> -> vector<8x32xf32>
    %422 = vector.extract_strided_slice %418 {offsets = [4, 0], sizes = [4, 32], strides = [1, 1]} : vector<8x32xf32> to vector<4x32xf32>
    %423 = vector.extract_strided_slice %418 {offsets = [0, 0], sizes = [4, 32], strides = [1, 1]} : vector<8x32xf32> to vector<4x32xf32>
    %424 = tpu.concatenate %422, %423 in 0 : vector<4x32xf32>, vector<4x32xf32> -> vector<8x32xf32>
    %425 = arith.mulf %404, %411 : vector<8x32xf32>
    %426 = arith.mulf %404, %421 : vector<8x32xf32>
    %427 = tpu.concatenate %425, %426 in 0 : vector<8x32xf32>, vector<8x32xf32> -> vector<16x32xf32>
    %cst_236 = arith.constant dense<0.000000e+00> : vector<16x8xf32>
    %428 = tpu.matmul %427, %0, %cst_236 {dimension_numbers = #tpu.dot_dimension_numbers<[1], [0], [0], [1], [0, 0, 1, 1], [], []>} : vector<16x32xf32>, vector<32x8xf32>, vector<16x8xf32> -> vector<16x8xf32>
    %cst_237 = arith.constant 5.000000e-01 : f32
    %429 = vector.broadcast %cst_237 : f32 to vector<16x8xf32>
    %430 = arith.mulf %428, %429 : vector<16x8xf32>
    %431 = vector.extract_strided_slice %430 {offsets = [0, 0], sizes = [8, 8], strides = [1, 1]} : vector<16x8xf32> to vector<8x8xf32>
    %432 = vector.extract_strided_slice %430 {offsets = [8, 0], sizes = [8, 8], strides = [1, 1]} : vector<16x8xf32> to vector<8x8xf32>
    %433 = arith.maximumf %431, %432 : vector<8x8xf32>
    %434 = arith.subf %431, %433 : vector<8x8xf32>
    %435 = math.exp %434 : vector<8x8xf32>
    %436 = arith.subf %432, %433 : vector<8x8xf32>
    %437 = math.exp %436 : vector<8x8xf32>
    %438 = arith.addf %435, %437 : vector<8x8xf32>
    %439 = tpu.reciprocal %438 {approx = true} : vector<8x8xf32> -> vector<8x8xf32>
    %440 = arith.mulf %435, %439 : vector<8x8xf32>
    %441 = arith.mulf %437, %439 : vector<8x8xf32>
    %442 = tpu.concatenate %440, %441 in 0 : vector<8x8xf32>, vector<8x8xf32> -> vector<16x8xf32>
    %cst_238 = arith.constant dense<0.000000e+00> : vector<16x32xf32>
    %443 = tpu.matmul %442, %1, %cst_238 {dimension_numbers = #tpu.dot_dimension_numbers<[1], [0], [0], [1], [0, 0, 1, 1], [], []>} : vector<16x8xf32>, vector<8x32xf32>, vector<16x32xf32> -> vector<16x32xf32>
    %444 = vector.extract_strided_slice %443 {offsets = [0, 0], sizes = [8, 32], strides = [1, 1]} : vector<16x32xf32> to vector<8x32xf32>
    %445 = arith.mulf %444, %418 : vector<8x32xf32>
    %446 = vector.extract_strided_slice %443 {offsets = [8, 0], sizes = [8, 32], strides = [1, 1]} : vector<16x32xf32> to vector<8x32xf32>
    %447 = arith.mulf %446, %424 : vector<8x32xf32>
    %448 = arith.addf %445, %447 : vector<8x32xf32>
    %c3_239 = arith.constant 3 : index
    %c0_240 = arith.constant 0 : index
    %c0_241 = arith.constant 0 : index
    %449 = vector.load %arg11[%c3_239, %c0_240, %c0_241] : memref<4x32x32xbf16, #tpu.memory_space<vmem>>, vector<1x32x32xbf16>
    %450 = vector.shape_cast %449 : vector<1x32x32xbf16> to vector<32x32xbf16>
    %451 = arith.truncf %448 : vector<8x32xf32> to vector<8x32xbf16>
    %cst_242 = arith.constant dense<0.000000e+00> : vector<8x32xf32>
    %452 = tpu.matmul %451, %450, %cst_242 {dimension_numbers = #tpu.dot_dimension_numbers<[1], [0], [0], [1], [0, 0, 1, 1], [], []>} : vector<8x32xbf16>, vector<32x32xbf16>, vector<8x32xf32> -> vector<8x32xf32>
    %c3_243 = arith.constant 3 : index
    %c0_244 = arith.constant 0 : index
    %c0_245 = arith.constant 0 : index
    %453 = vector.load %arg12[%c3_243, %c0_244, %c0_245] : memref<4x1x32xf32, #tpu.memory_space<vmem>>, vector<1x1x32xf32>
    %454 = vector.shape_cast %453 : vector<1x1x32xf32> to vector<1x32xf32>
    %455 = vector.broadcast %454 : vector<1x32xf32> to vector<8x32xf32>
    %456 = arith.addf %452, %455 : vector<8x32xf32>
    %457 = arith.addf %396, %456 : vector<8x32xf32>
    %c3_246 = arith.constant 3 : index
    %c0_247 = arith.constant 0 : index
    %c0_248 = arith.constant 0 : index
    %458 = vector.load %arg13[%c3_246, %c0_247, %c0_248] : memref<4x1x32xf32, #tpu.memory_space<vmem>>, vector<1x1x32xf32>
    %459 = vector.shape_cast %458 : vector<1x1x32xf32> to vector<1x32xf32>
    %c3_249 = arith.constant 3 : index
    %c0_250 = arith.constant 0 : index
    %c0_251 = arith.constant 0 : index
    %460 = vector.load %arg14[%c3_249, %c0_250, %c0_251] : memref<4x1x32xf32, #tpu.memory_space<vmem>>, vector<1x1x32xf32>
    %461 = vector.shape_cast %460 : vector<1x1x32xf32> to vector<1x32xf32>
    %cst_252 = arith.constant dense<0.000000e+00> : vector<8xf32>
    %462 = vector.multi_reduction <add>, %457, %cst_252 [1] : vector<8x32xf32> to vector<8xf32>
    %463 = vector.shape_cast %462 : vector<8xf32> to vector<8x1xf32>
    %cst_253 = arith.constant 3.200000e+01 : f32
    %464 = vector.broadcast %cst_253 : f32 to vector<8x1xf32>
    %465 = arith.divf %463, %464 : vector<8x1xf32>
    %466 = vector.broadcast %465 : vector<8x1xf32> to vector<8x32xf32>
    %467 = arith.subf %457, %466 : vector<8x32xf32>
    %468 = arith.mulf %467, %467 : vector<8x32xf32>
    %cst_254 = arith.constant dense<0.000000e+00> : vector<8xf32>
    %469 = vector.multi_reduction <add>, %468, %cst_254 [1] : vector<8x32xf32> to vector<8xf32>
    %470 = vector.shape_cast %469 : vector<8xf32> to vector<8x1xf32>
    %cst_255 = arith.constant 3.200000e+01 : f32
    %471 = vector.broadcast %cst_255 : f32 to vector<8x1xf32>
    %472 = arith.divf %470, %471 : vector<8x1xf32>
    %cst_256 = arith.constant 9.99999974E-6 : f32
    %473 = vector.broadcast %cst_256 : f32 to vector<8x1xf32>
    %474 = arith.addf %472, %473 : vector<8x1xf32>
    %475 = math.rsqrt %474 : vector<8x1xf32>
    %476 = vector.broadcast %475 : vector<8x1xf32> to vector<8x32xf32>
    %477 = arith.mulf %467, %476 : vector<8x32xf32>
    %478 = vector.broadcast %459 : vector<1x32xf32> to vector<8x32xf32>
    %479 = arith.mulf %477, %478 : vector<8x32xf32>
    %480 = vector.broadcast %461 : vector<1x32xf32> to vector<8x32xf32>
    %481 = arith.addf %479, %480 : vector<8x32xf32>
    %c3_257 = arith.constant 3 : index
    %c0_258 = arith.constant 0 : index
    %c0_259 = arith.constant 0 : index
    %482 = vector.load %arg15[%c3_257, %c0_258, %c0_259] : memref<4x32x64xbf16, #tpu.memory_space<vmem>>, vector<1x32x64xbf16>
    %483 = vector.shape_cast %482 : vector<1x32x64xbf16> to vector<32x64xbf16>
    %484 = arith.truncf %481 : vector<8x32xf32> to vector<8x32xbf16>
    %cst_260 = arith.constant dense<0.000000e+00> : vector<8x64xf32>
    %485 = tpu.matmul %484, %483, %cst_260 {dimension_numbers = #tpu.dot_dimension_numbers<[1], [0], [0], [1], [0, 0, 1, 1], [], []>} : vector<8x32xbf16>, vector<32x64xbf16>, vector<8x64xf32> -> vector<8x64xf32>
    %c3_261 = arith.constant 3 : index
    %c0_262 = arith.constant 0 : index
    %c0_263 = arith.constant 0 : index
    %486 = vector.load %arg16[%c3_261, %c0_262, %c0_263] : memref<4x1x64xf32, #tpu.memory_space<vmem>>, vector<1x1x64xf32>
    %487 = vector.shape_cast %486 : vector<1x1x64xf32> to vector<1x64xf32>
    %488 = vector.broadcast %487 : vector<1x64xf32> to vector<8x64xf32>
    %489 = arith.addf %485, %488 : vector<8x64xf32>
    %cst_264 = arith.constant 0.000000e+00 : f32
    %490 = vector.broadcast %cst_264 : f32 to vector<8x64xf32>
    %491 = arith.maximumf %489, %490 : vector<8x64xf32>
    %c3_265 = arith.constant 3 : index
    %c0_266 = arith.constant 0 : index
    %c0_267 = arith.constant 0 : index
    %492 = vector.load %arg17[%c3_265, %c0_266, %c0_267] : memref<4x64x32xbf16, #tpu.memory_space<vmem>>, vector<1x64x32xbf16>
    %493 = vector.shape_cast %492 : vector<1x64x32xbf16> to vector<64x32xbf16>
    %494 = arith.truncf %491 : vector<8x64xf32> to vector<8x64xbf16>
    %cst_268 = arith.constant dense<0.000000e+00> : vector<8x32xf32>
    %495 = tpu.matmul %494, %493, %cst_268 {dimension_numbers = #tpu.dot_dimension_numbers<[1], [0], [0], [1], [0, 0, 1, 1], [], []>} : vector<8x64xbf16>, vector<64x32xbf16>, vector<8x32xf32> -> vector<8x32xf32>
    %c3_269 = arith.constant 3 : index
    %c0_270 = arith.constant 0 : index
    %c0_271 = arith.constant 0 : index
    %496 = vector.load %arg18[%c3_269, %c0_270, %c0_271] : memref<4x1x32xf32, #tpu.memory_space<vmem>>, vector<1x1x32xf32>
    %497 = vector.shape_cast %496 : vector<1x1x32xf32> to vector<1x32xf32>
    %498 = vector.broadcast %497 : vector<1x32xf32> to vector<8x32xf32>
    %499 = arith.addf %495, %498 : vector<8x32xf32>
    %500 = arith.addf %481, %499 : vector<8x32xf32>
    %c3_272 = arith.constant 3 : index
    %c0_273 = arith.constant 0 : index
    %c0_274 = arith.constant 0 : index
    %501 = vector.load %arg19[%c3_272, %c0_273, %c0_274] : memref<4x1x32xf32, #tpu.memory_space<vmem>>, vector<1x1x32xf32>
    %502 = vector.shape_cast %501 : vector<1x1x32xf32> to vector<1x32xf32>
    %c3_275 = arith.constant 3 : index
    %c0_276 = arith.constant 0 : index
    %c0_277 = arith.constant 0 : index
    %503 = vector.load %arg20[%c3_275, %c0_276, %c0_277] : memref<4x1x32xf32, #tpu.memory_space<vmem>>, vector<1x1x32xf32>
    %504 = vector.shape_cast %503 : vector<1x1x32xf32> to vector<1x32xf32>
    %cst_278 = arith.constant dense<0.000000e+00> : vector<8xf32>
    %505 = vector.multi_reduction <add>, %500, %cst_278 [1] : vector<8x32xf32> to vector<8xf32>
    %506 = vector.shape_cast %505 : vector<8xf32> to vector<8x1xf32>
    %cst_279 = arith.constant 3.200000e+01 : f32
    %507 = vector.broadcast %cst_279 : f32 to vector<8x1xf32>
    %508 = arith.divf %506, %507 : vector<8x1xf32>
    %509 = vector.broadcast %508 : vector<8x1xf32> to vector<8x32xf32>
    %510 = arith.subf %500, %509 : vector<8x32xf32>
    %511 = arith.mulf %510, %510 : vector<8x32xf32>
    %cst_280 = arith.constant dense<0.000000e+00> : vector<8xf32>
    %512 = vector.multi_reduction <add>, %511, %cst_280 [1] : vector<8x32xf32> to vector<8xf32>
    %513 = vector.shape_cast %512 : vector<8xf32> to vector<8x1xf32>
    %cst_281 = arith.constant 3.200000e+01 : f32
    %514 = vector.broadcast %cst_281 : f32 to vector<8x1xf32>
    %515 = arith.divf %513, %514 : vector<8x1xf32>
    %cst_282 = arith.constant 9.99999974E-6 : f32
    %516 = vector.broadcast %cst_282 : f32 to vector<8x1xf32>
    %517 = arith.addf %515, %516 : vector<8x1xf32>
    %518 = math.rsqrt %517 : vector<8x1xf32>
    %519 = vector.broadcast %518 : vector<8x1xf32> to vector<8x32xf32>
    %520 = arith.mulf %510, %519 : vector<8x32xf32>
    %521 = vector.broadcast %502 : vector<1x32xf32> to vector<8x32xf32>
    %522 = arith.mulf %520, %521 : vector<8x32xf32>
    %523 = vector.broadcast %504 : vector<1x32xf32> to vector<8x32xf32>
    %524 = arith.addf %522, %523 : vector<8x32xf32>
    %525 = vector.extract_strided_slice %524 {offsets = [0, 0], sizes = [4, 32], strides = [1, 1]} : vector<8x32xf32> to vector<4x32xf32>
    %c0_283 = arith.constant 0 : index
    %c0_284 = arith.constant 0 : index
    %526 = vector.load %arg21[%c0_283, %c0_284] : memref<32x32xbf16, #tpu.memory_space<vmem>>, vector<32x32xbf16>
    %527 = arith.truncf %525 : vector<4x32xf32> to vector<4x32xbf16>
    %cst_285 = arith.constant dense<0.000000e+00> : vector<4x32xf32>
    %528 = tpu.matmul %527, %526, %cst_285 {dimension_numbers = #tpu.dot_dimension_numbers<[1], [0], [0], [1], [0, 0, 1, 1], [], []>} : vector<4x32xbf16>, vector<32x32xbf16>, vector<4x32xf32> -> vector<4x32xf32>
    %c0_286 = arith.constant 0 : index
    %c0_287 = arith.constant 0 : index
    %529 = vector.load %arg22[%c0_286, %c0_287] : memref<1x32xf32, #tpu.memory_space<vmem>>, vector<1x32xf32>
    %530 = vector.broadcast %529 : vector<1x32xf32> to vector<4x32xf32>
    %531 = arith.addf %528, %530 : vector<4x32xf32>
    %cst_288 = arith.constant 0.000000e+00 : f32
    %532 = vector.broadcast %cst_288 : f32 to vector<4x32xf32>
    %533 = arith.maximumf %531, %532 : vector<4x32xf32>
    %c0_289 = arith.constant 0 : index
    %c0_290 = arith.constant 0 : index
    %534 = vector.load %arg23[%c0_289, %c0_290] : memref<32x16xbf16, #tpu.memory_space<vmem>>, vector<32x16xbf16>
    %535 = arith.truncf %533 : vector<4x32xf32> to vector<4x32xbf16>
    %cst_291 = arith.constant dense<0.000000e+00> : vector<4x16xf32>
    %536 = tpu.matmul %535, %534, %cst_291 {dimension_numbers = #tpu.dot_dimension_numbers<[1], [0], [0], [1], [0, 0, 1, 1], [], []>} : vector<4x32xbf16>, vector<32x16xbf16>, vector<4x16xf32> -> vector<4x16xf32>
    %c0_292 = arith.constant 0 : index
    %c0_293 = arith.constant 0 : index
    %537 = vector.load %arg24[%c0_292, %c0_293] : memref<1x16xf32, #tpu.memory_space<vmem>>, vector<1x16xf32>
    %538 = vector.broadcast %537 : vector<1x16xf32> to vector<4x16xf32>
    %539 = arith.addf %536, %538 : vector<4x16xf32>
    %c0_294 = arith.constant 0 : index
    %c0_295 = arith.constant 0 : index
    %540 = vector.load %arg27[%c0_294, %c0_295] : memref<4x16xf32, #tpu.memory_space<vmem>>, vector<4x16xf32>
    tpu.vector_store %arg27[%c0_294, %c0_295], %539 {strides = array<i32>} : memref<4x16xf32, #tpu.memory_space<vmem>>, vector<4x16xf32>,
    return
  }
}

</mosaic_0001>

<llo_original>
// kernel: tpu_custom_call.1
$region0: #{tpu_custom_call.1}
  #allocation0 [shape = 'u32[]', space=smem, size = 0x4, offset = 0x4, fixed_abs, tag = 'smem constant byte address 0x4 - core index']
  #allocation1 [shape = 'u32[144,128]{1,0:T(1,128)}', space=vmem, size = 0x12000, scoped, tag = 'internal scratch']
  %s0 = inlined_call_operand.hbm [shape: f32[4,64], index: 0, kind: input, shape index: {}]
  %s1 = inlined_call_operand.hbm [shape: f32[4,48], index: 1, kind: input, shape index: {}]
  %s2 = inlined_call_operand.vmem [shape: bf16[64,32], index: 2, kind: input, shape index: {}]
  %s3 = inlined_call_operand.vmem [shape: bf16[48,32], index: 3, kind: input, shape index: {}]
  %s4 = inlined_call_operand.hbm [shape: f32[8,32], index: 4, kind: input, shape index: {}]
  %s5 = inlined_call_operand.vmem [shape: bf16[4,32,32], index: 5, kind: input, shape index: {}]
  %s6 = inlined_call_operand.vmem [shape: bf16[4,32,32], index: 6, kind: input, shape index: {}]
  %s7 = inlined_call_operand.vmem [shape: bf16[4,32,32], index: 7, kind: input, shape index: {}]
  %s8 = inlined_call_operand.hbm [shape: f32[4,1,32], index: 8, kind: input, shape index: {}]
  %s9 = inlined_call_operand.hbm [shape: f32[4,1,32], index: 9, kind: input, shape index: {}]
  %s10 = inlined_call_operand.hbm [shape: f32[4,1,32], index: 10, kind: input, shape index: {}]
  %s11 = inlined_call_operand.vmem [shape: bf16[4,32,32], index: 11, kind: input, shape index: {}]
  %s12 = inlined_call_operand.hbm [shape: f32[4,1,32], index: 12, kind: input, shape index: {}]
  %s13 = inlined_call_operand.hbm [shape: f32[4,1,32], index: 13, kind: input, shape index: {}]
  %s14 = inlined_call_operand.hbm [shape: f32[4,1,32], index: 14, kind: input, shape index: {}]
  %s15 = inlined_call_operand.vmem [shape: bf16[4,32,64], index: 15, kind: input, shape index: {}]
  %s16 = inlined_call_operand.hbm [shape: f32[4,1,64], index: 16, kind: input, shape index: {}]
  %s17 = inlined_call_operand.vmem [shape: bf16[4,64,32], index: 17, kind: input, shape index: {}]
  %s18 = inlined_call_operand.hbm [shape: f32[4,1,32], index: 18, kind: input, shape index: {}]
  %s19 = inlined_call_operand.hbm [shape: f32[4,1,32], index: 19, kind: input, shape index: {}]
  %s20 = inlined_call_operand.hbm [shape: f32[4,1,32], index: 20, kind: input, shape index: {}]
  %s21 = inlined_call_operand.vmem [shape: bf16[32,32], index: 21, kind: input, shape index: {}]
  %s22 = inlined_call_operand.vmem [shape: f32[1,32], index: 22, kind: input, shape index: {}]
  %s23 = inlined_call_operand.vmem [shape: bf16[32,16], index: 23, kind: input, shape index: {}]
  %s24 = inlined_call_operand.vmem [shape: f32[1,16], index: 24, kind: input, shape index: {}]
  %s25 = inlined_call_operand.vmem [shape: f32[32,8], index: 25, kind: input, shape index: {}]
  %s26 = inlined_call_operand.vmem [shape: f32[8,32], index: 26, kind: input, shape index: {}]
  %s27 = inlined_call_operand.hbm [shape: f32[4,16], index: 27, kind: output, shape index: {}]
  %s28 = sld [smem:[#allocation0]]
  $region170: #{tpu_custom_call.1} parent=0
    _
  %s30 = ssub.s32 1, %s28
  %s31 = scalar_select 0, %s30, %s28
  $region1: #{tpu_custom_call.1} parent=0
    #allocation2 [shape = 'u8[2048]{0}', space=vmem, size = 0x800, scoped, tag = 'input window, operand 0, single buffered']
    #allocation3 [shape = 's32[1]{0}', space=sflag, size = 0x4, scoped, tag = 'scoped memory for tpu_custom_call.1']
    #allocation4 [shape = 's32[1]{0}', space=sflag, size = 0x4, scoped, tag = 'scoped memory for tpu_custom_call.1']
    #allocation5 [shape = 'u8[2048]{0}', space=vmem, size = 0x800, scoped, tag = 'input window, operand 1, single buffered']
    #allocation6 [shape = 's32[1]{0}', space=sflag, size = 0x4, scoped, tag = 'scoped memory for tpu_custom_call.1']
    #allocation7 [shape = 'u8[4096]{0}', space=vmem, size = 0x1000, scoped, tag = 'input window, operand 4, single buffered']
    #allocation8 [shape = 'u8[2048]{0}', space=vmem, size = 0x800, scoped, tag = 'input window, operand 8, single buffered']
    #allocation9 [shape = 's32[1]{0}', space=sflag, size = 0x4, scoped, tag = 'scoped memory for tpu_custom_call.1']
    #allocation10 [shape = 'u8[2048]{0}', space=vmem, size = 0x800, scoped, tag = 'input window, operand 9, single buffered']
    #allocation11 [shape = 'u8[2048]{0}', space=vmem, size = 0x800, scoped, tag = 'input window, operand 10, single buffered']
    #allocation12 [shape = 's32[1]{0}', space=sflag, size = 0x4, scoped, tag = 'scoped memory for tpu_custom_call.1']
    #allocation13 [shape = 'u8[2048]{0}', space=vmem, size = 0x800, scoped, tag = 'input window, operand 12, single buffered']
    #allocation14 [shape = 'u8[2048]{0}', space=vmem, size = 0x800, scoped, tag = 'input window, operand 13, single buffered']
    #allocation15 [shape = 's32[1]{0}', space=sflag, size = 0x4, scoped, tag = 'scoped memory for tpu_custom_call.1']
    #allocation16 [shape = 'u8[2048]{0}', space=vmem, size = 0x800, scoped, tag = 'input window, operand 14, single buffered']
    #allocation17 [shape = 'u8[2048]{0}', space=vmem, size = 0x800, scoped, tag = 'input window, operand 16, single buffered']
    #allocation18 [shape = 's32[1]{0}', space=sflag, size = 0x4, scoped, tag = 'scoped memory for tpu_custom_call.1']
    #allocation19 [shape = 'u8[2048]{0}', space=vmem, size = 0x800, scoped, tag = 'input window, operand 18, single buffered']
    #allocation20 [shape = 'u8[2048]{0}', space=vmem, size = 0x800, scoped, tag = 'input window, operand 19, single buffered']
    #allocation21 [shape = 's32[1]{0}', space=sflag, size = 0x4, scoped, tag = 'scoped memory for tpu_custom_call.1']
    #allocation22 [shape = 'u8[2048]{0}', space=vmem, size = 0x800, scoped, tag = 'input window, operand 20, single buffered']
    #allocation23 [shape = 'u8[2048]{0}', space=vmem, size = 0x800, scoped, tag = 'output window, operand 0, single buffered']
    %32 = vsyncpa [#allocation3], 0
    %33 = vsyncpa [#allocation6], 0
    %34 = vsyncpa [#allocation9], 0
    %35 = vsyncpa [#allocation12], 0
    %36 = vsyncpa [#allocation15], 0
    %37 = vsyncpa [#allocation18], 0
    %38 = vsyncpa [#allocation21], 0
    %39 = vsyncpa [#allocation4], 0
    // Predicated region
    $region2: #{tpu_custom_call.1} parent=1 // pred_check
      _
    $region3: #{tpu_custom_call.1} parent=1 // pred_check_branch
      %41 = sbr.rel (0) target = $region5
    $region4: #{tpu_custom_call.1} parent=1 // pred_region
      %s43 = ssub.s32 64, 64
      %44 = vsyncadd [#allocation3], %s43
      %s46 = sshll.u32 [#allocation2], 4
      %s47 = int_to_ptr.vmem [resolvable:$true] %s46
      %49 = dma.hbm_to_vmem [thread:$0]  %s0, 64, %s47, [#allocation3]
    $region5: #{tpu_custom_call.1} parent=1 // pred_fallthru
      _
    // Predicated region
    $region6: #{tpu_custom_call.1} parent=1 // pred_check
      _
    $region7: #{tpu_custom_call.1} parent=1 // pred_check_branch
      %51 = sbr.rel (0) target = $region9
    $region8: #{tpu_custom_call.1} parent=1 // pred_region
      %s53 = ssub.s32 64, 64
      %54 = vsyncadd [#allocation6], %s53
      %s56 = sshll.u32 [#allocation5], 4
      %s57 = int_to_ptr.vmem [resolvable:$true] %s56
      %59 = dma.hbm_to_vmem [thread:$0]  %s1, 64, %s57, [#allocation6]
    $region9: #{tpu_custom_call.1} parent=1 // pred_fallthru
      _
    // Predicated region
    $region10: #{tpu_custom_call.1} parent=1 // pred_check
      _
    $region11: #{tpu_custom_call.1} parent=1 // pred_check_branch
      %61 = sbr.rel (0) target = $region13
    $region12: #{tpu_custom_call.1} parent=1 // pred_region
      _
    $region13: #{tpu_custom_call.1} parent=1 // pred_fallthru
      _
    // Predicated region
    $region14: #{tpu_custom_call.1} parent=1 // pred_check
      _
    $region15: #{tpu_custom_call.1} parent=1 // pred_check_branch
      %63 = sbr.rel (0) target = $region17
    $region16: #{tpu_custom_call.1} parent=1 // pred_region
      _
    $region17: #{tpu_custom_call.1} parent=1 // pred_fallthru
      _
    // Predicated region
    $region18: #{tpu_custom_call.1} parent=1 // pred_check
      _
    $region19: #{tpu_custom_call.1} parent=1 // pred_check_branch
      %65 = sbr.rel (0) target = $region21
    $region20: #{tpu_custom_call.1} parent=1 // pred_region
      %s67 = ssub.s32 128, 128
      %68 = vsyncadd [#allocation6], %s67
      %s70 = sshll.u32 [#allocation7], 4
      %s71 = int_to_ptr.vmem [resolvable:$true] %s70
      %73 = dma.hbm_to_vmem [thread:$0]  %s4, 128, %s71, [#allocation6]
    $region21: #{tpu_custom_call.1} parent=1 // pred_fallthru
      _
    // Predicated region
    $region22: #{tpu_custom_call.1} parent=1 // pred_check
      _
    $region23: #{tpu_custom_call.1} parent=1 // pred_check_branch
      %75 = sbr.rel (0) target = $region25
    $region24: #{tpu_custom_call.1} parent=1 // pred_region
      _
    $region25: #{tpu_custom_call.1} parent=1 // pred_fallthru
      _
    // Predicated region
    $region26: #{tpu_custom_call.1} parent=1 // pred_check
      _
    $region27: #{tpu_custom_call.1} parent=1 // pred_check_branch
      %77 = sbr.rel (0) target = $region29
    $region28: #{tpu_custom_call.1} parent=1 // pred_region
      _
    $region29: #{tpu_custom_call.1} parent=1 // pred_fallthru
      _
    // Predicated region
    $region30: #{tpu_custom_call.1} parent=1 // pred_check
      _
    $region31: #{tpu_custom_call.1} parent=1 // pred_check_branch
      %79 = sbr.rel (0) target = $region33
    $region32: #{tpu_custom_call.1} parent=1 // pred_region
      _
    $region33: #{tpu_custom_call.1} parent=1 // pred_fallthru
      _
    // Predicated region
    $region34: #{tpu_custom_call.1} parent=1 // pred_check
      _
    $region35: #{tpu_custom_call.1} parent=1 // pred_check_branch
      %81 = sbr.rel (0) target = $region37
    $region36: #{tpu_custom_call.1} parent=1 // pred_region
      %s83 = ssub.s32 64, 64
      %84 = vsyncadd [#allocation9], %s83
      %s85 = sshll.u32 [#allocation8], 4
      %s86 = int_to_ptr.vmem [resolvable:$true] %s85
      %91 = dma.hbm_to_vmem [thread:$0]  %s8, 64, %s86, [#allocation9], 16, 16, 1
    $region37: #{tpu_custom_call.1} parent=1 // pred_fallthru
      _
    // Predicated region
    $region38: #{tpu_custom_call.1} parent=1 // pred_check
      _
    $region39: #{tpu_custom_call.1} parent=1 // pred_check_branch
      %93 = sbr.rel (0) target = $region41
    $region40: #{tpu_custom_call.1} parent=1 // pred_region
      %s95 = ssub.s32 64, 64
      %96 = vsyncadd [#allocation9], %s95
      %s97 = sshll.u32 [#allocation10], 4
      %s98 = int_to_ptr.vmem [resolvable:$true] %s97
      %103 = dma.hbm_to_vmem [thread:$0]  %s9, 64, %s98, [#allocation9], 16, 16, 1
    $region41: #{tpu_custom_call.1} parent=1 // pred_fallthru
      _
    // Predicated region
    $region42: #{tpu_custom_call.1} parent=1 // pred_check
      _
    $region43: #{tpu_custom_call.1} parent=1 // pred_check_branch
      %105 = sbr.rel (0) target = $region45
    $region44: #{tpu_custom_call.1} parent=1 // pred_region
      %s107 = ssub.s32 64, 64
      %108 = vsyncadd [#allocation12], %s107
      %s109 = sshll.u32 [#allocation11], 4
      %s110 = int_to_ptr.vmem [resolvable:$true] %s109
      %115 = dma.hbm_to_vmem [thread:$0]  %s10, 64, %s110, [#allocation12], 16, 16, 1
    $region45: #{tpu_custom_call.1} parent=1 // pred_fallthru
      _
    // Predicated region
    $region46: #{tpu_custom_call.1} parent=1 // pred_check
      _
    $region47: #{tpu_custom_call.1} parent=1 // pred_check_branch
      %117 = sbr.rel (0) target = $region49
    $region48: #{tpu_custom_call.1} parent=1 // pred_region
      _
    $region49: #{tpu_custom_call.1} parent=1 // pred_fallthru
      _
    // Predicated region
    $region50: #{tpu_custom_call.1} parent=1 // pred_check
      _
    $region51: #{tpu_custom_call.1} parent=1 // pred_check_branch
      %119 = sbr.rel (0) target = $region53
    $region52: #{tpu_custom_call.1} parent=1 // pred_region
      %s121 = ssub.s32 64, 64
      %122 = vsyncadd [#allocation12], %s121
      %s123 = sshll.u32 [#allocation13], 4
      %s124 = int_to_ptr.vmem [resolvable:$true] %s123
      %129 = dma.hbm_to_vmem [thread:$0]  %s12, 64, %s124, [#allocation12], 16, 16, 1
    $region53: #{tpu_custom_call.1} parent=1 // pred_fallthru
      _
    // Predicated region
    $region54: #{tpu_custom_call.1} parent=1 // pred_check
      _
    $region55: #{tpu_custom_call.1} parent=1 // pred_check_branch
      %131 = sbr.rel (0) target = $region57
    $region56: #{tpu_custom_call.1} parent=1 // pred_region
      %s133 = ssub.s32 64, 64
      %134 = vsyncadd [#allocation15], %s133
      %s135 = sshll.u32 [#allocation14], 4
      %s136 = int_to_ptr.vmem [resolvable:$true] %s135
      %141 = dma.hbm_to_vmem [thread:$0]  %s13, 64, %s136, [#allocation15], 16, 16, 1
    $region57: #{tpu_custom_call.1} parent=1 // pred_fallthru
      _
    // Predicated region
    $region58: #{tpu_custom_call.1} parent=1 // pred_check
      _
    $region59: #{tpu_custom_call.1} parent=1 // pred_check_branch
      %143 = sbr.rel (0) target = $region61
    $region60: #{tpu_custom_call.1} parent=1 // pred_region
      %s145 = ssub.s32 64, 64
      %146 = vsyncadd [#allocation15], %s145
      %s147 = sshll.u32 [#allocation16], 4
      %s148 = int_to_ptr.vmem [resolvable:$true] %s147
      %153 = dma.hbm_to_vmem [thread:$0]  %s14, 64, %s148, [#allocation15], 16, 16, 1
    $region61: #{tpu_custom_call.1} parent=1 // pred_fallthru
      _
    // Predicated region
    $region62: #{tpu_custom_call.1} parent=1 // pred_check
      _
    $region63: #{tpu_custom_call.1} parent=1 // pred_check_branch
      %155 = sbr.rel (0) target = $region65
    $region64: #{tpu_custom_call.1} parent=1 // pred_region
      _
    $region65: #{tpu_custom_call.1} parent=1 // pred_fallthru
      _
    // Predicated region
    $region66: #{tpu_custom_call.1} parent=1 // pred_check
      _
    $region67: #{tpu_custom_call.1} parent=1 // pred_check_branch
      %157 = sbr.rel (0) target = $region69
    $region68: #{tpu_custom_call.1} parent=1 // pred_region
      %s159 = ssub.s32 64, 64
      %160 = vsyncadd [#allocation18], %s159
      %s161 = sshll.u32 [#allocation17], 4
      %s162 = int_to_ptr.vmem [resolvable:$true] %s161
      %167 = dma.hbm_to_vmem [thread:$0]  %s16, 64, %s162, [#allocation18], 16, 16, 1
    $region69: #{tpu_custom_call.1} parent=1 // pred_fallthru
      _
    // Predicated region
    $region70: #{tpu_custom_call.1} parent=1 // pred_check
      _
    $region71: #{tpu_custom_call.1} parent=1 // pred_check_branch
      %169 = sbr.rel (0) target = $region73
    $region72: #{tpu_custom_call.1} parent=1 // pred_region
      _
    $region73: #{tpu_custom_call.1} parent=1 // pred_fallthru
      _
    // Predicated region
    $region74: #{tpu_custom_call.1} parent=1 // pred_check
      _
    $region75: #{tpu_custom_call.1} parent=1 // pred_check_branch
      %171 = sbr.rel (0) target = $region77
    $region76: #{tpu_custom_call.1} parent=1 // pred_region
      %s173 = ssub.s32 64, 64
      %174 = vsyncadd [#allocation18], %s173
      %s175 = sshll.u32 [#allocation19], 4
      %s176 = int_to_ptr.vmem [resolvable:$true] %s175
      %181 = dma.hbm_to_vmem [thread:$0]  %s18, 64, %s176, [#allocation18], 16, 16, 1
    $region77: #{tpu_custom_call.1} parent=1 // pred_fallthru
      _
    // Predicated region
    $region78: #{tpu_custom_call.1} parent=1 // pred_check
      _
    $region79: #{tpu_custom_call.1} parent=1 // pred_check_branch
      %183 = sbr.rel (0) target = $region81
    $region80: #{tpu_custom_call.1} parent=1 // pred_region
      %s185 = ssub.s32 64, 64
      %186 = vsyncadd [#allocation21], %s185
      %s187 = sshll.u32 [#allocation20], 4
      %s188 = int_to_ptr.vmem [resolvable:$true] %s187
      %193 = dma.hbm_to_vmem [thread:$0]  %s19, 64, %s188, [#allocation21], 16, 16, 1
    $region81: #{tpu_custom_call.1} parent=1 // pred_fallthru
      _
    // Predicated region
    $region82: #{tpu_custom_call.1} parent=1 // pred_check
      _
    $region83: #{tpu_custom_call.1} parent=1 // pred_check_branch
      %195 = sbr.rel (0) target = $region85
    $region84: #{tpu_custom_call.1} parent=1 // pred_region
      %s197 = ssub.s32 64, 64
      %198 = vsyncadd [#allocation21], %s197
      %s199 = sshll.u32 [#allocation22], 4
      %s200 = int_to_ptr.vmem [resolvable:$true] %s199
      %205 = dma.hbm_to_vmem [thread:$0]  %s20, 64, %s200, [#allocation21], 16, 16, 1
    $region85: #{tpu_custom_call.1} parent=1 // pred_fallthru
      _
    // Predicated region
    $region86: #{tpu_custom_call.1} parent=1 // pred_check
      _
    $region87: #{tpu_custom_call.1} parent=1 // pred_check_branch
      %207 = sbr.rel (0) target = $region89
    $region88: #{tpu_custom_call.1} parent=1 // pred_region
      _
    $region89: #{tpu_custom_call.1} parent=1 // pred_fallthru
      _
    // Predicated region
    $region90: #{tpu_custom_call.1} parent=1 // pred_check
      _
    $region91: #{tpu_custom_call.1} parent=1 // pred_check_branch
      %209 = sbr.rel (0) target = $region93
    $region92: #{tpu_custom_call.1} parent=1 // pred_region
      _
    $region93: #{tpu_custom_call.1} parent=1 // pred_fallthru
      _
    // Predicated region
    $region94: #{tpu_custom_call.1} parent=1 // pred_check
      _
    $region95: #{tpu_custom_call.1} parent=1 // pred_check_branch
      %211 = sbr.rel (0) target = $region97
    $region96: #{tpu_custom_call.1} parent=1 // pred_region
      _
    $region97: #{tpu_custom_call.1} parent=1 // pred_fallthru
      _
    // Predicated region
    $region98: #{tpu_custom_call.1} parent=1 // pred_check
      _
    $region99: #{tpu_custom_call.1} parent=1 // pred_check_branch
      %213 = sbr.rel (0) target = $region101
    $region100: #{tpu_custom_call.1} parent=1 // pred_region
      _
    $region101: #{tpu_custom_call.1} parent=1 // pred_fallthru
      _
    // Predicated region
    $region102: #{tpu_custom_call.1} parent=1 // pred_check
      _
    $region103: #{tpu_custom_call.1} parent=1 // pred_check_branch
      %215 = sbr.rel (0) target = $region105
    $region104: #{tpu_custom_call.1} parent=1 // pred_region
      _
    $region105: #{tpu_custom_call.1} parent=1 // pred_fallthru
      _
    // Predicated region
    $region106: #{tpu_custom_call.1} parent=1 // pred_check
      _
    $region107: #{tpu_custom_call.1} parent=1 // pred_check_branch
      %217 = sbr.rel (0) target = $region109
    $region108: #{tpu_custom_call.1} parent=1 // pred_region
      _
    $region109: #{tpu_custom_call.1} parent=1 // pred_fallthru
      _
    // Predicated region
    $region110: #{tpu_custom_call.1} parent=1 // pred_check
      _
    $region111: #{tpu_custom_call.1} parent=1 // pred_check_branch
      %219 = sbr.rel (0) target = $region113
    $region112: #{tpu_custom_call.1} parent=1 // pred_region
      %220 = dma.done [#allocation3], 64
    $region113: #{tpu_custom_call.1} parent=1 // pred_fallthru
      _
    // Predicated region
    $region114: #{tpu_custom_call.1} parent=1 // pred_check
      _
    $region115: #{tpu_custom_call.1} parent=1 // pred_check_branch
      %222 = sbr.rel (0) target = $region117
    $region116: #{tpu_custom_call.1} parent=1 // pred_region
      %223 = dma.done [#allocation6], 64
    $region117: #{tpu_custom_call.1} parent=1 // pred_fallthru
      _
    // Predicated region
    $region118: #{tpu_custom_call.1} parent=1 // pred_check
      _
    $region119: #{tpu_custom_call.1} parent=1 // pred_check_branch
      %225 = sbr.rel (0) target = $region121
    $region120: #{tpu_custom_call.1} parent=1 // pred_region
      %226 = dma.done [#allocation6], 128
    $region121: #{tpu_custom_call.1} parent=1 // pred_fallthru
      _
    // Predicated region
    $region122: #{tpu_custom_call.1} parent=1 // pred_check
      _
    $region123: #{tpu_custom_call.1} parent=1 // pred_check_branch
      %228 = sbr.rel (0) target = $region125
    $region124: #{tpu_custom_call.1} parent=1 // pred_region
      %229 = dma.done [#allocation9], 64
    $region125: #{tpu_custom_call.1} parent=1 // pred_fallthru
      _
    // Predicated region
    $region126: #{tpu_custom_call.1} parent=1 // pred_check
      _
    $region127: #{tpu_custom_call.1} parent=1 // pred_check_branch
      %231 = sbr.rel (0) target = $region129
    $region128: #{tpu_custom_call.1} parent=1 // pred_region
      %232 = dma.done [#allocation9], 64
    $region129: #{tpu_custom_call.1} parent=1 // pred_fallthru
      _
    // Predicated region
    $region130: #{tpu_custom_call.1} parent=1 // pred_check
      _
    $region131: #{tpu_custom_call.1} parent=1 // pred_check_branch
      %234 = sbr.rel (0) target = $region133
    $region132: #{tpu_custom_call.1} parent=1 // pred_region
      %235 = dma.done [#allocation12], 64
    $region133: #{tpu_custom_call.1} parent=1 // pred_fallthru
      _
    // Predicated region
    $region134: #{tpu_custom_call.1} parent=1 // pred_check
      _
    $region135: #{tpu_custom_call.1} parent=1 // pred_check_branch
      %237 = sbr.rel (0) target = $region137
    $region136: #{tpu_custom_call.1} parent=1 // pred_region
      %238 = dma.done [#allocation12], 64
    $region137: #{tpu_custom_call.1} parent=1 // pred_fallthru
      _
    // Predicated region
    $region138: #{tpu_custom_call.1} parent=1 // pred_check
      _
    $region139: #{tpu_custom_call.1} parent=1 // pred_check_branch
      %240 = sbr.rel (0) target = $region141
    $region140: #{tpu_custom_call.1} parent=1 // pred_region
      %241 = dma.done [#allocation15], 64
    $region141: #{tpu_custom_call.1} parent=1 // pred_fallthru
      _
    // Predicated region
    $region142: #{tpu_custom_call.1} parent=1 // pred_check
      _
    $region143: #{tpu_custom_call.1} parent=1 // pred_check_branch
      %243 = sbr.rel (0) target = $region145
    $region144: #{tpu_custom_call.1} parent=1 // pred_region
      %244 = dma.done [#allocation15], 64
    $region145: #{tpu_custom_call.1} parent=1 // pred_fallthru
      _
    // Predicated region
    $region146: #{tpu_custom_call.1} parent=1 // pred_check
      _
    $region147: #{tpu_custom_call.1} parent=1 // pred_check_branch
      %246 = sbr.rel (0) target = $region149
    $region148: #{tpu_custom_call.1} parent=1 // pred_region
      %247 = dma.done [#allocation18], 64
    $region149: #{tpu_custom_call.1} parent=1 // pred_fallthru
      _
    // Predicated region
    $region150: #{tpu_custom_call.1} parent=1 // pred_check
      _
    $region151: #{tpu_custom_call.1} parent=1 // pred_check_branch
      %249 = sbr.rel (0) target = $region153
    $region152: #{tpu_custom_call.1} parent=1 // pred_region
      %250 = dma.done [#allocation18], 64
    $region153: #{tpu_custom_call.1} parent=1 // pred_fallthru
      _
    // Predicated region
    $region154: #{tpu_custom_call.1} parent=1 // pred_check
      _
    $region155: #{tpu_custom_call.1} parent=1 // pred_check_branch
      %252 = sbr.rel (0) target = $region157
    $region156: #{tpu_custom_call.1} parent=1 // pred_region
      %253 = dma.done [#allocation21], 64
    $region157: #{tpu_custom_call.1} parent=1 // pred_fallthru
      _
    // Predicated region
    $region158: #{tpu_custom_call.1} parent=1 // pred_check
      _
    $region159: #{tpu_custom_call.1} parent=1 // pred_check_branch
      %255 = sbr.rel (0) target = $region161
    $region160: #{tpu_custom_call.1} parent=1 // pred_region
      %256 = dma.done [#allocation21], 64
    $region161: #{tpu_custom_call.1} parent=1 // pred_fallthru
      _
    %v258 = vld [vmem:[%s25] sm:$0xff]
    %v259 = vld [vmem:[%s25 + $0x8] sm:$0xff]
    %v260 = vld [vmem:[%s25 + $0x10] sm:$0xff]
    %v261 = vld [vmem:[%s25 + $0x18] sm:$0xff]
    %v262 = vld [vmem:[%s26] sm:$0xff]
    %v263 = vld [vmem:[#allocation2] sm:$0xf]
    %v264 = vld [vmem:[%s2] sm:$0xf]
    %v265 = vld [vmem:[%s2 + $0x4] sm:$0xf]
    %v266 = vld [vmem:[%s2 + $0x8] sm:$0xf]
    %v267 = vld [vmem:[%s2 + $0xc] sm:$0xf]
    %v268 = vld [vmem:[%s2 + $0x10] sm:$0xf]
    %v269 = vld [vmem:[%s2 + $0x14] sm:$0xf]
    %v270 = vld [vmem:[%s2 + $0x18] sm:$0xf]
    %v271 = vld [vmem:[%s2 + $0x1c] sm:$0xf]
    %v272 = vpack.c.bf16 %v263, %v263
    %v281 = vunpack.c.l.b16 %v264
    %v282 = vunpack.c.l.b16 %v265
    %v283 = vunpack.c.l.b16 %v266
    %v284 = vunpack.c.l.b16 %v267
    %v285 = vunpack.c.l.b16 %v268
    %v286 = vunpack.c.l.b16 %v269
    %v287 = vunpack.c.l.b16 %v270
    %v288 = vunpack.c.l.b16 %v271
    %v289 = vpack.c.b16 %v282, %v281
    %v290 = vpack.c.b16 %v284, %v283
    %v291 = vpack.c.b16 %v286, %v285
    %v292 = vpack.c.b16 %v288, %v287
    %vm297 = vcmask 523264
    %v299 = vsel %vm297, %v272, 0
    %301 = vmatprep.subr.bf16.mxu0 0
    %302 = vmatpush1.bf16.msra.mxu0 %v289
    %303 = vmatprep.subr.bf16.mxu0 0
    %304 = vmatpush1.bf16.msra.mxu0 %v290
    %305 = vmatprep.subr.bf16.mxu0 0
    %306 = vmatpush1.bf16.msra.mxu0 %v291
    %307 = vmatprep.subr.bf16.mxu0 0
    %308 = vmatpush1.bf16.msra.mxu0 %v292
    %309 = vmatprep.subr.bf16.mxu0 0
    %310 = vmatpush1.bf16.msra.mxu0 0
    %311 = vmatprep.subr.bf16.mxu0 0
    %312 = vmatpush1.bf16.msra.mxu0 0
    %313 = vmatprep.subr.bf16.mxu0 0
    %314 = vmatpush1.bf16.msra.mxu0 0
    %315 = vmatprep.subr.bf16.mxu0 0
    %316 = vmatpush1.bf16.msra.mxu0 0
    %317 = vmatprep.subr.bf16.mxu0 0
    %318 = vmatpush1.bf16.msra.mxu0 0
    %319 = vmatprep.subr.bf16.mxu0 0
    %320 = vmatpush1.bf16.msra.mxu0 0
    %321 = vmatprep.subr.bf16.mxu0 0
    %322 = vmatpush1.bf16.msra.mxu0 0
    %323 = vmatprep.subr.bf16.mxu0 0
    %324 = vmatpush1.bf16.msra.mxu0 0
    %325 = vmatprep.subr.bf16.mxu0 0
    %326 = vmatpush1.bf16.msra.mxu0 0
    %327 = vmatprep.subr.bf16.mxu0 0
    %328 = vmatpush1.bf16.msra.mxu0 0
    %329 = vmatprep.subr.bf16.mxu0 0
    %330 = vmatpush1.bf16.msra.mxu0 0
    %331 = vmatprep.subr.bf16.mxu0 0
    %332 = vmatpush1.bf16.msra.mxu0 0
    %333 = vmatprep.mubr.bf16.mxu0 0
    %334 = vmatmul.mubr.bf16.gmra.mrb[0].mxu0 %v299
    %v335 = vpop.f32.mrb[0].mxu0
    %v336 = vadd.f32 0.0, %v335
    %v337 = vpop.f32.mrb[0].mxu0
    %v338 = vpop.f32.mrb[0].mxu0
    %v339 = vpop.f32.mrb[0].mxu0
    %340 = vdwg.mxu0
    %v341 = vld [vmem:[#allocation5] sm:$0xf]
    %v342 = vld [vmem:[%s3] sm:$0xf]
    %v343 = vld [vmem:[%s3 + $0x4] sm:$0xf]
    %v344 = vld [vmem:[%s3 + $0x8] sm:$0xf]
    %v345 = vld [vmem:[%s3 + $0xc] sm:$0xf]
    %v346 = vld [vmem:[%s3 + $0x10] sm:$0xf]
    %v347 = vld [vmem:[%s3 + $0x14] sm:$0xf]
    %v348 = vpack.c.bf16 %v341, %v341
    %v355 = vunpack.c.l.b16 %v342
    %v356 = vunpack.c.l.b16 %v343
    %v357 = vunpack.c.l.b16 %v344
    %v358 = vunpack.c.l.b16 %v345
    %v359 = vunpack.c.l.b16 %v346
    %v360 = vunpack.c.l.b16 %v347
    %v361 = vpack.c.b16 %v356, %v355
    %v362 = vpack.c.b16 %v358, %v357
    %v363 = vpack.c.b16 %v360, %v359
    %vm367 = vcmask 392192
    %v369 = vsel %vm367, %v348, 0
    %371 = vmatprep.subr.bf16.mxu0 0
    %372 = vmatpush1.bf16.msra.mxu0 %v361
    %373 = vmatprep.subr.bf16.mxu0 0
    %374 = vmatpush1.bf16.msra.mxu0 %v362
    %375 = vmatprep.subr.bf16.mxu0 0
    %376 = vmatpush1.bf16.msra.mxu0 %v363
    %377 = vmatprep.subr.bf16.mxu0 0
    %378 = vmatpush1.bf16.msra.mxu0 0
    %379 = vmatprep.subr.bf16.mxu0 0
    %380 = vmatpush1.bf16.msra.mxu0 0
    %381 = vmatprep.subr.bf16.mxu0 0
    %382 = vmatpush1.bf16.msra.mxu0 0
    %383 = vmatprep.subr.bf16.mxu0 0
    %384 = vmatpush1.bf16.msra.mxu0 0
    %385 = vmatprep.subr.bf16.mxu0 0
    %386 = vmatpush1.bf16.msra.mxu0 0
    %387 = vmatprep.subr.bf16.mxu0 0
    %388 = vmatpush1.bf16.msra.mxu0 0
    %389 = vmatprep.subr.bf16.mxu0 0
    %390 = vmatpush1.bf16.msra.mxu0 0
    %391 = vmatprep.subr.bf16.mxu0 0
    %392 = vmatpush1.bf16.msra.mxu0 0
    %393 = vmatprep.subr.bf16.mxu0 0
    %394 = vmatpush1.bf16.msra.mxu0 0
    %395 = vmatprep.subr.bf16.mxu0 0
    %396 = vmatpush1.bf16.msra.mxu0 0
    %397 = vmatprep.subr.bf16.mxu0 0
    %398 = vmatpush1.bf16.msra.mxu0 0
    %399 = vmatprep.subr.bf16.mxu0 0
    %400 = vmatpush1.bf16.msra.mxu0 0
    %401 = vmatprep.subr.bf16.mxu0 0
    %402 = vmatpush1.bf16.msra.mxu0 0
    %403 = vmatprep.mubr.bf16.mxu0 0
    %404 = vmatmul.mubr.bf16.gmra.mrb[0].mxu0 %v369
    %v405 = vpop.f32.mrb[0].mxu0
    %v406 = vadd.f32 0.0, %v405
    %v407 = vpop.f32.mrb[0].mxu0
    %v408 = vpop.f32.mrb[0].mxu0
    %v409 = vpop.f32.mrb[0].mxu0
    %410 = vdwg.mxu0
    %v412 = vrot.slane %v406, 4
    %vm414 = vcmask 1043456
    %v415 = vsel %vm414, %v336, %v412
    %v416 = vld [vmem:[#allocation7] sm:$0xff]
    %v417 = vadd.f32 %v415, %v416
    %v418 = vpack.c.bf16 %v417, %v417
    %v419 = vld [vmem:[%s5] sm:$0xf]
    %v420 = vld [vmem:[%s5 + $0x4] sm:$0xf]
    %v421 = vld [vmem:[%s5 + $0x8] sm:$0xf]
    %v422 = vld [vmem:[%s5 + $0xc] sm:$0xf]
    %v423 = vld [vmem:[#allocation8] sm:$0x1]
    %v425 = vlaneseq
    %v426 = vshrl.u32 %v425, 7
    %v427 = vsub.s32 0, %v426
    %v428 = vrot.slane %v423, %v427
    %v434 = vunpack.c.l.b16 %v419
    %v435 = vunpack.c.l.b16 %v420
    %v436 = vunpack.c.l.b16 %v421
    %v437 = vunpack.c.l.b16 %v422
    %v438 = vpack.c.b16 %v435, %v434
    %v439 = vpack.c.b16 %v437, %v436
    %vm442 = vcmask 261120
    %v444 = vsel %vm442, %v418, 0
    %446 = vmatprep.subr.bf16.mxu0 0
    %447 = vmatpush1.bf16.msra.mxu0 %v438
    %448 = vmatprep.subr.bf16.mxu0 0
    %449 = vmatpush1.bf16.msra.mxu0 %v439
    %450 = vmatprep.subr.bf16.mxu0 0
    %451 = vmatpush1.bf16.msra.mxu0 0
    %452 = vmatprep.subr.bf16.mxu0 0
    %453 = vmatpush1.bf16.msra.mxu0 0
    %454 = vmatprep.subr.bf16.mxu0 0
    %455 = vmatpush1.bf16.msra.mxu0 0
    %456 = vmatprep.subr.bf16.mxu0 0
    %457 = vmatpush1.bf16.msra.mxu0 0
    %458 = vmatprep.subr.bf16.mxu0 0
    %459 = vmatpush1.bf16.msra.mxu0 0
    %460 = vmatprep.subr.bf16.mxu0 0
    %461 = vmatpush1.bf16.msra.mxu0 0
    %462 = vmatprep.subr.bf16.mxu0 0
    %463 = vmatpush1.bf16.msra.mxu0 0
    %464 = vmatprep.subr.bf16.mxu0 0
    %465 = vmatpush1.bf16.msra.mxu0 0
    %466 = vmatprep.subr.bf16.mxu0 0
    %467 = vmatpush1.bf16.msra.mxu0 0
    %468 = vmatprep.subr.bf16.mxu0 0
    %469 = vmatpush1.bf16.msra.mxu0 0
    %470 = vmatprep.subr.bf16.mxu0 0
    %471 = vmatpush1.bf16.msra.mxu0 0
    %472 = vmatprep.subr.bf16.mxu0 0
    %473 = vmatpush1.bf16.msra.mxu0 0
    %474 = vmatprep.subr.bf16.mxu0 0
    %475 = vmatpush1.bf16.msra.mxu0 0
    %476 = vmatprep.subr.bf16.mxu0 0
    %477 = vmatpush1.bf16.msra.mxu0 0
    %478 = vmatprep.mubr.bf16.mxu0 0
    %479 = vmatmul.mubr.bf16.gmra.mrb[0].mxu0 %v444
    %v480 = vpop.f32.mrb[0].mxu0
    %v481 = vadd.f32 %v428, %v480
    %v482 = vpop.f32.mrb[0].mxu0
    %v483 = vpop.f32.mrb[0].mxu0
    %v484 = vpop.f32.mrb[0].mxu0
    %485 = vdwg.mxu0
    %v486 = vld [vmem:[%s6] sm:$0xf]
    %v487 = vld [vmem:[%s6 + $0x4] sm:$0xf]
    %v488 = vld [vmem:[%s6 + $0x8] sm:$0xf]
    %v489 = vld [vmem:[%s6 + $0xc] sm:$0xf]
    %v490 = vld [vmem:[#allocation10] sm:$0x1]
    %v492 = vlaneseq
    %v493 = vshrl.u32 %v492, 7
    %v494 = vsub.s32 0, %v493
    %v495 = vrot.slane %v490, %v494
    %v501 = vunpack.c.l.b16 %v486
    %v502 = vunpack.c.l.b16 %v487
    %v503 = vunpack.c.l.b16 %v488
    %v504 = vunpack.c.l.b16 %v489
    %v505 = vpack.c.b16 %v502, %v501
    %v506 = vpack.c.b16 %v504, %v503
    %509 = vmatprep.subr.bf16.mxu0 0
    %510 = vmatpush1.bf16.msra.mxu0 %v505
    %511 = vmatprep.subr.bf16.mxu0 0
    %512 = vmatpush1.bf16.msra.mxu0 %v506
    %513 = vmatprep.subr.bf16.mxu0 0
    %514 = vmatpush1.bf16.msra.mxu0 0
    %515 = vmatprep.subr.bf16.mxu0 0
    %516 = vmatpush1.bf16.msra.mxu0 0
    %517 = vmatprep.subr.bf16.mxu0 0
    %518 = vmatpush1.bf16.msra.mxu0 0
    %519 = vmatprep.subr.bf16.mxu0 0
    %520 = vmatpush1.bf16.msra.mxu0 0
    %521 = vmatprep.subr.bf16.mxu0 0
    %522 = vmatpush1.bf16.msra.mxu0 0
    %523 = vmatprep.subr.bf16.mxu0 0
    %524 = vmatpush1.bf16.msra.mxu0 0
    %525 = vmatprep.subr.bf16.mxu0 0
    %526 = vmatpush1.bf16.msra.mxu0 0
    %527 = vmatprep.subr.bf16.mxu0 0
    %528 = vmatpush1.bf16.msra.mxu0 0
    %529 = vmatprep.subr.bf16.mxu0 0
    %530 = vmatpush1.bf16.msra.mxu0 0
    %531 = vmatprep.subr.bf16.mxu0 0
    %532 = vmatpush1.bf16.msra.mxu0 0
    %533 = vmatprep.subr.bf16.mxu0 0
    %534 = vmatpush1.bf16.msra.mxu0 0
    %535 = vmatprep.subr.bf16.mxu0 0
    %536 = vmatpush1.bf16.msra.mxu0 0
    %537 = vmatprep.subr.bf16.mxu0 0
    %538 = vmatpush1.bf16.msra.mxu0 0
    %539 = vmatprep.subr.bf16.mxu0 0
    %540 = vmatpush1.bf16.msra.mxu0 0
    %541 = vmatprep.mubr.bf16.mxu0 0
    %542 = vmatmul.mubr.bf16.gmra.mrb[0].mxu0 %v444
    %v543 = vpop.f32.mrb[0].mxu0
    %v544 = vadd.f32 %v495, %v543
    %v545 = vpop.f32.mrb[0].mxu0
    %v546 = vpop.f32.mrb[0].mxu0
    %v547 = vpop.f32.mrb[0].mxu0
    %548 = vdwg.mxu0
    %v549 = vld [vmem:[%s7] sm:$0xf]
    %v550 = vld [vmem:[%s7 + $0x4] sm:$0xf]
    %v551 = vld [vmem:[%s7 + $0x8] sm:$0xf]
    %v552 = vld [vmem:[%s7 + $0xc] sm:$0xf]
    %v553 = vld [vmem:[#allocation11] sm:$0x1]
    %v555 = vlaneseq
    %v556 = vshrl.u32 %v555, 7
    %v557 = vsub.s32 0, %v556
    %v558 = vrot.slane %v553, %v557
    %v564 = vunpack.c.l.b16 %v549
    %v565 = vunpack.c.l.b16 %v550
    %v566 = vunpack.c.l.b16 %v551
    %v567 = vunpack.c.l.b16 %v552
    %v568 = vpack.c.b16 %v565, %v564
    %v569 = vpack.c.b16 %v567, %v566
    %572 = vmatprep.subr.bf16.mxu0 0
    %573 = vmatpush1.bf16.msra.mxu0 %v568
    %574 = vmatprep.subr.bf16.mxu0 0
    %575 = vmatpush1.bf16.msra.mxu0 %v569
    %576 = vmatprep.subr.bf16.mxu0 0
    %577 = vmatpush1.bf16.msra.mxu0 0
    %578 = vmatprep.subr.bf16.mxu0 0
    %579 = vmatpush1.bf16.msra.mxu0 0
    %580 = vmatprep.subr.bf16.mxu0 0
    %581 = vmatpush1.bf16.msra.mxu0 0
    %582 = vmatprep.subr.bf16.mxu0 0
    %583 = vmatpush1.bf16.msra.mxu0 0
    %584 = vmatprep.subr.bf16.mxu0 0
    %585 = vmatpush1.bf16.msra.mxu0 0
    %586 = vmatprep.subr.bf16.mxu0 0
    %587 = vmatpush1.bf16.msra.mxu0 0
    %588 = vmatprep.subr.bf16.mxu0 0
    %589 = vmatpush1.bf16.msra.mxu0 0
    %590 = vmatprep.subr.bf16.mxu0 0
    %591 = vmatpush1.bf16.msra.mxu0 0
    %592 = vmatprep.subr.bf16.mxu0 0
    %593 = vmatpush1.bf16.msra.mxu0 0
    %594 = vmatprep.subr.bf16.mxu0 0
    %595 = vmatpush1.bf16.msra.mxu0 0
    %596 = vmatprep.subr.bf16.mxu0 0
    %597 = vmatpush1.bf16.msra.mxu0 0
    %598 = vmatprep.subr.bf16.mxu0 0
    %599 = vmatpush1.bf16.msra.mxu0 0
    %600 = vmatprep.subr.bf16.mxu0 0
    %601 = vmatpush1.bf16.msra.mxu0 0
    %602 = vmatprep.subr.bf16.mxu0 0
    %603 = vmatpush1.bf16.msra.mxu0 0
    %604 = vmatprep.mubr.bf16.mxu0 0
    %605 = vmatmul.mubr.bf16.gmra.mrb[0].mxu0 %v444
    %v606 = vpop.f32.mrb[0].mxu0
    %v607 = vadd.f32 %v558, %v606
    %v608 = vpop.f32.mrb[0].mxu0
    %v609 = vpop.f32.mrb[0].mxu0
    %v610 = vpop.f32.mrb[0].mxu0
    %611 = vdwg.mxu0
    %v613 = vrot.slane %v544, 4
    %v615 = vsel %vm414, %v613, %v613
    %v617 = vrot.slane %v607, 4
    %v619 = vsel %vm414, %v617, %v617
    %v620 = vmul.f32 %v481, %v544
    %v621 = vmul.f32 %v481, %v615
    %v623 = vsel %vm442, %v620, 0
    %v626 = vsel %vm442, %v621, 0
    %628 = vmatprep.subr.mxu0 0.0
    %629 = vmatpush1.msra.mxu0 %v258
    %630 = vmatprep.subr.mxu0 0.0
    %631 = vmatpush1.msra.mxu0 %v259
    %632 = vmatprep.subr.mxu0 0.0
    %633 = vmatpush1.msra.mxu0 %v260
    %634 = vmatprep.subr.mxu0 0.0
    %635 = vmatpush1.msra.mxu0 %v261
    %636 = vmatprep.subr.mxu0 0.0
    %637 = vmatpush1.msra.mxu0 0.0
    %638 = vmatprep.subr.mxu0 0.0
    %639 = vmatpush1.msra.mxu0 0.0
    %640 = vmatprep.subr.mxu0 0.0
    %641 = vmatpush1.msra.mxu0 0.0
    %642 = vmatprep.subr.mxu0 0.0
    %643 = vmatpush1.msra.mxu0 0.0
    %644 = vmatprep.subr.mxu0 0.0
    %645 = vmatpush1.msra.mxu0 0.0
    %646 = vmatprep.subr.mxu0 0.0
    %647 = vmatpush1.msra.mxu0 0.0
    %648 = vmatprep.subr.mxu0 0.0
    %649 = vmatpush1.msra.mxu0 0.0
    %650 = vmatprep.subr.mxu0 0.0
    %651 = vmatpush1.msra.mxu0 0.0
    %652 = vmatprep.subr.mxu0 0.0
    %653 = vmatpush1.msra.mxu0 0.0
    %654 = vmatprep.subr.mxu0 0.0
    %655 = vmatpush1.msra.mxu0 0.0
    %656 = vmatprep.subr.mxu0 0.0
    %657 = vmatpush1.msra.mxu0 0.0
    %658 = vmatprep.subr.mxu0 0.0
    %659 = vmatpush1.msra.mxu0 0.0
    %660 = vmatprep.subr.mxu0 0.0
    %661 = vmatpush1.msra.mxu0 0.0
    %662 = vmatprep.subr.mxu0 0.0
    %663 = vmatpush1.msra.mxu0 0.0
    %664 = vmatprep.subr.mxu0 0.0
    %665 = vmatpush1.msra.mxu0 0.0
    %666 = vmatprep.subr.mxu0 0.0
    %667 = vmatpush1.msra.mxu0 0.0
    %668 = vmatprep.subr.mxu0 0.0
    %669 = vmatpush1.msra.mxu0 0.0
    %670 = vmatprep.subr.mxu0 0.0
    %671 = vmatpush1.msra.mxu0 0.0
    %672 = vmatprep.subr.mxu0 0.0
    %673 = vmatpush1.msra.mxu0 0.0
    %674 = vmatprep.subr.mxu0 0.0
    %675 = vmatpush1.msra.mxu0 0.0
    %676 = vmatprep.subr.mxu0 0.0
    %677 = vmatpush1.msra.mxu0 0.0
    %678 = vmatprep.subr.mxu0 0.0
    %679 = vmatpush1.msra.mxu0 0.0
    %680 = vmatprep.subr.mxu0 0.0
    %681 = vmatpush1.msra.mxu0 0.0
    %682 = vmatprep.subr.mxu0 0.0
    %683 = vmatpush1.msra.mxu0 0.0
    %684 = vmatprep.subr.mxu0 0.0
    %685 = vmatpush1.msra.mxu0 0.0
    %686 = vmatprep.subr.mxu0 0.0
    %687 = vmatpush1.msra.mxu0 0.0
    %688 = vmatprep.subr.mxu0 0.0
    %689 = vmatpush1.msra.mxu0 0.0
    %690 = vmatprep.subr.mxu0 0.0
    %691 = vmatpush1.msra.mxu0 0.0
    %692 = vmatprep.mubr.f32.mxu0 0.0
    %693 = vmatmul.mubr.f32.gmra.mrb[0].mxu0 %v623
    %v694 = vpop.f32.mrb[0].mxu0
    %v695 = vadd.f32 0.0, %v694
    %v696 = vpop.f32.mrb[0].mxu0
    %697 = vmatprep.mubr.f32.mxu0 0.0
    %698 = vmatmul.mubr.f32.gmra.mrb[0].mxu0 %v626
    %v699 = vpop.f32.mrb[0].mxu0
    %v700 = vadd.f32 0.0, %v699
    %v701 = vpop.f32.mrb[0].mxu0
    %702 = vdwg.mxu0
    %v703 = vmul.f32 %v695, 0.5
    %v704 = vmul.f32 %v700, 0.5
    %v705 = vmax.f32 %v703, %v704
    %v706 = vsub.f32 %v703, %v705
    %v707 = vmul.f32 %v706, 1.442695
    %v708 = vpow.pop %v707
    %v709 = vsub.f32 %v704, %v705
    %v710 = vmul.f32 %v709, 1.442695
    %v711 = vpow.pop %v710
    %v712 = vadd.f32 %v708, %v711
    %v713 = vrcp.pop %v712
    %v714 = vmul.f32 %v708, %v713
    %v715 = vmul.f32 %v711, %v713
    %vm716 = vcmask 64512
    %v718 = vsel %vm716, %v714, 0
    %v721 = vsel %vm716, %v715, 0
    %723 = vmatprep.subr.mxu0 0.0
    %724 = vmatpush1.msra.mxu0 %v262
    %725 = vmatprep.subr.mxu0 0.0
    %726 = vmatpush1.msra.mxu0 0.0
    %727 = vmatprep.subr.mxu0 0.0
    %728 = vmatpush1.msra.mxu0 0.0
    %729 = vmatprep.subr.mxu0 0.0
    %730 = vmatpush1.msra.mxu0 0.0
    %731 = vmatprep.subr.mxu0 0.0
    %732 = vmatpush1.msra.mxu0 0.0
    %733 = vmatprep.subr.mxu0 0.0
    %734 = vmatpush1.msra.mxu0 0.0
    %735 = vmatprep.subr.mxu0 0.0
    %736 = vmatpush1.msra.mxu0 0.0
    %737 = vmatprep.subr.mxu0 0.0
    %738 = vmatpush1.msra.mxu0 0.0
    %739 = vmatprep.subr.mxu0 0.0
    %740 = vmatpush1.msra.mxu0 0.0
    %741 = vmatprep.subr.mxu0 0.0
    %742 = vmatpush1.msra.mxu0 0.0
    %743 = vmatprep.subr.mxu0 0.0
    %744 = vmatpush1.msra.mxu0 0.0
    %745 = vmatprep.subr.mxu0 0.0
    %746 = vmatpush1.msra.mxu0 0.0
    %747 = vmatprep.subr.mxu0 0.0
    %748 = vmatpush1.msra.mxu0 0.0
    %749 = vmatprep.subr.mxu0 0.0
    %750 = vmatpush1.msra.mxu0 0.0
    %751 = vmatprep.subr.mxu0 0.0
    %752 = vmatpush1.msra.mxu0 0.0
    %753 = vmatprep.subr.mxu0 0.0
    %754 = vmatpush1.msra.mxu0 0.0
    %755 = vmatprep.subr.mxu0 0.0
    %756 = vmatpush1.msra.mxu0 0.0
    %757 = vmatprep.subr.mxu0 0.0
    %758 = vmatpush1.msra.mxu0 0.0
    %759 = vmatprep.subr.mxu0 0.0
    %760 = vmatpush1.msra.mxu0 0.0
    %761 = vmatprep.subr.mxu0 0.0
    %762 = vmatpush1.msra.mxu0 0.0
    %763 = vmatprep.subr.mxu0 0.0
    %764 = vmatpush1.msra.mxu0 0.0
    %765 = vmatprep.subr.mxu0 0.0
    %766 = vmatpush1.msra.mxu0 0.0
    %767 = vmatprep.subr.mxu0 0.0
    %768 = vmatpush1.msra.mxu0 0.0
    %769 = vmatprep.subr.mxu0 0.0
    %770 = vmatpush1.msra.mxu0 0.0
    %771 = vmatprep.subr.mxu0 0.0
    %772 = vmatpush1.msra.mxu0 0.0
    %773 = vmatprep.subr.mxu0 0.0
    %774 = vmatpush1.msra.mxu0 0.0
    %775 = vmatprep.subr.mxu0 0.0
    %776 = vmatpush1.msra.mxu0 0.0
    %777 = vmatprep.subr.mxu0 0.0
    %778 = vmatpush1.msra.mxu0 0.0
    %779 = vmatprep.subr.mxu0 0.0
    %780 = vmatpush1.msra.mxu0 0.0
    %781 = vmatprep.subr.mxu0 0.0
    %782 = vmatpush1.msra.mxu0 0.0
    %783 = vmatprep.subr.mxu0 0.0
    %784 = vmatpush1.msra.mxu0 0.0
    %785 = vmatprep.subr.mxu0 0.0
    %786 = vmatpush1.msra.mxu0 0.0
    %787 = vmatprep.mubr.f32.mxu0 0.0
    %788 = vmatmul.mubr.f32.gmra.mrb[0].mxu0 %v718
    %v789 = vpop.f32.mrb[0].mxu0
    %v790 = vadd.f32 0.0, %v789
    %v791 = vpop.f32.mrb[0].mxu0
    %792 = vmatprep.mubr.f32.mxu0 0.0
    %793 = vmatmul.mubr.f32.gmra.mrb[0].mxu0 %v721
    %v794 = vpop.f32.mrb[0].mxu0
    %v795 = vadd.f32 0.0, %v794
    %v796 = vpop.f32.mrb[0].mxu0
    %797 = vdwg.mxu0
    %v798 = vmul.f32 %v790, %v607
    %v799 = vmul.f32 %v795, %v619
    %v800 = vadd.f32 %v798, %v799
    %v801 = vld [vmem:[%s11] sm:$0xf]
    %v802 = vld [vmem:[%s11 + $0x4] sm:$0xf]
    %v803 = vld [vmem:[%s11 + $0x8] sm:$0xf]
    %v804 = vld [vmem:[%s11 + $0xc] sm:$0xf]
    %v805 = vpack.c.bf16 %v800, %v800
    %v806 = vld [vmem:[#allocation13] sm:$0x1]
    %v808 = vlaneseq
    %v809 = vshrl.u32 %v808, 7
    %v810 = vsub.s32 0, %v809
    %v811 = vrot.slane %v806, %v810
    %v817 = vunpack.c.l.b16 %v801
    %v818 = vunpack.c.l.b16 %v802
    %v819 = vunpack.c.l.b16 %v803
    %v820 = vunpack.c.l.b16 %v804
    %v821 = vpack.c.b16 %v818, %v817
    %v822 = vpack.c.b16 %v820, %v819
    %v826 = vsel %vm442, %v805, 0
    %828 = vmatprep.subr.bf16.mxu0 0
    %829 = vmatpush1.bf16.msra.mxu0 %v821
    %830 = vmatprep.subr.bf16.mxu0 0
    %831 = vmatpush1.bf16.msra.mxu0 %v822
    %832 = vmatprep.subr.bf16.mxu0 0
    %833 = vmatpush1.bf16.msra.mxu0 0
    %834 = vmatprep.subr.bf16.mxu0 0
    %835 = vmatpush1.bf16.msra.mxu0 0
    %836 = vmatprep.subr.bf16.mxu0 0
    %837 = vmatpush1.bf16.msra.mxu0 0
    %838 = vmatprep.subr.bf16.mxu0 0
    %839 = vmatpush1.bf16.msra.mxu0 0
    %840 = vmatprep.subr.bf16.mxu0 0
    %841 = vmatpush1.bf16.msra.mxu0 0
    %842 = vmatprep.subr.bf16.mxu0 0
    %843 = vmatpush1.bf16.msra.mxu0 0
    %844 = vmatprep.subr.bf16.mxu0 0
    %845 = vmatpush1.bf16.msra.mxu0 0
    %846 = vmatprep.subr.bf16.mxu0 0
    %847 = vmatpush1.bf16.msra.mxu0 0
    %848 = vmatprep.subr.bf16.mxu0 0
    %849 = vmatpush1.bf16.msra.mxu0 0
    %850 = vmatprep.subr.bf16.mxu0 0
    %851 = vmatpush1.bf16.msra.mxu0 0
    %852 = vmatprep.subr.bf16.mxu0 0
    %853 = vmatpush1.bf16.msra.mxu0 0
    %854 = vmatprep.subr.bf16.mxu0 0
    %855 = vmatpush1.bf16.msra.mxu0 0
    %856 = vmatprep.subr.bf16.mxu0 0
    %857 = vmatpush1.bf16.msra.mxu0 0
    %858 = vmatprep.subr.bf16.mxu0 0
    %859 = vmatpush1.bf16.msra.mxu0 0
    %860 = vmatprep.mubr.bf16.mxu0 0
    %861 = vmatmul.mubr.bf16.gmra.mrb[0].mxu0 %v826
    %v862 = vpop.f32.mrb[0].mxu0
    %v863 = vadd.f32 %v811, %v862
    %v864 = vpop.f32.mrb[0].mxu0
    %v865 = vpop.f32.mrb[0].mxu0
    %v866 = vpop.f32.mrb[0].mxu0
    %867 = vdwg.mxu0
    %v868 = vadd.f32 %v417, %v863
    %v869 = vld [vmem:[#allocation14] sm:$0x1]
    %v870 = vld [vmem:[#allocation16] sm:$0x1]
    %v871 = vsel %vm442, %v868, 0.0
    %872 = vadd.xlane.f32.xlu0 %v871
    %v873 = vpop.xlane.xlu0 %872
    %v874 = vrcp.pop 32.0
    %v875 = vmul.f32 %v873, %v874
    %v876 = vsub.f32 %v868, %v875
    %v877 = vmul.f32 %v876, %v876
    %v878 = vsel %vm442, %v877, 0.0
    %879 = vadd.xlane.f32.xlu0 %v878
    %v880 = vpop.xlane.xlu0 %879
    %v881 = vmul.f32 %v880, %v874
    %v882 = vadd.f32 %v881, 1e-05
    %v883 = vrsqrt.pop %v882
    %v884 = vmul.f32 %v876, %v883
    %v886 = vlaneseq
    %v887 = vshrl.u32 %v886, 7
    %v888 = vsub.s32 0, %v887
    %v889 = vrot.slane %v869, %v888
    %v891 = vmul.f32 %v884, %v889
    %v893 = vlaneseq
    %v894 = vshrl.u32 %v893, 7
    %v895 = vsub.s32 0, %v894
    %v896 = vrot.slane %v870, %v895
    %v898 = vadd.f32 %v891, %v896
    %v899 = vld [vmem:[%s15] sm:$0xf]
    %v900 = vld [vmem:[%s15 + $0x4] sm:$0xf]
    %v901 = vld [vmem:[%s15 + $0x8] sm:$0xf]
    %v902 = vld [vmem:[%s15 + $0xc] sm:$0xf]
    %v903 = vpack.c.bf16 %v898, %v898
    %v904 = vld [vmem:[#allocation17] sm:$0x1]
    %v906 = vlaneseq
    %v907 = vshrl.u32 %v906, 7
    %v908 = vsub.s32 0, %v907
    %v909 = vrot.slane %v904, %v908
    %v915 = vunpack.c.l.b16 %v899
    %v916 = vunpack.c.l.b16 %v900
    %v917 = vunpack.c.l.b16 %v901
    %v918 = vunpack.c.l.b16 %v902
    %v919 = vpack.c.b16 %v916, %v915
    %v920 = vpack.c.b16 %v918, %v917
    %v924 = vsel %vm442, %v903, 0
    %926 = vmatprep.subr.bf16.mxu0 0
    %927 = vmatpush1.bf16.msra.mxu0 %v919
    %928 = vmatprep.subr.bf16.mxu0 0
    %929 = vmatpush1.bf16.msra.mxu0 %v920
    %930 = vmatprep.subr.bf16.mxu0 0
    %931 = vmatpush1.bf16.msra.mxu0 0
    %932 = vmatprep.subr.bf16.mxu0 0
    %933 = vmatpush1.bf16.msra.mxu0 0
    %934 = vmatprep.subr.bf16.mxu0 0
    %935 = vmatpush1.bf16.msra.mxu0 0
    %936 = vmatprep.subr.bf16.mxu0 0
    %937 = vmatpush1.bf16.msra.mxu0 0
    %938 = vmatprep.subr.bf16.mxu0 0
    %939 = vmatpush1.bf16.msra.mxu0 0
    %940 = vmatprep.subr.bf16.mxu0 0
    %941 = vmatpush1.bf16.msra.mxu0 0
    %942 = vmatprep.subr.bf16.mxu0 0
    %943 = vmatpush1.bf16.msra.mxu0 0
    %944 = vmatprep.subr.bf16.mxu0 0
    %945 = vmatpush1.bf16.msra.mxu0 0
    %946 = vmatprep.subr.bf16.mxu0 0
    %947 = vmatpush1.bf16.msra.mxu0 0
    %948 = vmatprep.subr.bf16.mxu0 0
    %949 = vmatpush1.bf16.msra.mxu0 0
    %950 = vmatprep.subr.bf16.mxu0 0
    %951 = vmatpush1.bf16.msra.mxu0 0
    %952 = vmatprep.subr.bf16.mxu0 0
    %953 = vmatpush1.bf16.msra.mxu0 0
    %954 = vmatprep.subr.bf16.mxu0 0
    %955 = vmatpush1.bf16.msra.mxu0 0
    %956 = vmatprep.subr.bf16.mxu0 0
    %957 = vmatpush1.bf16.msra.mxu0 0
    %958 = vmatprep.mubr.bf16.mxu0 0
    %959 = vmatmul.mubr.bf16.gmra.mrb[0].mxu0 %v924
    %v960 = vpop.f32.mrb[0].mxu0
    %v961 = vadd.f32 %v909, %v960
    %v962 = vpop.f32.mrb[0].mxu0
    %v963 = vpop.f32.mrb[0].mxu0
    %v964 = vpop.f32.mrb[0].mxu0
    %965 = vdwg.mxu0
    %v966 = vmax.f32 %v961, 0.0
    %v967 = vld [vmem:[%s17] sm:$0xf]
    %v968 = vld [vmem:[%s17 + $0x4] sm:$0xf]
    %v969 = vld [vmem:[%s17 + $0x8] sm:$0xf]
    %v970 = vld [vmem:[%s17 + $0xc] sm:$0xf]
    %v971 = vld [vmem:[%s17 + $0x10] sm:$0xf]
    %v972 = vld [vmem:[%s17 + $0x14] sm:$0xf]
    %v973 = vld [vmem:[%s17 + $0x18] sm:$0xf]
    %v974 = vld [vmem:[%s17 + $0x1c] sm:$0xf]
    %v975 = vpack.c.bf16 %v966, %v966
    %v976 = vld [vmem:[#allocation19] sm:$0x1]
    %v978 = vlaneseq
    %v979 = vshrl.u32 %v978, 7
    %v980 = vsub.s32 0, %v979
    %v981 = vrot.slane %v976, %v980
    %v991 = vunpack.c.l.b16 %v967
    %v992 = vunpack.c.l.b16 %v968
    %v993 = vunpack.c.l.b16 %v969
    %v994 = vunpack.c.l.b16 %v970
    %v995 = vunpack.c.l.b16 %v971
    %v996 = vunpack.c.l.b16 %v972
    %v997 = vunpack.c.l.b16 %v973
    %v998 = vunpack.c.l.b16 %v974
    %v999 = vpack.c.b16 %v992, %v991
    %v1000 = vpack.c.b16 %v994, %v993
    %v1001 = vpack.c.b16 %v996, %v995
    %v1002 = vpack.c.b16 %v998, %v997
    %v1008 = vsel %vm297, %v975, 0
    %1010 = vmatprep.subr.bf16.mxu0 0
    %1011 = vmatpush1.bf16.msra.mxu0 %v999
    %1012 = vmatprep.subr.bf16.mxu0 0
    %1013 = vmatpush1.bf16.msra.mxu0 %v1000
    %1014 = vmatprep.subr.bf16.mxu0 0
    %1015 = vmatpush1.bf16.msra.mxu0 %v1001
    %1016 = vmatprep.subr.bf16.mxu0 0
    %1017 = vmatpush1.bf16.msra.mxu0 %v1002
    %1018 = vmatprep.subr.bf16.mxu0 0
    %1019 = vmatpush1.bf16.msra.mxu0 0
    %1020 = vmatprep.subr.bf16.mxu0 0
    %1021 = vmatpush1.bf16.msra.mxu0 0
    %1022 = vmatprep.subr.bf16.mxu0 0
    %1023 = vmatpush1.bf16.msra.mxu0 0
    %1024 = vmatprep.subr.bf16.mxu0 0
    %1025 = vmatpush1.bf16.msra.mxu0 0
    %1026 = vmatprep.subr.bf16.mxu0 0
    %1027 = vmatpush1.bf16.msra.mxu0 0
    %1028 = vmatprep.subr.bf16.mxu0 0
    %1029 = vmatpush1.bf16.msra.mxu0 0
    %1030 = vmatprep.subr.bf16.mxu0 0
    %1031 = vmatpush1.bf16.msra.mxu0 0
    %1032 = vmatprep.subr.bf16.mxu0 0
    %1033 = vmatpush1.bf16.msra.mxu0 0
    %1034 = vmatprep.subr.bf16.mxu0 0
    %1035 = vmatpush1.bf16.msra.mxu0 0
    %1036 = vmatprep.subr.bf16.mxu0 0
    %1037 = vmatpush1.bf16.msra.mxu0 0
    %1038 = vmatprep.subr.bf16.mxu0 0
    %1039 = vmatpush1.bf16.msra.mxu0 0
    %1040 = vmatprep.subr.bf16.mxu0 0
    %1041 = vmatpush1.bf16.msra.mxu0 0
    %1042 = vmatprep.mubr.bf16.mxu0 0
    %1043 = vmatmul.mubr.bf16.gmra.mrb[0].mxu0 %v1008
    %v1044 = vpop.f32.mrb[0].mxu0
    %v1045 = vadd.f32 %v981, %v1044
    %v1046 = vpop.f32.mrb[0].mxu0
    %v1047 = vpop.f32.mrb[0].mxu0
    %v1048 = vpop.f32.mrb[0].mxu0
    %1049 = vdwg.mxu0
    %v1050 = vadd.f32 %v898, %v1045
    %v1051 = vld [vmem:[#allocation20] sm:$0x1]
    %v1052 = vld [vmem:[#allocation22] sm:$0x1]
    %v1053 = vsel %vm442, %v1050, 0.0
    %1054 = vadd.xlane.f32.xlu0 %v1053
    %v1055 = vpop.xlane.xlu0 %1054
    %v1056 = vmul.f32 %v1055, %v874
    %v1057 = vsub.f32 %v1050, %v1056
    %v1058 = vmul.f32 %v1057, %v1057
    %v1059 = vsel %vm442, %v1058, 0.0
    %1060 = vadd.xlane.f32.xlu0 %v1059
    %v1061 = vpop.xlane.xlu0 %1060
    %v1062 = vmul.f32 %v1061, %v874
    %v1063 = vadd.f32 %v1062, 1e-05
    %v1064 = vrsqrt.pop %v1063
    %v1065 = vmul.f32 %v1057, %v1064
    %v1067 = vlaneseq
    %v1068 = vshrl.u32 %v1067, 7
    %v1069 = vsub.s32 0, %v1068
    %v1070 = vrot.slane %v1051, %v1069
    %v1072 = vmul.f32 %v1065, %v1070
    %v1074 = vlaneseq
    %v1075 = vshrl.u32 %v1074, 7
    %v1076 = vsub.s32 0, %v1075
    %v1077 = vrot.slane %v1052, %v1076
    %v1079 = vadd.f32 %v1072, %v1077
    %v1080 = vpack.c.bf16 %v1079, %v1079
    %s1081 = scalar_lea.vmem %s5, 16
    %v1082 = vld [vmem:[%s1081] sm:$0xf]
    %v1083 = vld [vmem:[%s1081 + $0x4] sm:$0xf]
    %v1084 = vld [vmem:[%s1081 + $0x8] sm:$0xf]
    %v1085 = vld [vmem:[%s1081 + $0xc] sm:$0xf]
    %s1086 = scalar_lea.vmem [#allocation8], 1
    %v1087 = vld [vmem:[%s1086] sm:$0x1]
    %v1089 = vlaneseq
    %v1090 = vshrl.u32 %v1089, 7
    %v1091 = vsub.s32 0, %v1090
    %v1092 = vrot.slane %v1087, %v1091
    %v1098 = vunpack.c.l.b16 %v1082
    %v1099 = vunpack.c.l.b16 %v1083
    %v1100 = vunpack.c.l.b16 %v1084
    %v1101 = vunpack.c.l.b16 %v1085
    %v1102 = vpack.c.b16 %v1099, %v1098
    %v1103 = vpack.c.b16 %v1101, %v1100
    %v1107 = vsel %vm442, %v1080, 0
    %1109 = vmatprep.subr.bf16.mxu0 0
    %1110 = vmatpush1.bf16.msra.mxu0 %v1102
    %1111 = vmatprep.subr.bf16.mxu0 0
    %1112 = vmatpush1.bf16.msra.mxu0 %v1103
    %1113 = vmatprep.subr.bf16.mxu0 0
    %1114 = vmatpush1.bf16.msra.mxu0 0
    %1115 = vmatprep.subr.bf16.mxu0 0
    %1116 = vmatpush1.bf16.msra.mxu0 0
    %1117 = vmatprep.subr.bf16.mxu0 0
    %1118 = vmatpush1.bf16.msra.mxu0 0
    %1119 = vmatprep.subr.bf16.mxu0 0
    %1120 = vmatpush1.bf16.msra.mxu0 0
    %1121 = vmatprep.subr.bf16.mxu0 0
    %1122 = vmatpush1.bf16.msra.mxu0 0
    %1123 = vmatprep.subr.bf16.mxu0 0
    %1124 = vmatpush1.bf16.msra.mxu0 0
    %1125 = vmatprep.subr.bf16.mxu0 0
    %1126 = vmatpush1.bf16.msra.mxu0 0
    %1127 = vmatprep.subr.bf16.mxu0 0
    %1128 = vmatpush1.bf16.msra.mxu0 0
    %1129 = vmatprep.subr.bf16.mxu0 0
    %1130 = vmatpush1.bf16.msra.mxu0 0
    %1131 = vmatprep.subr.bf16.mxu0 0
    %1132 = vmatpush1.bf16.msra.mxu0 0
    %1133 = vmatprep.subr.bf16.mxu0 0
    %1134 = vmatpush1.bf16.msra.mxu0 0
    %1135 = vmatprep.subr.bf16.mxu0 0
    %1136 = vmatpush1.bf16.msra.mxu0 0
    %1137 = vmatprep.subr.bf16.mxu0 0
    %1138 = vmatpush1.bf16.msra.mxu0 0
    %1139 = vmatprep.subr.bf16.mxu0 0
    %1140 = vmatpush1.bf16.msra.mxu0 0
    %1141 = vmatprep.mubr.bf16.mxu0 0
    %1142 = vmatmul.mubr.bf16.gmra.mrb[0].mxu0 %v1107
    %v1143 = vpop.f32.mrb[0].mxu0
    %v1144 = vadd.f32 %v1092, %v1143
    %v1145 = vpop.f32.mrb[0].mxu0
    %v1146 = vpop.f32.mrb[0].mxu0
    %v1147 = vpop.f32.mrb[0].mxu0
    %1148 = vdwg.mxu0
    %s1149 = scalar_lea.vmem %s6, 16
    %v1150 = vld [vmem:[%s1149] sm:$0xf]
    %v1151 = vld [vmem:[%s1149 + $0x4] sm:$0xf]
    %v1152 = vld [vmem:[%s1149 + $0x8] sm:$0xf]
    %v1153 = vld [vmem:[%s1149 + $0xc] sm:$0xf]
    %s1154 = scalar_lea.vmem [#allocation10], 1
    %v1155 = vld [vmem:[%s1154] sm:$0x1]
    %v1157 = vlaneseq
    %v1158 = vshrl.u32 %v1157, 7
    %v1159 = vsub.s32 0, %v1158
    %v1160 = vrot.slane %v1155, %v1159
    %v1166 = vunpack.c.l.b16 %v1150
    %v1167 = vunpack.c.l.b16 %v1151
    %v1168 = vunpack.c.l.b16 %v1152
    %v1169 = vunpack.c.l.b16 %v1153
    %v1170 = vpack.c.b16 %v1167, %v1166
    %v1171 = vpack.c.b16 %v1169, %v1168
    %1174 = vmatprep.subr.bf16.mxu0 0
    %1175 = vmatpush1.bf16.msra.mxu0 %v1170
    %1176 = vmatprep.subr.bf16.mxu0 0
    %1177 = vmatpush1.bf16.msra.mxu0 %v1171
    %1178 = vmatprep.subr.bf16.mxu0 0
    %1179 = vmatpush1.bf16.msra.mxu0 0
    %1180 = vmatprep.subr.bf16.mxu0 0
    %1181 = vmatpush1.bf16.msra.mxu0 0
    %1182 = vmatprep.subr.bf16.mxu0 0
    %1183 = vmatpush1.bf16.msra.mxu0 0
    %1184 = vmatprep.subr.bf16.mxu0 0
    %1185 = vmatpush1.bf16.msra.mxu0 0
    %1186 = vmatprep.subr.bf16.mxu0 0
    %1187 = vmatpush1.bf16.msra.mxu0 0
    %1188 = vmatprep.subr.bf16.mxu0 0
    %1189 = vmatpush1.bf16.msra.mxu0 0
    %1190 = vmatprep.subr.bf16.mxu0 0
    %1191 = vmatpush1.bf16.msra.mxu0 0
    %1192 = vmatprep.subr.bf16.mxu0 0
    %1193 = vmatpush1.bf16.msra.mxu0 0
    %1194 = vmatprep.subr.bf16.mxu0 0
    %1195 = vmatpush1.bf16.msra.mxu0 0
    %1196 = vmatprep.subr.bf16.mxu0 0
    %1197 = vmatpush1.bf16.msra.mxu0 0
    %1198 = vmatprep.subr.bf16.mxu0 0
    %1199 = vmatpush1.bf16.msra.mxu0 0
    %1200 = vmatprep.subr.bf16.mxu0 0
    %1201 = vmatpush1.bf16.msra.mxu0 0
    %1202 = vmatprep.subr.bf16.mxu0 0
    %1203 = vmatpush1.bf16.msra.mxu0 0
    %1204 = vmatprep.subr.bf16.mxu0 0
    %1205 = vmatpush1.bf16.msra.mxu0 0
    %1206 = vmatprep.mubr.bf16.mxu0 0
    %1207 = vmatmul.mubr.bf16.gmra.mrb[0].mxu0 %v1107
    %v1208 = vpop.f32.mrb[0].mxu0
    %v1209 = vadd.f32 %v1160, %v1208
    %v1210 = vpop.f32.mrb[0].mxu0
    %v1211 = vpop.f32.mrb[0].mxu0
    %v1212 = vpop.f32.mrb[0].mxu0
    %1213 = vdwg.mxu0
    %s1214 = scalar_lea.vmem %s7, 16
    %v1215 = vld [vmem:[%s1214] sm:$0xf]
    %v1216 = vld [vmem:[%s1214 + $0x4] sm:$0xf]
    %v1217 = vld [vmem:[%s1214 + $0x8] sm:$0xf]
    %v1218 = vld [vmem:[%s1214 + $0xc] sm:$0xf]
    %s1219 = scalar_lea.vmem [#allocation11], 1
    %v1220 = vld [vmem:[%s1219] sm:$0x1]
    %v1222 = vlaneseq
    %v1223 = vshrl.u32 %v1222, 7
    %v1224 = vsub.s32 0, %v1223
    %v1225 = vrot.slane %v1220, %v1224
    %v1231 = vunpack.c.l.b16 %v1215
    %v1232 = vunpack.c.l.b16 %v1216
    %v1233 = vunpack.c.l.b16 %v1217
    %v1234 = vunpack.c.l.b16 %v1218
    %v1235 = vpack.c.b16 %v1232, %v1231
    %v1236 = vpack.c.b16 %v1234, %v1233
    %1239 = vmatprep.subr.bf16.mxu0 0
    %1240 = vmatpush1.bf16.msra.mxu0 %v1235
    %1241 = vmatprep.subr.bf16.mxu0 0
    %1242 = vmatpush1.bf16.msra.mxu0 %v1236
    %1243 = vmatprep.subr.bf16.mxu0 0
    %1244 = vmatpush1.bf16.msra.mxu0 0
    %1245 = vmatprep.subr.bf16.mxu0 0
    %1246 = vmatpush1.bf16.msra.mxu0 0
    %1247 = vmatprep.subr.bf16.mxu0 0
    %1248 = vmatpush1.bf16.msra.mxu0 0
    %1249 = vmatprep.subr.bf16.mxu0 0
    %1250 = vmatpush1.bf16.msra.mxu0 0
    %1251 = vmatprep.subr.bf16.mxu0 0
    %1252 = vmatpush1.bf16.msra.mxu0 0
    %1253 = vmatprep.subr.bf16.mxu0 0
    %1254 = vmatpush1.bf16.msra.mxu0 0
    %1255 = vmatprep.subr.bf16.mxu0 0
    %1256 = vmatpush1.bf16.msra.mxu0 0
    %1257 = vmatprep.subr.bf16.mxu0 0
    %1258 = vmatpush1.bf16.msra.mxu0 0
    %1259 = vmatprep.subr.bf16.mxu0 0
    %1260 = vmatpush1.bf16.msra.mxu0 0
    %1261 = vmatprep.subr.bf16.mxu0 0
    %1262 = vmatpush1.bf16.msra.mxu0 0
    %1263 = vmatprep.subr.bf16.mxu0 0
    %1264 = vmatpush1.bf16.msra.mxu0 0
    %1265 = vmatprep.subr.bf16.mxu0 0
    %1266 = vmatpush1.bf16.msra.mxu0 0
    %1267 = vmatprep.subr.bf16.mxu0 0
    %1268 = vmatpush1.bf16.msra.mxu0 0
    %1269 = vmatprep.subr.bf16.mxu0 0
    %1270 = vmatpush1.bf16.msra.mxu0 0
    %1271 = vmatprep.mubr.bf16.mxu0 0
    %1272 = vmatmul.mubr.bf16.gmra.mrb[0].mxu0 %v1107
    %v1273 = vpop.f32.mrb[0].mxu0
    %v1274 = vadd.f32 %v1225, %v1273
    %v1275 = vpop.f32.mrb[0].mxu0
    %v1276 = vpop.f32.mrb[0].mxu0
    %v1277 = vpop.f32.mrb[0].mxu0
    %1278 = vdwg.mxu0
    %v1280 = vrot.slane %v1209, 4
    %v1282 = vsel %vm414, %v1280, %v1280
    %v1284 = vrot.slane %v1274, 4
    %v1286 = vsel %vm414, %v1284, %v1284
    %v1287 = vmul.f32 %v1144, %v1209
    %v1288 = vmul.f32 %v1144, %v1282
    %v1290 = vsel %vm442, %v1287, 0
    %v1293 = vsel %vm442, %v1288, 0
    %1295 = vmatprep.subr.mxu0 0.0
    %1296 = vmatpush1.msra.mxu0 %v258
    %1297 = vmatprep.subr.mxu0 0.0
    %1298 = vmatpush1.msra.mxu0 %v259
    %1299 = vmatprep.subr.mxu0 0.0
    %1300 = vmatpush1.msra.mxu0 %v260
    %1301 = vmatprep.subr.mxu0 0.0
    %1302 = vmatpush1.msra.mxu0 %v261
    %1303 = vmatprep.subr.mxu0 0.0
    %1304 = vmatpush1.msra.mxu0 0.0
    %1305 = vmatprep.subr.mxu0 0.0
    %1306 = vmatpush1.msra.mxu0 0.0
    %1307 = vmatprep.subr.mxu0 0.0
    %1308 = vmatpush1.msra.mxu0 0.0
    %1309 = vmatprep.subr.mxu0 0.0
    %1310 = vmatpush1.msra.mxu0 0.0
    %1311 = vmatprep.subr.mxu0 0.0
    %1312 = vmatpush1.msra.mxu0 0.0
    %1313 = vmatprep.subr.mxu0 0.0
    %1314 = vmatpush1.msra.mxu0 0.0
    %1315 = vmatprep.subr.mxu0 0.0
    %1316 = vmatpush1.msra.mxu0 0.0
    %1317 = vmatprep.subr.mxu0 0.0
    %1318 = vmatpush1.msra.mxu0 0.0
    %1319 = vmatprep.subr.mxu0 0.0
    %1320 = vmatpush1.msra.mxu0 0.0
    %1321 = vmatprep.subr.mxu0 0.0
    %1322 = vmatpush1.msra.mxu0 0.0
    %1323 = vmatprep.subr.mxu0 0.0
    %1324 = vmatpush1.msra.mxu0 0.0
    %1325 = vmatprep.subr.mxu0 0.0
    %1326 = vmatpush1.msra.mxu0 0.0
    %1327 = vmatprep.subr.mxu0 0.0
    %1328 = vmatpush1.msra.mxu0 0.0
    %1329 = vmatprep.subr.mxu0 0.0
    %1330 = vmatpush1.msra.mxu0 0.0
    %1331 = vmatprep.subr.mxu0 0.0
    %1332 = vmatpush1.msra.mxu0 0.0
    %1333 = vmatprep.subr.mxu0 0.0
    %1334 = vmatpush1.msra.mxu0 0.0
    %1335 = vmatprep.subr.mxu0 0.0
    %1336 = vmatpush1.msra.mxu0 0.0
    %1337 = vmatprep.subr.mxu0 0.0
    %1338 = vmatpush1.msra.mxu0 0.0
    %1339 = vmatprep.subr.mxu0 0.0
    %1340 = vmatpush1.msra.mxu0 0.0
    %1341 = vmatprep.subr.mxu0 0.0
    %1342 = vmatpush1.msra.mxu0 0.0
    %1343 = vmatprep.subr.mxu0 0.0
    %1344 = vmatpush1.msra.mxu0 0.0
    %1345 = vmatprep.subr.mxu0 0.0
    %1346 = vmatpush1.msra.mxu0 0.0
    %1347 = vmatprep.subr.mxu0 0.0
    %1348 = vmatpush1.msra.mxu0 0.0
    %1349 = vmatprep.subr.mxu0 0.0
    %1350 = vmatpush1.msra.mxu0 0.0
    %1351 = vmatprep.subr.mxu0 0.0
    %1352 = vmatpush1.msra.mxu0 0.0
    %1353 = vmatprep.subr.mxu0 0.0
    %1354 = vmatpush1.msra.mxu0 0.0
    %1355 = vmatprep.subr.mxu0 0.0
    %1356 = vmatpush1.msra.mxu0 0.0
    %1357 = vmatprep.subr.mxu0 0.0
    %1358 = vmatpush1.msra.mxu0 0.0
    %1359 = vmatprep.mubr.f32.mxu0 0.0
    %1360 = vmatmul.mubr.f32.gmra.mrb[0].mxu0 %v1290
    %v1361 = vpop.f32.mrb[0].mxu0
    %v1362 = vadd.f32 0.0, %v1361
    %v1363 = vpop.f32.mrb[0].mxu0
    %1364 = vmatprep.mubr.f32.mxu0 0.0
    %1365 = vmatmul.mubr.f32.gmra.mrb[0].mxu0 %v1293
    %v1366 = vpop.f32.mrb[0].mxu0
    %v1367 = vadd.f32 0.0, %v1366
    %v1368 = vpop.f32.mrb[0].mxu0
    %1369 = vdwg.mxu0
    %v1370 = vmul.f32 %v1362, 0.5
    %v1371 = vmul.f32 %v1367, 0.5
    %v1372 = vmax.f32 %v1370, %v1371
    %v1373 = vsub.f32 %v1370, %v1372
    %v1374 = vmul.f32 %v1373, 1.442695
    %v1375 = vpow.pop %v1374
    %v1376 = vsub.f32 %v1371, %v1372
    %v1377 = vmul.f32 %v1376, 1.442695
    %v1378 = vpow.pop %v1377
    %v1379 = vadd.f32 %v1375, %v1378
    %v1380 = vrcp.pop %v1379
    %v1381 = vmul.f32 %v1375, %v1380
    %v1382 = vmul.f32 %v1378, %v1380
    %v1384 = vsel %vm716, %v1381, 0
    %v1387 = vsel %vm716, %v1382, 0
    %1389 = vmatprep.subr.mxu0 0.0
    %1390 = vmatpush1.msra.mxu0 %v262
    %1391 = vmatprep.subr.mxu0 0.0
    %1392 = vmatpush1.msra.mxu0 0.0
    %1393 = vmatprep.subr.mxu0 0.0
    %1394 = vmatpush1.msra.mxu0 0.0
    %1395 = vmatprep.subr.mxu0 0.0
    %1396 = vmatpush1.msra.mxu0 0.0
    %1397 = vmatprep.subr.mxu0 0.0
    %1398 = vmatpush1.msra.mxu0 0.0
    %1399 = vmatprep.subr.mxu0 0.0
    %1400 = vmatpush1.msra.mxu0 0.0
    %1401 = vmatprep.subr.mxu0 0.0
    %1402 = vmatpush1.msra.mxu0 0.0
    %1403 = vmatprep.subr.mxu0 0.0
    %1404 = vmatpush1.msra.mxu0 0.0
    %1405 = vmatprep.subr.mxu0 0.0
    %1406 = vmatpush1.msra.mxu0 0.0
    %1407 = vmatprep.subr.mxu0 0.0
    %1408 = vmatpush1.msra.mxu0 0.0
    %1409 = vmatprep.subr.mxu0 0.0
    %1410 = vmatpush1.msra.mxu0 0.0
    %1411 = vmatprep.subr.mxu0 0.0
    %1412 = vmatpush1.msra.mxu0 0.0
    %1413 = vmatprep.subr.mxu0 0.0
    %1414 = vmatpush1.msra.mxu0 0.0
    %1415 = vmatprep.subr.mxu0 0.0
    %1416 = vmatpush1.msra.mxu0 0.0
    %1417 = vmatprep.subr.mxu0 0.0
    %1418 = vmatpush1.msra.mxu0 0.0
    %1419 = vmatprep.subr.mxu0 0.0
    %1420 = vmatpush1.msra.mxu0 0.0
    %1421 = vmatprep.subr.mxu0 0.0
    %1422 = vmatpush1.msra.mxu0 0.0
    %1423 = vmatprep.subr.mxu0 0.0
    %1424 = vmatpush1.msra.mxu0 0.0
    %1425 = vmatprep.subr.mxu0 0.0
    %1426 = vmatpush1.msra.mxu0 0.0
    %1427 = vmatprep.subr.mxu0 0.0
    %1428 = vmatpush1.msra.mxu0 0.0
    %1429 = vmatprep.subr.mxu0 0.0
    %1430 = vmatpush1.msra.mxu0 0.0
    %1431 = vmatprep.subr.mxu0 0.0
    %1432 = vmatpush1.msra.mxu0 0.0
    %1433 = vmatprep.subr.mxu0 0.0
    %1434 = vmatpush1.msra.mxu0 0.0
    %1435 = vmatprep.subr.mxu0 0.0
    %1436 = vmatpush1.msra.mxu0 0.0
    %1437 = vmatprep.subr.mxu0 0.0
    %1438 = vmatpush1.msra.mxu0 0.0
    %1439 = vmatprep.subr.mxu0 0.0
    %1440 = vmatpush1.msra.mxu0 0.0
    %1441 = vmatprep.subr.mxu0 0.0
    %1442 = vmatpush1.msra.mxu0 0.0
    %1443 = vmatprep.subr.mxu0 0.0
    %1444 = vmatpush1.msra.mxu0 0.0
    %1445 = vmatprep.subr.mxu0 0.0
    %1446 = vmatpush1.msra.mxu0 0.0
    %1447 = vmatprep.subr.mxu0 0.0
    %1448 = vmatpush1.msra.mxu0 0.0
    %1449 = vmatprep.subr.mxu0 0.0
    %1450 = vmatpush1.msra.mxu0 0.0
    %1451 = vmatprep.subr.mxu0 0.0
    %1452 = vmatpush1.msra.mxu0 0.0
    %1453 = vmatprep.mubr.f32.mxu0 0.0
    %1454 = vmatmul.mubr.f32.gmra.mrb[0].mxu0 %v1384
    %v1455 = vpop.f32.mrb[0].mxu0
    %v1456 = vadd.f32 0.0, %v1455
    %v1457 = vpop.f32.mrb[0].mxu0
    %1458 = vmatprep.mubr.f32.mxu0 0.0
    %1459 = vmatmul.mubr.f32.gmra.mrb[0].mxu0 %v1387
    %v1460 = vpop.f32.mrb[0].mxu0
    %v1461 = vadd.f32 0.0, %v1460
    %v1462 = vpop.f32.mrb[0].mxu0
    %1463 = vdwg.mxu0
    %v1464 = vmul.f32 %v1456, %v1274
    %v1465 = vmul.f32 %v1461, %v1286
    %v1466 = vadd.f32 %v1464, %v1465
    %s1467 = scalar_lea.vmem %s11, 16
    %v1468 = vld [vmem:[%s1467] sm:$0xf]
    %v1469 = vld [vmem:[%s1467 + $0x4] sm:$0xf]
    %v1470 = vld [vmem:[%s1467 + $0x8] sm:$0xf]
    %v1471 = vld [vmem:[%s1467 + $0xc] sm:$0xf]
    %v1472 = vpack.c.bf16 %v1466, %v1466
    %s1473 = scalar_lea.vmem [#allocation13], 1
    %v1474 = vld [vmem:[%s1473] sm:$0x1]
    %v1476 = vlaneseq
    %v1477 = vshrl.u32 %v1476, 7
    %v1478 = vsub.s32 0, %v1477
    %v1479 = vrot.slane %v1474, %v1478
    %v1485 = vunpack.c.l.b16 %v1468
    %v1486 = vunpack.c.l.b16 %v1469
    %v1487 = vunpack.c.l.b16 %v1470
    %v1488 = vunpack.c.l.b16 %v1471
    %v1489 = vpack.c.b16 %v1486, %v1485
    %v1490 = vpack.c.b16 %v1488, %v1487
    %v1494 = vsel %vm442, %v1472, 0
    %1496 = vmatprep.subr.bf16.mxu0 0
    %1497 = vmatpush1.bf16.msra.mxu0 %v1489
    %1498 = vmatprep.subr.bf16.mxu0 0
    %1499 = vmatpush1.bf16.msra.mxu0 %v1490
    %1500 = vmatprep.subr.bf16.mxu0 0
    %1501 = vmatpush1.bf16.msra.mxu0 0
    %1502 = vmatprep.subr.bf16.mxu0 0
    %1503 = vmatpush1.bf16.msra.mxu0 0
    %1504 = vmatprep.subr.bf16.mxu0 0
    %1505 = vmatpush1.bf16.msra.mxu0 0
    %1506 = vmatprep.subr.bf16.mxu0 0
    %1507 = vmatpush1.bf16.msra.mxu0 0
    %1508 = vmatprep.subr.bf16.mxu0 0
    %1509 = vmatpush1.bf16.msra.mxu0 0
    %1510 = vmatprep.subr.bf16.mxu0 0
    %1511 = vmatpush1.bf16.msra.mxu0 0
    %1512 = vmatprep.subr.bf16.mxu0 0
    %1513 = vmatpush1.bf16.msra.mxu0 0
    %1514 = vmatprep.subr.bf16.mxu0 0
    %1515 = vmatpush1.bf16.msra.mxu0 0
    %1516 = vmatprep.subr.bf16.mxu0 0
    %1517 = vmatpush1.bf16.msra.mxu0 0
    %1518 = vmatprep.subr.bf16.mxu0 0
    %1519 = vmatpush1.bf16.msra.mxu0 0
    %1520 = vmatprep.subr.bf16.mxu0 0
    %1521 = vmatpush1.bf16.msra.mxu0 0
    %1522 = vmatprep.subr.bf16.mxu0 0
    %1523 = vmatpush1.bf16.msra.mxu0 0
    %1524 = vmatprep.subr.bf16.mxu0 0
    %1525 = vmatpush1.bf16.msra.mxu0 0
    %1526 = vmatprep.subr.bf16.mxu0 0
    %1527 = vmatpush1.bf16.msra.mxu0 0
    %1528 = vmatprep.mubr.bf16.mxu0 0
    %1529 = vmatmul.mubr.bf16.gmra.mrb[0].mxu0 %v1494
    %v1530 = vpop.f32.mrb[0].mxu0
    %v1531 = vadd.f32 %v1479, %v1530
    %v1532 = vpop.f32.mrb[0].mxu0
    %v1533 = vpop.f32.mrb[0].mxu0
    %v1534 = vpop.f32.mrb[0].mxu0
    %1535 = vdwg.mxu0
    %v1536 = vadd.f32 %v1079, %v1531
    %s1537 = scalar_lea.vmem [#allocation14], 1
    %v1538 = vld [vmem:[%s1537] sm:$0x1]
    %s1539 = scalar_lea.vmem [#allocation16], 1
    %v1540 = vld [vmem:[%s1539] sm:$0x1]
    %v1541 = vsel %vm442, %v1536, 0.0
    %1542 = vadd.xlane.f32.xlu0 %v1541
    %v1543 = vpop.xlane.xlu0 %1542
    %v1544 = vmul.f32 %v1543, %v874
    %v1545 = vsub.f32 %v1536, %v1544
    %v1546 = vmul.f32 %v1545, %v1545
    %v1547 = vsel %vm442, %v1546, 0.0
    %1548 = vadd.xlane.f32.xlu0 %v1547
    %v1549 = vpop.xlane.xlu0 %1548
    %v1550 = vmul.f32 %v1549, %v874
    %v1551 = vadd.f32 %v1550, 1e-05
    %v1552 = vrsqrt.pop %v1551
    %v1553 = vmul.f32 %v1545, %v1552
    %v1555 = vlaneseq
    %v1556 = vshrl.u32 %v1555, 7
    %v1557 = vsub.s32 0, %v1556
    %v1558 = vrot.slane %v1538, %v1557
    %v1560 = vmul.f32 %v1553, %v1558
    %v1562 = vlaneseq
    %v1563 = vshrl.u32 %v1562, 7
    %v1564 = vsub.s32 0, %v1563
    %v1565 = vrot.slane %v1540, %v1564
    %v1567 = vadd.f32 %v1560, %v1565
    %s1568 = scalar_lea.vmem %s15, 16
    %v1569 = vld [vmem:[%s1568] sm:$0xf]
    %v1570 = vld [vmem:[%s1568 + $0x4] sm:$0xf]
    %v1571 = vld [vmem:[%s1568 + $0x8] sm:$0xf]
    %v1572 = vld [vmem:[%s1568 + $0xc] sm:$0xf]
    %v1573 = vpack.c.bf16 %v1567, %v1567
    %s1574 = scalar_lea.vmem [#allocation17], 1
    %v1575 = vld [vmem:[%s1574] sm:$0x1]
    %v1577 = vlaneseq
    %v1578 = vshrl.u32 %v1577, 7
    %v1579 = vsub.s32 0, %v1578
    %v1580 = vrot.slane %v1575, %v1579
    %v1586 = vunpack.c.l.b16 %v1569
    %v1587 = vunpack.c.l.b16 %v1570
    %v1588 = vunpack.c.l.b16 %v1571
    %v1589 = vunpack.c.l.b16 %v1572
    %v1590 = vpack.c.b16 %v1587, %v1586
    %v1591 = vpack.c.b16 %v1589, %v1588
    %v1595 = vsel %vm442, %v1573, 0
    %1597 = vmatprep.subr.bf16.mxu0 0
    %1598 = vmatpush1.bf16.msra.mxu0 %v1590
    %1599 = vmatprep.subr.bf16.mxu0 0
    %1600 = vmatpush1.bf16.msra.mxu0 %v1591
    %1601 = vmatprep.subr.bf16.mxu0 0
    %1602 = vmatpush1.bf16.msra.mxu0 0
    %1603 = vmatprep.subr.bf16.mxu0 0
    %1604 = vmatpush1.bf16.msra.mxu0 0
    %1605 = vmatprep.subr.bf16.mxu0 0
    %1606 = vmatpush1.bf16.msra.mxu0 0
    %1607 = vmatprep.subr.bf16.mxu0 0
    %1608 = vmatpush1.bf16.msra.mxu0 0
    %1609 = vmatprep.subr.bf16.mxu0 0
    %1610 = vmatpush1.bf16.msra.mxu0 0
    %1611 = vmatprep.subr.bf16.mxu0 0
    %1612 = vmatpush1.bf16.msra.mxu0 0
    %1613 = vmatprep.subr.bf16.mxu0 0
    %1614 = vmatpush1.bf16.msra.mxu0 0
    %1615 = vmatprep.subr.bf16.mxu0 0
    %1616 = vmatpush1.bf16.msra.mxu0 0
    %1617 = vmatprep.subr.bf16.mxu0 0
    %1618 = vmatpush1.bf16.msra.mxu0 0
    %1619 = vmatprep.subr.bf16.mxu0 0
    %1620 = vmatpush1.bf16.msra.mxu0 0
    %1621 = vmatprep.subr.bf16.mxu0 0
    %1622 = vmatpush1.bf16.msra.mxu0 0
    %1623 = vmatprep.subr.bf16.mxu0 0
    %1624 = vmatpush1.bf16.msra.mxu0 0
    %1625 = vmatprep.subr.bf16.mxu0 0
    %1626 = vmatpush1.bf16.msra.mxu0 0
    %1627 = vmatprep.subr.bf16.mxu0 0
    %1628 = vmatpush1.bf16.msra.mxu0 0
    %1629 = vmatprep.mubr.bf16.mxu0 0
    %1630 = vmatmul.mubr.bf16.gmra.mrb[0].mxu0 %v1595
    %v1631 = vpop.f32.mrb[0].mxu0
    %v1632 = vadd.f32 %v1580, %v1631
    %v1633 = vpop.f32.mrb[0].mxu0
    %v1634 = vpop.f32.mrb[0].mxu0
    %v1635 = vpop.f32.mrb[0].mxu0
    %1636 = vdwg.mxu0
    %v1637 = vmax.f32 %v1632, 0.0
    %s1638 = scalar_lea.vmem %s17, 32
    %v1639 = vld [vmem:[%s1638] sm:$0xf]
    %v1640 = vld [vmem:[%s1638 + $0x4] sm:$0xf]
    %v1641 = vld [vmem:[%s1638 + $0x8] sm:$0xf]
    %v1642 = vld [vmem:[%s1638 + $0xc] sm:$0xf]
    %v1643 = vld [vmem:[%s1638 + $0x10] sm:$0xf]
    %v1644 = vld [vmem:[%s1638 + $0x14] sm:$0xf]
    %v1645 = vld [vmem:[%s1638 + $0x18] sm:$0xf]
    %v1646 = vld [vmem:[%s1638 + $0x1c] sm:$0xf]
    %v1647 = vpack.c.bf16 %v1637, %v1637
    %s1648 = scalar_lea.vmem [#allocation19], 1
    %v1649 = vld [vmem:[%s1648] sm:$0x1]
    %v1651 = vlaneseq
    %v1652 = vshrl.u32 %v1651, 7
    %v1653 = vsub.s32 0, %v1652
    %v1654 = vrot.slane %v1649, %v1653
    %v1664 = vunpack.c.l.b16 %v1639
    %v1665 = vunpack.c.l.b16 %v1640
    %v1666 = vunpack.c.l.b16 %v1641
    %v1667 = vunpack.c.l.b16 %v1642
    %v1668 = vunpack.c.l.b16 %v1643
    %v1669 = vunpack.c.l.b16 %v1644
    %v1670 = vunpack.c.l.b16 %v1645
    %v1671 = vunpack.c.l.b16 %v1646
    %v1672 = vpack.c.b16 %v1665, %v1664
    %v1673 = vpack.c.b16 %v1667, %v1666
    %v1674 = vpack.c.b16 %v1669, %v1668
    %v1675 = vpack.c.b16 %v1671, %v1670
    %v1681 = vsel %vm297, %v1647, 0
    %1683 = vmatprep.subr.bf16.mxu0 0
    %1684 = vmatpush1.bf16.msra.mxu0 %v1672
    %1685 = vmatprep.subr.bf16.mxu0 0
    %1686 = vmatpush1.bf16.msra.mxu0 %v1673
    %1687 = vmatprep.subr.bf16.mxu0 0
    %1688 = vmatpush1.bf16.msra.mxu0 %v1674
    %1689 = vmatprep.subr.bf16.mxu0 0
    %1690 = vmatpush1.bf16.msra.mxu0 %v1675
    %1691 = vmatprep.subr.bf16.mxu0 0
    %1692 = vmatpush1.bf16.msra.mxu0 0
    %1693 = vmatprep.subr.bf16.mxu0 0
    %1694 = vmatpush1.bf16.msra.mxu0 0
    %1695 = vmatprep.subr.bf16.mxu0 0
    %1696 = vmatpush1.bf16.msra.mxu0 0
    %1697 = vmatprep.subr.bf16.mxu0 0
    %1698 = vmatpush1.bf16.msra.mxu0 0
    %1699 = vmatprep.subr.bf16.mxu0 0
    %1700 = vmatpush1.bf16.msra.mxu0 0
    %1701 = vmatprep.subr.bf16.mxu0 0
    %1702 = vmatpush1.bf16.msra.mxu0 0
    %1703 = vmatprep.subr.bf16.mxu0 0
    %1704 = vmatpush1.bf16.msra.mxu0 0
    %1705 = vmatprep.subr.bf16.mxu0 0
    %1706 = vmatpush1.bf16.msra.mxu0 0
    %1707 = vmatprep.subr.bf16.mxu0 0
    %1708 = vmatpush1.bf16.msra.mxu0 0
    %1709 = vmatprep.subr.bf16.mxu0 0
    %1710 = vmatpush1.bf16.msra.mxu0 0
    %1711 = vmatprep.subr.bf16.mxu0 0
    %1712 = vmatpush1.bf16.msra.mxu0 0
    %1713 = vmatprep.subr.bf16.mxu0 0
    %1714 = vmatpush1.bf16.msra.mxu0 0
    %1715 = vmatprep.mubr.bf16.mxu0 0
    %1716 = vmatmul.mubr.bf16.gmra.mrb[0].mxu0 %v1681
    %v1717 = vpop.f32.mrb[0].mxu0
    %v1718 = vadd.f32 %v1654, %v1717
    %v1719 = vpop.f32.mrb[0].mxu0
    %v1720 = vpop.f32.mrb[0].mxu0
    %v1721 = vpop.f32.mrb[0].mxu0
    %1722 = vdwg.mxu0
    %v1723 = vadd.f32 %v1567, %v1718
    %s1724 = scalar_lea.vmem [#allocation20], 1
    %v1725 = vld [vmem:[%s1724] sm:$0x1]
    %s1726 = scalar_lea.vmem [#allocation22], 1
    %v1727 = vld [vmem:[%s1726] sm:$0x1]
    %v1728 = vsel %vm442, %v1723, 0.0
    %1729 = vadd.xlane.f32.xlu0 %v1728
    %v1730 = vpop.xlane.xlu0 %1729
    %v1731 = vmul.f32 %v1730, %v874
    %v1732 = vsub.f32 %v1723, %v1731
    %v1733 = vmul.f32 %v1732, %v1732
    %v1734 = vsel %vm442, %v1733, 0.0
    %1735 = vadd.xlane.f32.xlu0 %v1734
    %v1736 = vpop.xlane.xlu0 %1735
    %v1737 = vmul.f32 %v1736, %v874
    %v1738 = vadd.f32 %v1737, 1e-05
    %v1739 = vrsqrt.pop %v1738
    %v1740 = vmul.f32 %v1732, %v1739
    %v1742 = vlaneseq
    %v1743 = vshrl.u32 %v1742, 7
    %v1744 = vsub.s32 0, %v1743
    %v1745 = vrot.slane %v1725, %v1744
    %v1747 = vmul.f32 %v1740, %v1745
    %v1749 = vlaneseq
    %v1750 = vshrl.u32 %v1749, 7
    %v1751 = vsub.s32 0, %v1750
    %v1752 = vrot.slane %v1727, %v1751
    %v1754 = vadd.f32 %v1747, %v1752
    %v1755 = vpack.c.bf16 %v1754, %v1754
    %s1756 = scalar_lea.vmem %s5, 32
    %v1757 = vld [vmem:[%s1756] sm:$0xf]
    %v1758 = vld [vmem:[%s1756 + $0x4] sm:$0xf]
    %v1759 = vld [vmem:[%s1756 + $0x8] sm:$0xf]
    %v1760 = vld [vmem:[%s1756 + $0xc] sm:$0xf]
    %s1761 = scalar_lea.vmem [#allocation8], 2
    %v1762 = vld [vmem:[%s1761] sm:$0x1]
    %v1764 = vlaneseq
    %v1765 = vshrl.u32 %v1764, 7
    %v1766 = vsub.s32 0, %v1765
    %v1767 = vrot.slane %v1762, %v1766
    %v1773 = vunpack.c.l.b16 %v1757
    %v1774 = vunpack.c.l.b16 %v1758
    %v1775 = vunpack.c.l.b16 %v1759
    %v1776 = vunpack.c.l.b16 %v1760
    %v1777 = vpack.c.b16 %v1774, %v1773
    %v1778 = vpack.c.b16 %v1776, %v1775
    %v1782 = vsel %vm442, %v1755, 0
    %1784 = vmatprep.subr.bf16.mxu0 0
    %1785 = vmatpush1.bf16.msra.mxu0 %v1777
    %1786 = vmatprep.subr.bf16.mxu0 0
    %1787 = vmatpush1.bf16.msra.mxu0 %v1778
    %1788 = vmatprep.subr.bf16.mxu0 0
    %1789 = vmatpush1.bf16.msra.mxu0 0
    %1790 = vmatprep.subr.bf16.mxu0 0
    %1791 = vmatpush1.bf16.msra.mxu0 0
    %1792 = vmatprep.subr.bf16.mxu0 0
    %1793 = vmatpush1.bf16.msra.mxu0 0
    %1794 = vmatprep.subr.bf16.mxu0 0
    %1795 = vmatpush1.bf16.msra.mxu0 0
    %1796 = vmatprep.subr.bf16.mxu0 0
    %1797 = vmatpush1.bf16.msra.mxu0 0
    %1798 = vmatprep.subr.bf16.mxu0 0
    %1799 = vmatpush1.bf16.msra.mxu0 0
    %1800 = vmatprep.subr.bf16.mxu0 0
    %1801 = vmatpush1.bf16.msra.mxu0 0
    %1802 = vmatprep.subr.bf16.mxu0 0
    %1803 = vmatpush1.bf16.msra.mxu0 0
    %1804 = vmatprep.subr.bf16.mxu0 0
    %1805 = vmatpush1.bf16.msra.mxu0 0
    %1806 = vmatprep.subr.bf16.mxu0 0
    %1807 = vmatpush1.bf16.msra.mxu0 0
    %1808 = vmatprep.subr.bf16.mxu0 0
    %1809 = vmatpush1.bf16.msra.mxu0 0
    %1810 = vmatprep.subr.bf16.mxu0 0
    %1811 = vmatpush1.bf16.msra.mxu0 0
    %1812 = vmatprep.subr.bf16.mxu0 0
    %1813 = vmatpush1.bf16.msra.mxu0 0
    %1814 = vmatprep.subr.bf16.mxu0 0
    %1815 = vmatpush1.bf16.msra.mxu0 0
    %1816 = vmatprep.mubr.bf16.mxu0 0
    %1817 = vmatmul.mubr.bf16.gmra.mrb[0].mxu0 %v1782
    %v1818 = vpop.f32.mrb[0].mxu0
    %v1819 = vadd.f32 %v1767, %v1818
    %v1820 = vpop.f32.mrb[0].mxu0
    %v1821 = vpop.f32.mrb[0].mxu0
    %v1822 = vpop.f32.mrb[0].mxu0
    %1823 = vdwg.mxu0
    %s1824 = scalar_lea.vmem %s6, 32
    %v1825 = vld [vmem:[%s1824] sm:$0xf]
    %v1826 = vld [vmem:[%s1824 + $0x4] sm:$0xf]
    %v1827 = vld [vmem:[%s1824 + $0x8] sm:$0xf]
    %v1828 = vld [vmem:[%s1824 + $0xc] sm:$0xf]
    %s1829 = scalar_lea.vmem [#allocation10], 2
    %v1830 = vld [vmem:[%s1829] sm:$0x1]
    %v1832 = vlaneseq
    %v1833 = vshrl.u32 %v1832, 7
    %v1834 = vsub.s32 0, %v1833
    %v1835 = vrot.slane %v1830, %v1834
    %v1841 = vunpack.c.l.b16 %v1825
    %v1842 = vunpack.c.l.b16 %v1826
    %v1843 = vunpack.c.l.b16 %v1827
    %v1844 = vunpack.c.l.b16 %v1828
    %v1845 = vpack.c.b16 %v1842, %v1841
    %v1846 = vpack.c.b16 %v1844, %v1843
    %1849 = vmatprep.subr.bf16.mxu0 0
    %1850 = vmatpush1.bf16.msra.mxu0 %v1845
    %1851 = vmatprep.subr.bf16.mxu0 0
    %1852 = vmatpush1.bf16.msra.mxu0 %v1846
    %1853 = vmatprep.subr.bf16.mxu0 0
    %1854 = vmatpush1.bf16.msra.mxu0 0
    %1855 = vmatprep.subr.bf16.mxu0 0
    %1856 = vmatpush1.bf16.msra.mxu0 0
    %1857 = vmatprep.subr.bf16.mxu0 0
    %1858 = vmatpush1.bf16.msra.mxu0 0
    %1859 = vmatprep.subr.bf16.mxu0 0
    %1860 = vmatpush1.bf16.msra.mxu0 0
    %1861 = vmatprep.subr.bf16.mxu0 0
    %1862 = vmatpush1.bf16.msra.mxu0 0
    %1863 = vmatprep.subr.bf16.mxu0 0
    %1864 = vmatpush1.bf16.msra.mxu0 0
    %1865 = vmatprep.subr.bf16.mxu0 0
    %1866 = vmatpush1.bf16.msra.mxu0 0
    %1867 = vmatprep.subr.bf16.mxu0 0
    %1868 = vmatpush1.bf16.msra.mxu0 0
    %1869 = vmatprep.subr.bf16.mxu0 0
    %1870 = vmatpush1.bf16.msra.mxu0 0
    %1871 = vmatprep.subr.bf16.mxu0 0
    %1872 = vmatpush1.bf16.msra.mxu0 0
    %1873 = vmatprep.subr.bf16.mxu0 0
    %1874 = vmatpush1.bf16.msra.mxu0 0
    %1875 = vmatprep.subr.bf16.mxu0 0
    %1876 = vmatpush1.bf16.msra.mxu0 0
    %1877 = vmatprep.subr.bf16.mxu0 0
    %1878 = vmatpush1.bf16.msra.mxu0 0
    %1879 = vmatprep.subr.bf16.mxu0 0
    %1880 = vmatpush1.bf16.msra.mxu0 0
    %1881 = vmatprep.mubr.bf16.mxu0 0
    %1882 = vmatmul.mubr.bf16.gmra.mrb[0].mxu0 %v1782
    %v1883 = vpop.f32.mrb[0].mxu0
    %v1884 = vadd.f32 %v1835, %v1883
    %v1885 = vpop.f32.mrb[0].mxu0
    %v1886 = vpop.f32.mrb[0].mxu0
    %v1887 = vpop.f32.mrb[0].mxu0
    %1888 = vdwg.mxu0
    %s1889 = scalar_lea.vmem %s7, 32
    %v1890 = vld [vmem:[%s1889] sm:$0xf]
    %v1891 = vld [vmem:[%s1889 + $0x4] sm:$0xf]
    %v1892 = vld [vmem:[%s1889 + $0x8] sm:$0xf]
    %v1893 = vld [vmem:[%s1889 + $0xc] sm:$0xf]
    %s1894 = scalar_lea.vmem [#allocation11], 2
    %v1895 = vld [vmem:[%s1894] sm:$0x1]
    %v1897 = vlaneseq
    %v1898 = vshrl.u32 %v1897, 7
    %v1899 = vsub.s32 0, %v1898
    %v1900 = vrot.slane %v1895, %v1899
    %v1906 = vunpack.c.l.b16 %v1890
    %v1907 = vunpack.c.l.b16 %v1891
    %v1908 = vunpack.c.l.b16 %v1892
    %v1909 = vunpack.c.l.b16 %v1893
    %v1910 = vpack.c.b16 %v1907, %v1906
    %v1911 = vpack.c.b16 %v1909, %v1908
    %1914 = vmatprep.subr.bf16.mxu0 0
    %1915 = vmatpush1.bf16.msra.mxu0 %v1910
    %1916 = vmatprep.subr.bf16.mxu0 0
    %1917 = vmatpush1.bf16.msra.mxu0 %v1911
    %1918 = vmatprep.subr.bf16.mxu0 0
    %1919 = vmatpush1.bf16.msra.mxu0 0
    %1920 = vmatprep.subr.bf16.mxu0 0
    %1921 = vmatpush1.bf16.msra.mxu0 0
    %1922 = vmatprep.subr.bf16.mxu0 0
    %1923 = vmatpush1.bf16.msra.mxu0 0
    %1924 = vmatprep.subr.bf16.mxu0 0
    %1925 = vmatpush1.bf16.msra.mxu0 0
    %1926 = vmatprep.subr.bf16.mxu0 0
    %1927 = vmatpush1.bf16.msra.mxu0 0
    %1928 = vmatprep.subr.bf16.mxu0 0
    %1929 = vmatpush1.bf16.msra.mxu0 0
    %1930 = vmatprep.subr.bf16.mxu0 0
    %1931 = vmatpush1.bf16.msra.mxu0 0
    %1932 = vmatprep.subr.bf16.mxu0 0
    %1933 = vmatpush1.bf16.msra.mxu0 0
    %1934 = vmatprep.subr.bf16.mxu0 0
    %1935 = vmatpush1.bf16.msra.mxu0 0
    %1936 = vmatprep.subr.bf16.mxu0 0
    %1937 = vmatpush1.bf16.msra.mxu0 0
    %1938 = vmatprep.subr.bf16.mxu0 0
    %1939 = vmatpush1.bf16.msra.mxu0 0
    %1940 = vmatprep.subr.bf16.mxu0 0
    %1941 = vmatpush1.bf16.msra.mxu0 0
    %1942 = vmatprep.subr.bf16.mxu0 0
    %1943 = vmatpush1.bf16.msra.mxu0 0
    %1944 = vmatprep.subr.bf16.mxu0 0
    %1945 = vmatpush1.bf16.msra.mxu0 0
    %1946 = vmatprep.mubr.bf16.mxu0 0
    %1947 = vmatmul.mubr.bf16.gmra.mrb[0].mxu0 %v1782
    %v1948 = vpop.f32.mrb[0].mxu0
    %v1949 = vadd.f32 %v1900, %v1948
    %v1950 = vpop.f32.mrb[0].mxu0
    %v1951 = vpop.f32.mrb[0].mxu0
    %v1952 = vpop.f32.mrb[0].mxu0
    %1953 = vdwg.mxu0
    %v1955 = vrot.slane %v1884, 4
    %v1957 = vsel %vm414, %v1955, %v1955
    %v1959 = vrot.slane %v1949, 4
    %v1961 = vsel %vm414, %v1959, %v1959
    %v1962 = vmul.f32 %v1819, %v1884
    %v1963 = vmul.f32 %v1819, %v1957
    %v1965 = vsel %vm442, %v1962, 0
    %v1968 = vsel %vm442, %v1963, 0
    %1970 = vmatprep.subr.mxu0 0.0
    %1971 = vmatpush1.msra.mxu0 %v258
    %1972 = vmatprep.subr.mxu0 0.0
    %1973 = vmatpush1.msra.mxu0 %v259
    %1974 = vmatprep.subr.mxu0 0.0
    %1975 = vmatpush1.msra.mxu0 %v260
    %1976 = vmatprep.subr.mxu0 0.0
    %1977 = vmatpush1.msra.mxu0 %v261
    %1978 = vmatprep.subr.mxu0 0.0
    %1979 = vmatpush1.msra.mxu0 0.0
    %1980 = vmatprep.subr.mxu0 0.0
    %1981 = vmatpush1.msra.mxu0 0.0
    %1982 = vmatprep.subr.mxu0 0.0
    %1983 = vmatpush1.msra.mxu0 0.0
    %1984 = vmatprep.subr.mxu0 0.0
    %1985 = vmatpush1.msra.mxu0 0.0
    %1986 = vmatprep.subr.mxu0 0.0
    %1987 = vmatpush1.msra.mxu0 0.0
    %1988 = vmatprep.subr.mxu0 0.0
    %1989 = vmatpush1.msra.mxu0 0.0
    %1990 = vmatprep.subr.mxu0 0.0
    %1991 = vmatpush1.msra.mxu0 0.0
    %1992 = vmatprep.subr.mxu0 0.0
    %1993 = vmatpush1.msra.mxu0 0.0
    %1994 = vmatprep.subr.mxu0 0.0
    %1995 = vmatpush1.msra.mxu0 0.0
    %1996 = vmatprep.subr.mxu0 0.0
    %1997 = vmatpush1.msra.mxu0 0.0
    %1998 = vmatprep.subr.mxu0 0.0
    %1999 = vmatpush1.msra.mxu0 0.0
    %2000 = vmatprep.subr.mxu0 0.0
    %2001 = vmatpush1.msra.mxu0 0.0
    %2002 = vmatprep.subr.mxu0 0.0
    %2003 = vmatpush1.msra.mxu0 0.0
    %2004 = vmatprep.subr.mxu0 0.0
    %2005 = vmatpush1.msra.mxu0 0.0
    %2006 = vmatprep.subr.mxu0 0.0
    %2007 = vmatpush1.msra.mxu0 0.0
    %2008 = vmatprep.subr.mxu0 0.0
    %2009 = vmatpush1.msra.mxu0 0.0
    %2010 = vmatprep.subr.mxu0 0.0
    %2011 = vmatpush1.msra.mxu0 0.0
    %2012 = vmatprep.subr.mxu0 0.0
    %2013 = vmatpush1.msra.mxu0 0.0
    %2014 = vmatprep.subr.mxu0 0.0
    %2015 = vmatpush1.msra.mxu0 0.0
    %2016 = vmatprep.subr.mxu0 0.0
    %2017 = vmatpush1.msra.mxu0 0.0
    %2018 = vmatprep.subr.mxu0 0.0
    %2019 = vmatpush1.msra.mxu0 0.0
    %2020 = vmatprep.subr.mxu0 0.0
    %2021 = vmatpush1.msra.mxu0 0.0
    %2022 = vmatprep.subr.mxu0 0.0
    %2023 = vmatpush1.msra.mxu0 0.0
    %2024 = vmatprep.subr.mxu0 0.0
    %2025 = vmatpush1.msra.mxu0 0.0
    %2026 = vmatprep.subr.mxu0 0.0
    %2027 = vmatpush1.msra.mxu0 0.0
    %2028 = vmatprep.subr.mxu0 0.0
    %2029 = vmatpush1.msra.mxu0 0.0
    %2030 = vmatprep.subr.mxu0 0.0
    %2031 = vmatpush1.msra.mxu0 0.0
    %2032 = vmatprep.subr.mxu0 0.0
    %2033 = vmatpush1.msra.mxu0 0.0
    %2034 = vmatprep.mubr.f32.mxu0 0.0
    %2035 = vmatmul.mubr.f32.gmra.mrb[0].mxu0 %v1965
    %v2036 = vpop.f32.mrb[0].mxu0
    %v2037 = vadd.f32 0.0, %v2036
    %v2038 = vpop.f32.mrb[0].mxu0
    %2039 = vmatprep.mubr.f32.mxu0 0.0
    %2040 = vmatmul.mubr.f32.gmra.mrb[0].mxu0 %v1968
    %v2041 = vpop.f32.mrb[0].mxu0
    %v2042 = vadd.f32 0.0, %v2041
    %v2043 = vpop.f32.mrb[0].mxu0
    %2044 = vdwg.mxu0
    %v2045 = vmul.f32 %v2037, 0.5
    %v2046 = vmul.f32 %v2042, 0.5
    %v2047 = vmax.f32 %v2045, %v2046
    %v2048 = vsub.f32 %v2045, %v2047
    %v2049 = vmul.f32 %v2048, 1.442695
    %v2050 = vpow.pop %v2049
    %v2051 = vsub.f32 %v2046, %v2047
    %v2052 = vmul.f32 %v2051, 1.442695
    %v2053 = vpow.pop %v2052
    %v2054 = vadd.f32 %v2050, %v2053
    %v2055 = vrcp.pop %v2054
    %v2056 = vmul.f32 %v2050, %v2055
    %v2057 = vmul.f32 %v2053, %v2055
    %v2059 = vsel %vm716, %v2056, 0
    %v2062 = vsel %vm716, %v2057, 0
    %2064 = vmatprep.subr.mxu0 0.0
    %2065 = vmatpush1.msra.mxu0 %v262
    %2066 = vmatprep.subr.mxu0 0.0
    %2067 = vmatpush1.msra.mxu0 0.0
    %2068 = vmatprep.subr.mxu0 0.0
    %2069 = vmatpush1.msra.mxu0 0.0
    %2070 = vmatprep.subr.mxu0 0.0
    %2071 = vmatpush1.msra.mxu0 0.0
    %2072 = vmatprep.subr.mxu0 0.0
    %2073 = vmatpush1.msra.mxu0 0.0
    %2074 = vmatprep.subr.mxu0 0.0
    %2075 = vmatpush1.msra.mxu0 0.0
    %2076 = vmatprep.subr.mxu0 0.0
    %2077 = vmatpush1.msra.mxu0 0.0
    %2078 = vmatprep.subr.mxu0 0.0
    %2079 = vmatpush1.msra.mxu0 0.0
    %2080 = vmatprep.subr.mxu0 0.0
    %2081 = vmatpush1.msra.mxu0 0.0
    %2082 = vmatprep.subr.mxu0 0.0
    %2083 = vmatpush1.msra.mxu0 0.0
    %2084 = vmatprep.subr.mxu0 0.0
    %2085 = vmatpush1.msra.mxu0 0.0
    %2086 = vmatprep.subr.mxu0 0.0
    %2087 = vmatpush1.msra.mxu0 0.0
    %2088 = vmatprep.subr.mxu0 0.0
    %2089 = vmatpush1.msra.mxu0 0.0
    %2090 = vmatprep.subr.mxu0 0.0
    %2091 = vmatpush1.msra.mxu0 0.0
    %2092 = vmatprep.subr.mxu0 0.0
    %2093 = vmatpush1.msra.mxu0 0.0
    %2094 = vmatprep.subr.mxu0 0.0
    %2095 = vmatpush1.msra.mxu0 0.0
    %2096 = vmatprep.subr.mxu0 0.0
    %2097 = vmatpush1.msra.mxu0 0.0
    %2098 = vmatprep.subr.mxu0 0.0
    %2099 = vmatpush1.msra.mxu0 0.0
    %2100 = vmatprep.subr.mxu0 0.0
    %2101 = vmatpush1.msra.mxu0 0.0
    %2102 = vmatprep.subr.mxu0 0.0
    %2103 = vmatpush1.msra.mxu0 0.0
    %2104 = vmatprep.subr.mxu0 0.0
    %2105 = vmatpush1.msra.mxu0 0.0
    %2106 = vmatprep.subr.mxu0 0.0
    %2107 = vmatpush1.msra.mxu0 0.0
    %2108 = vmatprep.subr.mxu0 0.0
    %2109 = vmatpush1.msra.mxu0 0.0
    %2110 = vmatprep.subr.mxu0 0.0
    %2111 = vmatpush1.msra.mxu0 0.0
    %2112 = vmatprep.subr.mxu0 0.0
    %2113 = vmatpush1.msra.mxu0 0.0
    %2114 = vmatprep.subr.mxu0 0.0
    %2115 = vmatpush1.msra.mxu0 0.0
    %2116 = vmatprep.subr.mxu0 0.0
    %2117 = vmatpush1.msra.mxu0 0.0
    %2118 = vmatprep.subr.mxu0 0.0
    %2119 = vmatpush1.msra.mxu0 0.0
    %2120 = vmatprep.subr.mxu0 0.0
    %2121 = vmatpush1.msra.mxu0 0.0
    %2122 = vmatprep.subr.mxu0 0.0
    %2123 = vmatpush1.msra.mxu0 0.0
    %2124 = vmatprep.subr.mxu0 0.0
    %2125 = vmatpush1.msra.mxu0 0.0
    %2126 = vmatprep.subr.mxu0 0.0
    %2127 = vmatpush1.msra.mxu0 0.0
    %2128 = vmatprep.mubr.f32.mxu0 0.0
    %2129 = vmatmul.mubr.f32.gmra.mrb[0].mxu0 %v2059
    %v2130 = vpop.f32.mrb[0].mxu0
    %v2131 = vadd.f32 0.0, %v2130
    %v2132 = vpop.f32.mrb[0].mxu0
    %2133 = vmatprep.mubr.f32.mxu0 0.0
    %2134 = vmatmul.mubr.f32.gmra.mrb[0].mxu0 %v2062
    %v2135 = vpop.f32.mrb[0].mxu0
    %v2136 = vadd.f32 0.0, %v2135
    %v2137 = vpop.f32.mrb[0].mxu0
    %2138 = vdwg.mxu0
    %v2139 = vmul.f32 %v2131, %v1949
    %v2140 = vmul.f32 %v2136, %v1961
    %v2141 = vadd.f32 %v2139, %v2140
    %s2142 = scalar_lea.vmem %s11, 32
    %v2143 = vld [vmem:[%s2142] sm:$0xf]
    %v2144 = vld [vmem:[%s2142 + $0x4] sm:$0xf]
    %v2145 = vld [vmem:[%s2142 + $0x8] sm:$0xf]
    %v2146 = vld [vmem:[%s2142 + $0xc] sm:$0xf]
    %v2147 = vpack.c.bf16 %v2141, %v2141
    %s2148 = scalar_lea.vmem [#allocation13], 2
    %v2149 = vld [vmem:[%s2148] sm:$0x1]
    %v2151 = vlaneseq
    %v2152 = vshrl.u32 %v2151, 7
    %v2153 = vsub.s32 0, %v2152
    %v2154 = vrot.slane %v2149, %v2153
    %v2160 = vunpack.c.l.b16 %v2143
    %v2161 = vunpack.c.l.b16 %v2144
    %v2162 = vunpack.c.l.b16 %v2145
    %v2163 = vunpack.c.l.b16 %v2146
    %v2164 = vpack.c.b16 %v2161, %v2160
    %v2165 = vpack.c.b16 %v2163, %v2162
    %v2169 = vsel %vm442, %v2147, 0
    %2171 = vmatprep.subr.bf16.mxu0 0
    %2172 = vmatpush1.bf16.msra.mxu0 %v2164
    %2173 = vmatprep.subr.bf16.mxu0 0
    %2174 = vmatpush1.bf16.msra.mxu0 %v2165
    %2175 = vmatprep.subr.bf16.mxu0 0
    %2176 = vmatpush1.bf16.msra.mxu0 0
    %2177 = vmatprep.subr.bf16.mxu0 0
    %2178 = vmatpush1.bf16.msra.mxu0 0
    %2179 = vmatprep.subr.bf16.mxu0 0
    %2180 = vmatpush1.bf16.msra.mxu0 0
    %2181 = vmatprep.subr.bf16.mxu0 0
    %2182 = vmatpush1.bf16.msra.mxu0 0
    %2183 = vmatprep.subr.bf16.mxu0 0
    %2184 = vmatpush1.bf16.msra.mxu0 0
    %2185 = vmatprep.subr.bf16.mxu0 0
    %2186 = vmatpush1.bf16.msra.mxu0 0
    %2187 = vmatprep.subr.bf16.mxu0 0
    %2188 = vmatpush1.bf16.msra.mxu0 0
    %2189 = vmatprep.subr.bf16.mxu0 0
    %2190 = vmatpush1.bf16.msra.mxu0 0
    %2191 = vmatprep.subr.bf16.mxu0 0
    %2192 = vmatpush1.bf16.msra.mxu0 0
    %2193 = vmatprep.subr.bf16.mxu0 0
    %2194 = vmatpush1.bf16.msra.mxu0 0
    %2195 = vmatprep.subr.bf16.mxu0 0
    %2196 = vmatpush1.bf16.msra.mxu0 0
    %2197 = vmatprep.subr.bf16.mxu0 0
    %2198 = vmatpush1.bf16.msra.mxu0 0
    %2199 = vmatprep.subr.bf16.mxu0 0
    %2200 = vmatpush1.bf16.msra.mxu0 0
    %2201 = vmatprep.subr.bf16.mxu0 0
    %2202 = vmatpush1.bf16.msra.mxu0 0
    %2203 = vmatprep.mubr.bf16.mxu0 0
    %2204 = vmatmul.mubr.bf16.gmra.mrb[0].mxu0 %v2169
    %v2205 = vpop.f32.mrb[0].mxu0
    %v2206 = vadd.f32 %v2154, %v2205
    %v2207 = vpop.f32.mrb[0].mxu0
    %v2208 = vpop.f32.mrb[0].mxu0
    %v2209 = vpop.f32.mrb[0].mxu0
    %2210 = vdwg.mxu0
    %v2211 = vadd.f32 %v1754, %v2206
    %s2212 = scalar_lea.vmem [#allocation14], 2
    %v2213 = vld [vmem:[%s2212] sm:$0x1]
    %s2214 = scalar_lea.vmem [#allocation16], 2
    %v2215 = vld [vmem:[%s2214] sm:$0x1]
    %v2216 = vsel %vm442, %v2211, 0.0
    %2217 = vadd.xlane.f32.xlu0 %v2216
    %v2218 = vpop.xlane.xlu0 %2217
    %v2219 = vmul.f32 %v2218, %v874
    %v2220 = vsub.f32 %v2211, %v2219
    %v2221 = vmul.f32 %v2220, %v2220
    %v2222 = vsel %vm442, %v2221, 0.0
    %2223 = vadd.xlane.f32.xlu0 %v2222
    %v2224 = vpop.xlane.xlu0 %2223
    %v2225 = vmul.f32 %v2224, %v874
    %v2226 = vadd.f32 %v2225, 1e-05
    %v2227 = vrsqrt.pop %v2226
    %v2228 = vmul.f32 %v2220, %v2227
    %v2230 = vlaneseq
    %v2231 = vshrl.u32 %v2230, 7
    %v2232 = vsub.s32 0, %v2231
    %v2233 = vrot.slane %v2213, %v2232
    %v2235 = vmul.f32 %v2228, %v2233
    %v2237 = vlaneseq
    %v2238 = vshrl.u32 %v2237, 7
    %v2239 = vsub.s32 0, %v2238
    %v2240 = vrot.slane %v2215, %v2239
    %v2242 = vadd.f32 %v2235, %v2240
    %s2243 = scalar_lea.vmem %s15, 32
    %v2244 = vld [vmem:[%s2243] sm:$0xf]
    %v2245 = vld [vmem:[%s2243 + $0x4] sm:$0xf]
    %v2246 = vld [vmem:[%s2243 + $0x8] sm:$0xf]
    %v2247 = vld [vmem:[%s2243 + $0xc] sm:$0xf]
    %v2248 = vpack.c.bf16 %v2242, %v2242
    %s2249 = scalar_lea.vmem [#allocation17], 2
    %v2250 = vld [vmem:[%s2249] sm:$0x1]
    %v2252 = vlaneseq
    %v2253 = vshrl.u32 %v2252, 7
    %v2254 = vsub.s32 0, %v2253
    %v2255 = vrot.slane %v2250, %v2254
    %v2261 = vunpack.c.l.b16 %v2244
    %v2262 = vunpack.c.l.b16 %v2245
    %v2263 = vunpack.c.l.b16 %v2246
    %v2264 = vunpack.c.l.b16 %v2247
    %v2265 = vpack.c.b16 %v2262, %v2261
    %v2266 = vpack.c.b16 %v2264, %v2263
    %v2270 = vsel %vm442, %v2248, 0
    %2272 = vmatprep.subr.bf16.mxu0 0
    %2273 = vmatpush1.bf16.msra.mxu0 %v2265
    %2274 = vmatprep.subr.bf16.mxu0 0
    %2275 = vmatpush1.bf16.msra.mxu0 %v2266
    %2276 = vmatprep.subr.bf16.mxu0 0
    %2277 = vmatpush1.bf16.msra.mxu0 0
    %2278 = vmatprep.subr.bf16.mxu0 0
    %2279 = vmatpush1.bf16.msra.mxu0 0
    %2280 = vmatprep.subr.bf16.mxu0 0
    %2281 = vmatpush1.bf16.msra.mxu0 0
    %2282 = vmatprep.subr.bf16.mxu0 0
    %2283 = vmatpush1.bf16.msra.mxu0 0
    %2284 = vmatprep.subr.bf16.mxu0 0
    %2285 = vmatpush1.bf16.msra.mxu0 0
    %2286 = vmatprep.subr.bf16.mxu0 0
    %2287 = vmatpush1.bf16.msra.mxu0 0
    %2288 = vmatprep.subr.bf16.mxu0 0
    %2289 = vmatpush1.bf16.msra.mxu0 0
    %2290 = vmatprep.subr.bf16.mxu0 0
    %2291 = vmatpush1.bf16.msra.mxu0 0
    %2292 = vmatprep.subr.bf16.mxu0 0
    %2293 = vmatpush1.bf16.msra.mxu0 0
    %2294 = vmatprep.subr.bf16.mxu0 0
    %2295 = vmatpush1.bf16.msra.mxu0 0
    %2296 = vmatprep.subr.bf16.mxu0 0
    %2297 = vmatpush1.bf16.msra.mxu0 0
    %2298 = vmatprep.subr.bf16.mxu0 0
    %2299 = vmatpush1.bf16.msra.mxu0 0
    %2300 = vmatprep.subr.bf16.mxu0 0
    %2301 = vmatpush1.bf16.msra.mxu0 0
    %2302 = vmatprep.subr.bf16.mxu0 0
    %2303 = vmatpush1.bf16.msra.mxu0 0
    %2304 = vmatprep.mubr.bf16.mxu0 0
    %2305 = vmatmul.mubr.bf16.gmra.mrb[0].mxu0 %v2270
    %v2306 = vpop.f32.mrb[0].mxu0
    %v2307 = vadd.f32 %v2255, %v2306
    %v2308 = vpop.f32.mrb[0].mxu0
    %v2309 = vpop.f32.mrb[0].mxu0
    %v2310 = vpop.f32.mrb[0].mxu0
    %2311 = vdwg.mxu0
    %v2312 = vmax.f32 %v2307, 0.0
    %s2313 = scalar_lea.vmem %s17, 64
    %v2314 = vld [vmem:[%s2313] sm:$0xf]
    %v2315 = vld [vmem:[%s2313 + $0x4] sm:$0xf]
    %v2316 = vld [vmem:[%s2313 + $0x8] sm:$0xf]
    %v2317 = vld [vmem:[%s2313 + $0xc] sm:$0xf]
    %v2318 = vld [vmem:[%s2313 + $0x10] sm:$0xf]
    %v2319 = vld [vmem:[%s2313 + $0x14] sm:$0xf]
    %v2320 = vld [vmem:[%s2313 + $0x18] sm:$0xf]
    %v2321 = vld [vmem:[%s2313 + $0x1c] sm:$0xf]
    %v2322 = vpack.c.bf16 %v2312, %v2312
    %s2323 = scalar_lea.vmem [#allocation19], 2
    %v2324 = vld [vmem:[%s2323] sm:$0x1]
    %v2326 = vlaneseq
    %v2327 = vshrl.u32 %v2326, 7
    %v2328 = vsub.s32 0, %v2327
    %v2329 = vrot.slane %v2324, %v2328
    %v2339 = vunpack.c.l.b16 %v2314
    %v2340 = vunpack.c.l.b16 %v2315
    %v2341 = vunpack.c.l.b16 %v2316
    %v2342 = vunpack.c.l.b16 %v2317
    %v2343 = vunpack.c.l.b16 %v2318
    %v2344 = vunpack.c.l.b16 %v2319
    %v2345 = vunpack.c.l.b16 %v2320
    %v2346 = vunpack.c.l.b16 %v2321
    %v2347 = vpack.c.b16 %v2340, %v2339
    %v2348 = vpack.c.b16 %v2342, %v2341
    %v2349 = vpack.c.b16 %v2344, %v2343
    %v2350 = vpack.c.b16 %v2346, %v2345
    %v2356 = vsel %vm297, %v2322, 0
    %2358 = vmatprep.subr.bf16.mxu0 0
    %2359 = vmatpush1.bf16.msra.mxu0 %v2347
    %2360 = vmatprep.subr.bf16.mxu0 0
    %2361 = vmatpush1.bf16.msra.mxu0 %v2348
    %2362 = vmatprep.subr.bf16.mxu0 0
    %2363 = vmatpush1.bf16.msra.mxu0 %v2349
    %2364 = vmatprep.subr.bf16.mxu0 0
    %2365 = vmatpush1.bf16.msra.mxu0 %v2350
    %2366 = vmatprep.subr.bf16.mxu0 0
    %2367 = vmatpush1.bf16.msra.mxu0 0
    %2368 = vmatprep.subr.bf16.mxu0 0
    %2369 = vmatpush1.bf16.msra.mxu0 0
    %2370 = vmatprep.subr.bf16.mxu0 0
    %2371 = vmatpush1.bf16.msra.mxu0 0
    %2372 = vmatprep.subr.bf16.mxu0 0
    %2373 = vmatpush1.bf16.msra.mxu0 0
    %2374 = vmatprep.subr.bf16.mxu0 0
    %2375 = vmatpush1.bf16.msra.mxu0 0
    %2376 = vmatprep.subr.bf16.mxu0 0
    %2377 = vmatpush1.bf16.msra.mxu0 0
    %2378 = vmatprep.subr.bf16.mxu0 0
    %2379 = vmatpush1.bf16.msra.mxu0 0
    %2380 = vmatprep.subr.bf16.mxu0 0
    %2381 = vmatpush1.bf16.msra.mxu0 0
    %2382 = vmatprep.subr.bf16.mxu0 0
    %2383 = vmatpush1.bf16.msra.mxu0 0
    %2384 = vmatprep.subr.bf16.mxu0 0
    %2385 = vmatpush1.bf16.msra.mxu0 0
    %2386 = vmatprep.subr.bf16.mxu0 0
    %2387 = vmatpush1.bf16.msra.mxu0 0
    %2388 = vmatprep.subr.bf16.mxu0 0
    %2389 = vmatpush1.bf16.msra.mxu0 0
    %2390 = vmatprep.mubr.bf16.mxu0 0
    %2391 = vmatmul.mubr.bf16.gmra.mrb[0].mxu0 %v2356
    %v2392 = vpop.f32.mrb[0].mxu0
    %v2393 = vadd.f32 %v2329, %v2392
    %v2394 = vpop.f32.mrb[0].mxu0
    %v2395 = vpop.f32.mrb[0].mxu0
    %v2396 = vpop.f32.mrb[0].mxu0
    %2397 = vdwg.mxu0
    %v2398 = vadd.f32 %v2242, %v2393
    %s2399 = scalar_lea.vmem [#allocation20], 2
    %v2400 = vld [vmem:[%s2399] sm:$0x1]
    %s2401 = scalar_lea.vmem [#allocation22], 2
    %v2402 = vld [vmem:[%s2401] sm:$0x1]
    %v2403 = vsel %vm442, %v2398, 0.0
    %2404 = vadd.xlane.f32.xlu0 %v2403
    %v2405 = vpop.xlane.xlu0 %2404
    %v2406 = vmul.f32 %v2405, %v874
    %v2407 = vsub.f32 %v2398, %v2406
    %v2408 = vmul.f32 %v2407, %v2407
    %v2409 = vsel %vm442, %v2408, 0.0
    %2410 = vadd.xlane.f32.xlu0 %v2409
    %v2411 = vpop.xlane.xlu0 %2410
    %v2412 = vmul.f32 %v2411, %v874
    %v2413 = vadd.f32 %v2412, 1e-05
    %v2414 = vrsqrt.pop %v2413
    %v2415 = vmul.f32 %v2407, %v2414
    %v2417 = vlaneseq
    %v2418 = vshrl.u32 %v2417, 7
    %v2419 = vsub.s32 0, %v2418
    %v2420 = vrot.slane %v2400, %v2419
    %v2422 = vmul.f32 %v2415, %v2420
    %v2424 = vlaneseq
    %v2425 = vshrl.u32 %v2424, 7
    %v2426 = vsub.s32 0, %v2425
    %v2427 = vrot.slane %v2402, %v2426
    %v2429 = vadd.f32 %v2422, %v2427
    %v2430 = vpack.c.bf16 %v2429, %v2429
    %s2431 = scalar_lea.vmem %s5, 48
    %v2432 = vld [vmem:[%s2431] sm:$0xf]
    %v2433 = vld [vmem:[%s2431 + $0x4] sm:$0xf]
    %v2434 = vld [vmem:[%s2431 + $0x8] sm:$0xf]
    %v2435 = vld [vmem:[%s2431 + $0xc] sm:$0xf]
    %s2436 = scalar_lea.vmem [#allocation8], 3
    %v2437 = vld [vmem:[%s2436] sm:$0x1]
    %v2439 = vlaneseq
    %v2440 = vshrl.u32 %v2439, 7
    %v2441 = vsub.s32 0, %v2440
    %v2442 = vrot.slane %v2437, %v2441
    %v2448 = vunpack.c.l.b16 %v2432
    %v2449 = vunpack.c.l.b16 %v2433
    %v2450 = vunpack.c.l.b16 %v2434
    %v2451 = vunpack.c.l.b16 %v2435
    %v2452 = vpack.c.b16 %v2449, %v2448
    %v2453 = vpack.c.b16 %v2451, %v2450
    %v2457 = vsel %vm442, %v2430, 0
    %2459 = vmatprep.subr.bf16.mxu0 0
    %2460 = vmatpush1.bf16.msra.mxu0 %v2452
    %2461 = vmatprep.subr.bf16.mxu0 0
    %2462 = vmatpush1.bf16.msra.mxu0 %v2453
    %2463 = vmatprep.subr.bf16.mxu0 0
    %2464 = vmatpush1.bf16.msra.mxu0 0
    %2465 = vmatprep.subr.bf16.mxu0 0
    %2466 = vmatpush1.bf16.msra.mxu0 0
    %2467 = vmatprep.subr.bf16.mxu0 0
    %2468 = vmatpush1.bf16.msra.mxu0 0
    %2469 = vmatprep.subr.bf16.mxu0 0
    %2470 = vmatpush1.bf16.msra.mxu0 0
    %2471 = vmatprep.subr.bf16.mxu0 0
    %2472 = vmatpush1.bf16.msra.mxu0 0
    %2473 = vmatprep.subr.bf16.mxu0 0
    %2474 = vmatpush1.bf16.msra.mxu0 0
    %2475 = vmatprep.subr.bf16.mxu0 0
    %2476 = vmatpush1.bf16.msra.mxu0 0
    %2477 = vmatprep.subr.bf16.mxu0 0
    %2478 = vmatpush1.bf16.msra.mxu0 0
    %2479 = vmatprep.subr.bf16.mxu0 0
    %2480 = vmatpush1.bf16.msra.mxu0 0
    %2481 = vmatprep.subr.bf16.mxu0 0
    %2482 = vmatpush1.bf16.msra.mxu0 0
    %2483 = vmatprep.subr.bf16.mxu0 0
    %2484 = vmatpush1.bf16.msra.mxu0 0
    %2485 = vmatprep.subr.bf16.mxu0 0
    %2486 = vmatpush1.bf16.msra.mxu0 0
    %2487 = vmatprep.subr.bf16.mxu0 0
    %2488 = vmatpush1.bf16.msra.mxu0 0
    %2489 = vmatprep.subr.bf16.mxu0 0
    %2490 = vmatpush1.bf16.msra.mxu0 0
    %2491 = vmatprep.mubr.bf16.mxu0 0
    %2492 = vmatmul.mubr.bf16.gmra.mrb[0].mxu0 %v2457
    %v2493 = vpop.f32.mrb[0].mxu0
    %v2494 = vadd.f32 %v2442, %v2493
    %v2495 = vpop.f32.mrb[0].mxu0
    %v2496 = vpop.f32.mrb[0].mxu0
    %v2497 = vpop.f32.mrb[0].mxu0
    %2498 = vdwg.mxu0
    %s2499 = scalar_lea.vmem %s6, 48
    %v2500 = vld [vmem:[%s2499] sm:$0xf]
    %v2501 = vld [vmem:[%s2499 + $0x4] sm:$0xf]
    %v2502 = vld [vmem:[%s2499 + $0x8] sm:$0xf]
    %v2503 = vld [vmem:[%s2499 + $0xc] sm:$0xf]
    %s2504 = scalar_lea.vmem [#allocation10], 3
    %v2505 = vld [vmem:[%s2504] sm:$0x1]
    %v2507 = vlaneseq
    %v2508 = vshrl.u32 %v2507, 7
    %v2509 = vsub.s32 0, %v2508
    %v2510 = vrot.slane %v2505, %v2509
    %v2516 = vunpack.c.l.b16 %v2500
    %v2517 = vunpack.c.l.b16 %v2501
    %v2518 = vunpack.c.l.b16 %v2502
    %v2519 = vunpack.c.l.b16 %v2503
    %v2520 = vpack.c.b16 %v2517, %v2516
    %v2521 = vpack.c.b16 %v2519, %v2518
    %2524 = vmatprep.subr.bf16.mxu0 0
    %2525 = vmatpush1.bf16.msra.mxu0 %v2520
    %2526 = vmatprep.subr.bf16.mxu0 0
    %2527 = vmatpush1.bf16.msra.mxu0 %v2521
    %2528 = vmatprep.subr.bf16.mxu0 0
    %2529 = vmatpush1.bf16.msra.mxu0 0
    %2530 = vmatprep.subr.bf16.mxu0 0
    %2531 = vmatpush1.bf16.msra.mxu0 0
    %2532 = vmatprep.subr.bf16.mxu0 0
    %2533 = vmatpush1.bf16.msra.mxu0 0
    %2534 = vmatprep.subr.bf16.mxu0 0
    %2535 = vmatpush1.bf16.msra.mxu0 0
    %2536 = vmatprep.subr.bf16.mxu0 0
    %2537 = vmatpush1.bf16.msra.mxu0 0
    %2538 = vmatprep.subr.bf16.mxu0 0
    %2539 = vmatpush1.bf16.msra.mxu0 0
    %2540 = vmatprep.subr.bf16.mxu0 0
    %2541 = vmatpush1.bf16.msra.mxu0 0
    %2542 = vmatprep.subr.bf16.mxu0 0
    %2543 = vmatpush1.bf16.msra.mxu0 0
    %2544 = vmatprep.subr.bf16.mxu0 0
    %2545 = vmatpush1.bf16.msra.mxu0 0
    %2546 = vmatprep.subr.bf16.mxu0 0
    %2547 = vmatpush1.bf16.msra.mxu0 0
    %2548 = vmatprep.subr.bf16.mxu0 0
    %2549 = vmatpush1.bf16.msra.mxu0 0
    %2550 = vmatprep.subr.bf16.mxu0 0
    %2551 = vmatpush1.bf16.msra.mxu0 0
    %2552 = vmatprep.subr.bf16.mxu0 0
    %2553 = vmatpush1.bf16.msra.mxu0 0
    %2554 = vmatprep.subr.bf16.mxu0 0
    %2555 = vmatpush1.bf16.msra.mxu0 0
    %2556 = vmatprep.mubr.bf16.mxu0 0
    %2557 = vmatmul.mubr.bf16.gmra.mrb[0].mxu0 %v2457
    %v2558 = vpop.f32.mrb[0].mxu0
    %v2559 = vadd.f32 %v2510, %v2558
    %v2560 = vpop.f32.mrb[0].mxu0
    %v2561 = vpop.f32.mrb[0].mxu0
    %v2562 = vpop.f32.mrb[0].mxu0
    %2563 = vdwg.mxu0
    %s2564 = scalar_lea.vmem %s7, 48
    %v2565 = vld [vmem:[%s2564] sm:$0xf]
    %v2566 = vld [vmem:[%s2564 + $0x4] sm:$0xf]
    %v2567 = vld [vmem:[%s2564 + $0x8] sm:$0xf]
    %v2568 = vld [vmem:[%s2564 + $0xc] sm:$0xf]
    %s2569 = scalar_lea.vmem [#allocation11], 3
    %v2570 = vld [vmem:[%s2569] sm:$0x1]
    %v2572 = vlaneseq
    %v2573 = vshrl.u32 %v2572, 7
    %v2574 = vsub.s32 0, %v2573
    %v2575 = vrot.slane %v2570, %v2574
    %v2581 = vunpack.c.l.b16 %v2565
    %v2582 = vunpack.c.l.b16 %v2566
    %v2583 = vunpack.c.l.b16 %v2567
    %v2584 = vunpack.c.l.b16 %v2568
    %v2585 = vpack.c.b16 %v2582, %v2581
    %v2586 = vpack.c.b16 %v2584, %v2583
    %2589 = vmatprep.subr.bf16.mxu0 0
    %2590 = vmatpush1.bf16.msra.mxu0 %v2585
    %2591 = vmatprep.subr.bf16.mxu0 0
    %2592 = vmatpush1.bf16.msra.mxu0 %v2586
    %2593 = vmatprep.subr.bf16.mxu0 0
    %2594 = vmatpush1.bf16.msra.mxu0 0
    %2595 = vmatprep.subr.bf16.mxu0 0
    %2596 = vmatpush1.bf16.msra.mxu0 0
    %2597 = vmatprep.subr.bf16.mxu0 0
    %2598 = vmatpush1.bf16.msra.mxu0 0
    %2599 = vmatprep.subr.bf16.mxu0 0
    %2600 = vmatpush1.bf16.msra.mxu0 0
    %2601 = vmatprep.subr.bf16.mxu0 0
    %2602 = vmatpush1.bf16.msra.mxu0 0
    %2603 = vmatprep.subr.bf16.mxu0 0
    %2604 = vmatpush1.bf16.msra.mxu0 0
    %2605 = vmatprep.subr.bf16.mxu0 0
    %2606 = vmatpush1.bf16.msra.mxu0 0
    %2607 = vmatprep.subr.bf16.mxu0 0
    %2608 = vmatpush1.bf16.msra.mxu0 0
    %2609 = vmatprep.subr.bf16.mxu0 0
    %2610 = vmatpush1.bf16.msra.mxu0 0
    %2611 = vmatprep.subr.bf16.mxu0 0
    %2612 = vmatpush1.bf16.msra.mxu0 0
    %2613 = vmatprep.subr.bf16.mxu0 0
    %2614 = vmatpush1.bf16.msra.mxu0 0
    %2615 = vmatprep.subr.bf16.mxu0 0
    %2616 = vmatpush1.bf16.msra.mxu0 0
    %2617 = vmatprep.subr.bf16.mxu0 0
    %2618 = vmatpush1.bf16.msra.mxu0 0
    %2619 = vmatprep.subr.bf16.mxu0 0
    %2620 = vmatpush1.bf16.msra.mxu0 0
    %2621 = vmatprep.mubr.bf16.mxu0 0
    %2622 = vmatmul.mubr.bf16.gmra.mrb[0].mxu0 %v2457
    %v2623 = vpop.f32.mrb[0].mxu0
    %v2624 = vadd.f32 %v2575, %v2623
    %v2625 = vpop.f32.mrb[0].mxu0
    %v2626 = vpop.f32.mrb[0].mxu0
    %v2627 = vpop.f32.mrb[0].mxu0
    %2628 = vdwg.mxu0
    %v2630 = vrot.slane %v2559, 4
    %v2632 = vsel %vm414, %v2630, %v2630
    %v2634 = vrot.slane %v2624, 4
    %v2636 = vsel %vm414, %v2634, %v2634
    %v2637 = vmul.f32 %v2494, %v2559
    %v2638 = vmul.f32 %v2494, %v2632
    %v2640 = vsel %vm442, %v2637, 0
    %v2643 = vsel %vm442, %v2638, 0
    %2645 = vmatprep.subr.mxu0 0.0
    %2646 = vmatpush1.msra.mxu0 %v258
    %2647 = vmatprep.subr.mxu0 0.0
    %2648 = vmatpush1.msra.mxu0 %v259
    %2649 = vmatprep.subr.mxu0 0.0
    %2650 = vmatpush1.msra.mxu0 %v260
    %2651 = vmatprep.subr.mxu0 0.0
    %2652 = vmatpush1.msra.mxu0 %v261
    %2653 = vmatprep.subr.mxu0 0.0
    %2654 = vmatpush1.msra.mxu0 0.0
    %2655 = vmatprep.subr.mxu0 0.0
    %2656 = vmatpush1.msra.mxu0 0.0
    %2657 = vmatprep.subr.mxu0 0.0
    %2658 = vmatpush1.msra.mxu0 0.0
    %2659 = vmatprep.subr.mxu0 0.0
    %2660 = vmatpush1.msra.mxu0 0.0
    %2661 = vmatprep.subr.mxu0 0.0
    %2662 = vmatpush1.msra.mxu0 0.0
    %2663 = vmatprep.subr.mxu0 0.0
    %2664 = vmatpush1.msra.mxu0 0.0
    %2665 = vmatprep.subr.mxu0 0.0
    %2666 = vmatpush1.msra.mxu0 0.0
    %2667 = vmatprep.subr.mxu0 0.0
    %2668 = vmatpush1.msra.mxu0 0.0
    %2669 = vmatprep.subr.mxu0 0.0
    %2670 = vmatpush1.msra.mxu0 0.0
    %2671 = vmatprep.subr.mxu0 0.0
    %2672 = vmatpush1.msra.mxu0 0.0
    %2673 = vmatprep.subr.mxu0 0.0
    %2674 = vmatpush1.msra.mxu0 0.0
    %2675 = vmatprep.subr.mxu0 0.0
    %2676 = vmatpush1.msra.mxu0 0.0
    %2677 = vmatprep.subr.mxu0 0.0
    %2678 = vmatpush1.msra.mxu0 0.0
    %2679 = vmatprep.subr.mxu0 0.0
    %2680 = vmatpush1.msra.mxu0 0.0
    %2681 = vmatprep.subr.mxu0 0.0
    %2682 = vmatpush1.msra.mxu0 0.0
    %2683 = vmatprep.subr.mxu0 0.0
    %2684 = vmatpush1.msra.mxu0 0.0
    %2685 = vmatprep.subr.mxu0 0.0
    %2686 = vmatpush1.msra.mxu0 0.0
    %2687 = vmatprep.subr.mxu0 0.0
    %2688 = vmatpush1.msra.mxu0 0.0
    %2689 = vmatprep.subr.mxu0 0.0
    %2690 = vmatpush1.msra.mxu0 0.0
    %2691 = vmatprep.subr.mxu0 0.0
    %2692 = vmatpush1.msra.mxu0 0.0
    %2693 = vmatprep.subr.mxu0 0.0
    %2694 = vmatpush1.msra.mxu0 0.0
    %2695 = vmatprep.subr.mxu0 0.0
    %2696 = vmatpush1.msra.mxu0 0.0
    %2697 = vmatprep.subr.mxu0 0.0
    %2698 = vmatpush1.msra.mxu0 0.0
    %2699 = vmatprep.subr.mxu0 0.0
    %2700 = vmatpush1.msra.mxu0 0.0
    %2701 = vmatprep.subr.mxu0 0.0
    %2702 = vmatpush1.msra.mxu0 0.0
    %2703 = vmatprep.subr.mxu0 0.0
    %2704 = vmatpush1.msra.mxu0 0.0
    %2705 = vmatprep.subr.mxu0 0.0
    %2706 = vmatpush1.msra.mxu0 0.0
    %2707 = vmatprep.subr.mxu0 0.0
    %2708 = vmatpush1.msra.mxu0 0.0
    %2709 = vmatprep.mubr.f32.mxu0 0.0
    %2710 = vmatmul.mubr.f32.gmra.mrb[0].mxu0 %v2640
    %v2711 = vpop.f32.mrb[0].mxu0
    %v2712 = vadd.f32 0.0, %v2711
    %v2713 = vpop.f32.mrb[0].mxu0
    %2714 = vmatprep.mubr.f32.mxu0 0.0
    %2715 = vmatmul.mubr.f32.gmra.mrb[0].mxu0 %v2643
    %v2716 = vpop.f32.mrb[0].mxu0
    %v2717 = vadd.f32 0.0, %v2716
    %v2718 = vpop.f32.mrb[0].mxu0
    %2719 = vdwg.mxu0
    %v2720 = vmul.f32 %v2712, 0.5
    %v2721 = vmul.f32 %v2717, 0.5
    %v2722 = vmax.f32 %v2720, %v2721
    %v2723 = vsub.f32 %v2720, %v2722
    %v2724 = vmul.f32 %v2723, 1.442695
    %v2725 = vpow.pop %v2724
    %v2726 = vsub.f32 %v2721, %v2722
    %v2727 = vmul.f32 %v2726, 1.442695
    %v2728 = vpow.pop %v2727
    %v2729 = vadd.f32 %v2725, %v2728
    %v2730 = vrcp.pop %v2729
    %v2731 = vmul.f32 %v2725, %v2730
    %v2732 = vmul.f32 %v2728, %v2730
    %v2734 = vsel %vm716, %v2731, 0
    %v2737 = vsel %vm716, %v2732, 0
    %2739 = vmatprep.subr.mxu0 0.0
    %2740 = vmatpush1.msra.mxu0 %v262
    %2741 = vmatprep.subr.mxu0 0.0
    %2742 = vmatpush1.msra.mxu0 0.0
    %2743 = vmatprep.subr.mxu0 0.0
    %2744 = vmatpush1.msra.mxu0 0.0
    %2745 = vmatprep.subr.mxu0 0.0
    %2746 = vmatpush1.msra.mxu0 0.0
    %2747 = vmatprep.subr.mxu0 0.0
    %2748 = vmatpush1.msra.mxu0 0.0
    %2749 = vmatprep.subr.mxu0 0.0
    %2750 = vmatpush1.msra.mxu0 0.0
    %2751 = vmatprep.subr.mxu0 0.0
    %2752 = vmatpush1.msra.mxu0 0.0
    %2753 = vmatprep.subr.mxu0 0.0
    %2754 = vmatpush1.msra.mxu0 0.0
    %2755 = vmatprep.subr.mxu0 0.0
    %2756 = vmatpush1.msra.mxu0 0.0
    %2757 = vmatprep.subr.mxu0 0.0
    %2758 = vmatpush1.msra.mxu0 0.0
    %2759 = vmatprep.subr.mxu0 0.0
    %2760 = vmatpush1.msra.mxu0 0.0
    %2761 = vmatprep.subr.mxu0 0.0
    %2762 = vmatpush1.msra.mxu0 0.0
    %2763 = vmatprep.subr.mxu0 0.0
    %2764 = vmatpush1.msra.mxu0 0.0
    %2765 = vmatprep.subr.mxu0 0.0
    %2766 = vmatpush1.msra.mxu0 0.0
    %2767 = vmatprep.subr.mxu0 0.0
    %2768 = vmatpush1.msra.mxu0 0.0
    %2769 = vmatprep.subr.mxu0 0.0
    %2770 = vmatpush1.msra.mxu0 0.0
    %2771 = vmatprep.subr.mxu0 0.0
    %2772 = vmatpush1.msra.mxu0 0.0
    %2773 = vmatprep.subr.mxu0 0.0
    %2774 = vmatpush1.msra.mxu0 0.0
    %2775 = vmatprep.subr.mxu0 0.0
    %2776 = vmatpush1.msra.mxu0 0.0
    %2777 = vmatprep.subr.mxu0 0.0
    %2778 = vmatpush1.msra.mxu0 0.0
    %2779 = vmatprep.subr.mxu0 0.0
    %2780 = vmatpush1.msra.mxu0 0.0
    %2781 = vmatprep.subr.mxu0 0.0
    %2782 = vmatpush1.msra.mxu0 0.0
    %2783 = vmatprep.subr.mxu0 0.0
    %2784 = vmatpush1.msra.mxu0 0.0
    %2785 = vmatprep.subr.mxu0 0.0
    %2786 = vmatpush1.msra.mxu0 0.0
    %2787 = vmatprep.subr.mxu0 0.0
    %2788 = vmatpush1.msra.mxu0 0.0
    %2789 = vmatprep.subr.mxu0 0.0
    %2790 = vmatpush1.msra.mxu0 0.0
    %2791 = vmatprep.subr.mxu0 0.0
    %2792 = vmatpush1.msra.mxu0 0.0
    %2793 = vmatprep.subr.mxu0 0.0
    %2794 = vmatpush1.msra.mxu0 0.0
    %2795 = vmatprep.subr.mxu0 0.0
    %2796 = vmatpush1.msra.mxu0 0.0
    %2797 = vmatprep.subr.mxu0 0.0
    %2798 = vmatpush1.msra.mxu0 0.0
    %2799 = vmatprep.subr.mxu0 0.0
    %2800 = vmatpush1.msra.mxu0 0.0
    %2801 = vmatprep.subr.mxu0 0.0
    %2802 = vmatpush1.msra.mxu0 0.0
    %2803 = vmatprep.mubr.f32.mxu0 0.0
    %2804 = vmatmul.mubr.f32.gmra.mrb[0].mxu0 %v2734
    %v2805 = vpop.f32.mrb[0].mxu0
    %v2806 = vadd.f32 0.0, %v2805
    %v2807 = vpop.f32.mrb[0].mxu0
    %2808 = vmatprep.mubr.f32.mxu0 0.0
    %2809 = vmatmul.mubr.f32.gmra.mrb[0].mxu0 %v2737
    %v2810 = vpop.f32.mrb[0].mxu0
    %v2811 = vadd.f32 0.0, %v2810
    %v2812 = vpop.f32.mrb[0].mxu0
    %2813 = vdwg.mxu0
    %v2814 = vmul.f32 %v2806, %v2624
    %v2815 = vmul.f32 %v2811, %v2636
    %v2816 = vadd.f32 %v2814, %v2815
    %s2817 = scalar_lea.vmem %s11, 48
    %v2818 = vld [vmem:[%s2817] sm:$0xf]
    %v2819 = vld [vmem:[%s2817 + $0x4] sm:$0xf]
    %v2820 = vld [vmem:[%s2817 + $0x8] sm:$0xf]
    %v2821 = vld [vmem:[%s2817 + $0xc] sm:$0xf]
    %v2822 = vpack.c.bf16 %v2816, %v2816
    %s2823 = scalar_lea.vmem [#allocation13], 3
    %v2824 = vld [vmem:[%s2823] sm:$0x1]
    %v2826 = vlaneseq
    %v2827 = vshrl.u32 %v2826, 7
    %v2828 = vsub.s32 0, %v2827
    %v2829 = vrot.slane %v2824, %v2828
    %v2835 = vunpack.c.l.b16 %v2818
    %v2836 = vunpack.c.l.b16 %v2819
    %v2837 = vunpack.c.l.b16 %v2820
    %v2838 = vunpack.c.l.b16 %v2821
    %v2839 = vpack.c.b16 %v2836, %v2835
    %v2840 = vpack.c.b16 %v2838, %v2837
    %v2844 = vsel %vm442, %v2822, 0
    %2846 = vmatprep.subr.bf16.mxu0 0
    %2847 = vmatpush1.bf16.msra.mxu0 %v2839
    %2848 = vmatprep.subr.bf16.mxu0 0
    %2849 = vmatpush1.bf16.msra.mxu0 %v2840
    %2850 = vmatprep.subr.bf16.mxu0 0
    %2851 = vmatpush1.bf16.msra.mxu0 0
    %2852 = vmatprep.subr.bf16.mxu0 0
    %2853 = vmatpush1.bf16.msra.mxu0 0
    %2854 = vmatprep.subr.bf16.mxu0 0
    %2855 = vmatpush1.bf16.msra.mxu0 0
    %2856 = vmatprep.subr.bf16.mxu0 0
    %2857 = vmatpush1.bf16.msra.mxu0 0
    %2858 = vmatprep.subr.bf16.mxu0 0
    %2859 = vmatpush1.bf16.msra.mxu0 0
    %2860 = vmatprep.subr.bf16.mxu0 0
    %2861 = vmatpush1.bf16.msra.mxu0 0
    %2862 = vmatprep.subr.bf16.mxu0 0
    %2863 = vmatpush1.bf16.msra.mxu0 0
    %2864 = vmatprep.subr.bf16.mxu0 0
    %2865 = vmatpush1.bf16.msra.mxu0 0
    %2866 = vmatprep.subr.bf16.mxu0 0
    %2867 = vmatpush1.bf16.msra.mxu0 0
    %2868 = vmatprep.subr.bf16.mxu0 0
    %2869 = vmatpush1.bf16.msra.mxu0 0
    %2870 = vmatprep.subr.bf16.mxu0 0
    %2871 = vmatpush1.bf16.msra.mxu0 0
    %2872 = vmatprep.subr.bf16.mxu0 0
    %2873 = vmatpush1.bf16.msra.mxu0 0
    %2874 = vmatprep.subr.bf16.mxu0 0
    %2875 = vmatpush1.bf16.msra.mxu0 0
    %2876 = vmatprep.subr.bf16.mxu0 0
    %2877 = vmatpush1.bf16.msra.mxu0 0
    %2878 = vmatprep.mubr.bf16.mxu0 0
    %2879 = vmatmul.mubr.bf16.gmra.mrb[0].mxu0 %v2844
    %v2880 = vpop.f32.mrb[0].mxu0
    %v2881 = vadd.f32 %v2829, %v2880
    %v2882 = vpop.f32.mrb[0].mxu0
    %v2883 = vpop.f32.mrb[0].mxu0
    %v2884 = vpop.f32.mrb[0].mxu0
    %2885 = vdwg.mxu0
    %v2886 = vadd.f32 %v2429, %v2881
    %s2887 = scalar_lea.vmem [#allocation14], 3
    %v2888 = vld [vmem:[%s2887] sm:$0x1]
    %s2889 = scalar_lea.vmem [#allocation16], 3
    %v2890 = vld [vmem:[%s2889] sm:$0x1]
    %v2891 = vsel %vm442, %v2886, 0.0
    %2892 = vadd.xlane.f32.xlu0 %v2891
    %v2893 = vpop.xlane.xlu0 %2892
    %v2894 = vmul.f32 %v2893, %v874
    %v2895 = vsub.f32 %v2886, %v2894
    %v2896 = vmul.f32 %v2895, %v2895
    %v2897 = vsel %vm442, %v2896, 0.0
    %2898 = vadd.xlane.f32.xlu0 %v2897
    %v2899 = vpop.xlane.xlu0 %2898
    %v2900 = vmul.f32 %v2899, %v874
    %v2901 = vadd.f32 %v2900, 1e-05
    %v2902 = vrsqrt.pop %v2901
    %v2903 = vmul.f32 %v2895, %v2902
    %v2905 = vlaneseq
    %v2906 = vshrl.u32 %v2905, 7
    %v2907 = vsub.s32 0, %v2906
    %v2908 = vrot.slane %v2888, %v2907
    %v2910 = vmul.f32 %v2903, %v2908
    %v2912 = vlaneseq
    %v2913 = vshrl.u32 %v2912, 7
    %v2914 = vsub.s32 0, %v2913
    %v2915 = vrot.slane %v2890, %v2914
    %v2917 = vadd.f32 %v2910, %v2915
    %s2918 = scalar_lea.vmem %s15, 48
    %v2919 = vld [vmem:[%s2918] sm:$0xf]
    %v2920 = vld [vmem:[%s2918 + $0x4] sm:$0xf]
    %v2921 = vld [vmem:[%s2918 + $0x8] sm:$0xf]
    %v2922 = vld [vmem:[%s2918 + $0xc] sm:$0xf]
    %v2923 = vpack.c.bf16 %v2917, %v2917
    %s2924 = scalar_lea.vmem [#allocation17], 3
    %v2925 = vld [vmem:[%s2924] sm:$0x1]
    %v2927 = vlaneseq
    %v2928 = vshrl.u32 %v2927, 7
    %v2929 = vsub.s32 0, %v2928
    %v2930 = vrot.slane %v2925, %v2929
    %v2936 = vunpack.c.l.b16 %v2919
    %v2937 = vunpack.c.l.b16 %v2920
    %v2938 = vunpack.c.l.b16 %v2921
    %v2939 = vunpack.c.l.b16 %v2922
    %v2940 = vpack.c.b16 %v2937, %v2936
    %v2941 = vpack.c.b16 %v2939, %v2938
    %v2945 = vsel %vm442, %v2923, 0
    %2947 = vmatprep.subr.bf16.mxu0 0
    %2948 = vmatpush1.bf16.msra.mxu0 %v2940
    %2949 = vmatprep.subr.bf16.mxu0 0
    %2950 = vmatpush1.bf16.msra.mxu0 %v2941
    %2951 = vmatprep.subr.bf16.mxu0 0
    %2952 = vmatpush1.bf16.msra.mxu0 0
    %2953 = vmatprep.subr.bf16.mxu0 0
    %2954 = vmatpush1.bf16.msra.mxu0 0
    %2955 = vmatprep.subr.bf16.mxu0 0
    %2956 = vmatpush1.bf16.msra.mxu0 0
    %2957 = vmatprep.subr.bf16.mxu0 0
    %2958 = vmatpush1.bf16.msra.mxu0 0
    %2959 = vmatprep.subr.bf16.mxu0 0
    %2960 = vmatpush1.bf16.msra.mxu0 0
    %2961 = vmatprep.subr.bf16.mxu0 0
    %2962 = vmatpush1.bf16.msra.mxu0 0
    %2963 = vmatprep.subr.bf16.mxu0 0
    %2964 = vmatpush1.bf16.msra.mxu0 0
    %2965 = vmatprep.subr.bf16.mxu0 0
    %2966 = vmatpush1.bf16.msra.mxu0 0
    %2967 = vmatprep.subr.bf16.mxu0 0
    %2968 = vmatpush1.bf16.msra.mxu0 0
    %2969 = vmatprep.subr.bf16.mxu0 0
    %2970 = vmatpush1.bf16.msra.mxu0 0
    %2971 = vmatprep.subr.bf16.mxu0 0
    %2972 = vmatpush1.bf16.msra.mxu0 0
    %2973 = vmatprep.subr.bf16.mxu0 0
    %2974 = vmatpush1.bf16.msra.mxu0 0
    %2975 = vmatprep.subr.bf16.mxu0 0
    %2976 = vmatpush1.bf16.msra.mxu0 0
    %2977 = vmatprep.subr.bf16.mxu0 0
    %2978 = vmatpush1.bf16.msra.mxu0 0
    %2979 = vmatprep.mubr.bf16.mxu0 0
    %2980 = vmatmul.mubr.bf16.gmra.mrb[0].mxu0 %v2945
    %v2981 = vpop.f32.mrb[0].mxu0
    %v2982 = vadd.f32 %v2930, %v2981
    %v2983 = vpop.f32.mrb[0].mxu0
    %v2984 = vpop.f32.mrb[0].mxu0
    %v2985 = vpop.f32.mrb[0].mxu0
    %2986 = vdwg.mxu0
    %v2987 = vmax.f32 %v2982, 0.0
    %s2988 = scalar_lea.vmem %s17, 96
    %v2989 = vld [vmem:[%s2988] sm:$0xf]
    %v2990 = vld [vmem:[%s2988 + $0x4] sm:$0xf]
    %v2991 = vld [vmem:[%s2988 + $0x8] sm:$0xf]
    %v2992 = vld [vmem:[%s2988 + $0xc] sm:$0xf]
    %v2993 = vld [vmem:[%s2988 + $0x10] sm:$0xf]
    %v2994 = vld [vmem:[%s2988 + $0x14] sm:$0xf]
    %v2995 = vld [vmem:[%s2988 + $0x18] sm:$0xf]
    %v2996 = vld [vmem:[%s2988 + $0x1c] sm:$0xf]
    %v2997 = vpack.c.bf16 %v2987, %v2987
    %s2998 = scalar_lea.vmem [#allocation19], 3
    %v2999 = vld [vmem:[%s2998] sm:$0x1]
    %v3001 = vlaneseq
    %v3002 = vshrl.u32 %v3001, 7
    %v3003 = vsub.s32 0, %v3002
    %v3004 = vrot.slane %v2999, %v3003
    %v3014 = vunpack.c.l.b16 %v2989
    %v3015 = vunpack.c.l.b16 %v2990
    %v3016 = vunpack.c.l.b16 %v2991
    %v3017 = vunpack.c.l.b16 %v2992
    %v3018 = vunpack.c.l.b16 %v2993
    %v3019 = vunpack.c.l.b16 %v2994
    %v3020 = vunpack.c.l.b16 %v2995
    %v3021 = vunpack.c.l.b16 %v2996
    %v3022 = vpack.c.b16 %v3015, %v3014
    %v3023 = vpack.c.b16 %v3017, %v3016
    %v3024 = vpack.c.b16 %v3019, %v3018
    %v3025 = vpack.c.b16 %v3021, %v3020
    %v3031 = vsel %vm297, %v2997, 0
    %3033 = vmatprep.subr.bf16.mxu0 0
    %3034 = vmatpush1.bf16.msra.mxu0 %v3022
    %3035 = vmatprep.subr.bf16.mxu0 0
    %3036 = vmatpush1.bf16.msra.mxu0 %v3023
    %3037 = vmatprep.subr.bf16.mxu0 0
    %3038 = vmatpush1.bf16.msra.mxu0 %v3024
    %3039 = vmatprep.subr.bf16.mxu0 0
    %3040 = vmatpush1.bf16.msra.mxu0 %v3025
    %3041 = vmatprep.subr.bf16.mxu0 0
    %3042 = vmatpush1.bf16.msra.mxu0 0
    %3043 = vmatprep.subr.bf16.mxu0 0
    %3044 = vmatpush1.bf16.msra.mxu0 0
    %3045 = vmatprep.subr.bf16.mxu0 0
    %3046 = vmatpush1.bf16.msra.mxu0 0
    %3047 = vmatprep.subr.bf16.mxu0 0
    %3048 = vmatpush1.bf16.msra.mxu0 0
    %3049 = vmatprep.subr.bf16.mxu0 0
    %3050 = vmatpush1.bf16.msra.mxu0 0
    %3051 = vmatprep.subr.bf16.mxu0 0
    %3052 = vmatpush1.bf16.msra.mxu0 0
    %3053 = vmatprep.subr.bf16.mxu0 0
    %3054 = vmatpush1.bf16.msra.mxu0 0
    %3055 = vmatprep.subr.bf16.mxu0 0
    %3056 = vmatpush1.bf16.msra.mxu0 0
    %3057 = vmatprep.subr.bf16.mxu0 0
    %3058 = vmatpush1.bf16.msra.mxu0 0
    %3059 = vmatprep.subr.bf16.mxu0 0
    %3060 = vmatpush1.bf16.msra.mxu0 0
    %3061 = vmatprep.subr.bf16.mxu0 0
    %3062 = vmatpush1.bf16.msra.mxu0 0
    %3063 = vmatprep.subr.bf16.mxu0 0
    %3064 = vmatpush1.bf16.msra.mxu0 0
    %3065 = vmatprep.mubr.bf16.mxu0 0
    %3066 = vmatmul.mubr.bf16.gmra.mrb[0].mxu0 %v3031
    %v3067 = vpop.f32.mrb[0].mxu0
    %v3068 = vadd.f32 %v3004, %v3067
    %v3069 = vpop.f32.mrb[0].mxu0
    %v3070 = vpop.f32.mrb[0].mxu0
    %v3071 = vpop.f32.mrb[0].mxu0
    %3072 = vdwg.mxu0
    %v3073 = vadd.f32 %v2917, %v3068
    %s3074 = scalar_lea.vmem [#allocation20], 3
    %v3075 = vld [vmem:[%s3074] sm:$0x1]
    %s3076 = scalar_lea.vmem [#allocation22], 3
    %v3077 = vld [vmem:[%s3076] sm:$0x1]
    %v3078 = vsel %vm442, %v3073, 0.0
    %3079 = vadd.xlane.f32.xlu0 %v3078
    %v3080 = vpop.xlane.xlu0 %3079
    %v3081 = vmul.f32 %v3080, %v874
    %v3082 = vsub.f32 %v3073, %v3081
    %v3083 = vmul.f32 %v3082, %v3082
    %v3084 = vsel %vm442, %v3083, 0.0
    %3085 = vadd.xlane.f32.xlu0 %v3084
    %v3086 = vpop.xlane.xlu0 %3085
    %v3087 = vmul.f32 %v3086, %v874
    %v3088 = vadd.f32 %v3087, 1e-05
    %v3089 = vrsqrt.pop %v3088
    %v3090 = vmul.f32 %v3082, %v3089
    %v3092 = vlaneseq
    %v3093 = vshrl.u32 %v3092, 7
    %v3094 = vsub.s32 0, %v3093
    %v3095 = vrot.slane %v3075, %v3094
    %v3097 = vmul.f32 %v3090, %v3095
    %v3099 = vlaneseq
    %v3100 = vshrl.u32 %v3099, 7
    %v3101 = vsub.s32 0, %v3100
    %v3102 = vrot.slane %v3077, %v3101
    %v3104 = vadd.f32 %v3097, %v3102
    %v3105 = vld [vmem:[%s21] sm:$0xf]
    %v3106 = vld [vmem:[%s21 + $0x4] sm:$0xf]
    %v3107 = vld [vmem:[%s21 + $0x8] sm:$0xf]
    %v3108 = vld [vmem:[%s21 + $0xc] sm:$0xf]
    %v3109 = vpack.c.bf16 %v3104, %v3104
    %v3110 = vld [vmem:[%s22] sm:$0x1]
    %v3112 = vlaneseq
    %v3113 = vshrl.u32 %v3112, 7
    %v3114 = vsub.s32 0, %v3113
    %v3115 = vrot.slane %v3110, %v3114
    %v3121 = vunpack.c.l.b16 %v3105
    %v3122 = vunpack.c.l.b16 %v3106
    %v3123 = vunpack.c.l.b16 %v3107
    %v3124 = vunpack.c.l.b16 %v3108
    %v3125 = vpack.c.b16 %v3122, %v3121
    %v3126 = vpack.c.b16 %v3124, %v3123
    %v3130 = vsel %vm442, %v3109, 0
    %3132 = vmatprep.subr.bf16.mxu0 0
    %3133 = vmatpush1.bf16.msra.mxu0 %v3125
    %3134 = vmatprep.subr.bf16.mxu0 0
    %3135 = vmatpush1.bf16.msra.mxu0 %v3126
    %3136 = vmatprep.subr.bf16.mxu0 0
    %3137 = vmatpush1.bf16.msra.mxu0 0
    %3138 = vmatprep.subr.bf16.mxu0 0
    %3139 = vmatpush1.bf16.msra.mxu0 0
    %3140 = vmatprep.subr.bf16.mxu0 0
    %3141 = vmatpush1.bf16.msra.mxu0 0
    %3142 = vmatprep.subr.bf16.mxu0 0
    %3143 = vmatpush1.bf16.msra.mxu0 0
    %3144 = vmatprep.subr.bf16.mxu0 0
    %3145 = vmatpush1.bf16.msra.mxu0 0
    %3146 = vmatprep.subr.bf16.mxu0 0
    %3147 = vmatpush1.bf16.msra.mxu0 0
    %3148 = vmatprep.subr.bf16.mxu0 0
    %3149 = vmatpush1.bf16.msra.mxu0 0
    %3150 = vmatprep.subr.bf16.mxu0 0
    %3151 = vmatpush1.bf16.msra.mxu0 0
    %3152 = vmatprep.subr.bf16.mxu0 0
    %3153 = vmatpush1.bf16.msra.mxu0 0
    %3154 = vmatprep.subr.bf16.mxu0 0
    %3155 = vmatpush1.bf16.msra.mxu0 0
    %3156 = vmatprep.subr.bf16.mxu0 0
    %3157 = vmatpush1.bf16.msra.mxu0 0
    %3158 = vmatprep.subr.bf16.mxu0 0
    %3159 = vmatpush1.bf16.msra.mxu0 0
    %3160 = vmatprep.subr.bf16.mxu0 0
    %3161 = vmatpush1.bf16.msra.mxu0 0
    %3162 = vmatprep.subr.bf16.mxu0 0
    %3163 = vmatpush1.bf16.msra.mxu0 0
    %3164 = vmatprep.mubr.bf16.mxu0 0
    %3165 = vmatmul.mubr.bf16.gmra.mrb[0].mxu0 %v3130
    %v3166 = vpop.f32.mrb[0].mxu0
    %v3167 = vadd.f32 %v3115, %v3166
    %v3168 = vpop.f32.mrb[0].mxu0
    %v3169 = vpop.f32.mrb[0].mxu0
    %v3170 = vpop.f32.mrb[0].mxu0
    %3171 = vdwg.mxu0
    %v3172 = vmax.f32 %v3167, 0.0
    %v3173 = vld [vmem:[%s23] sm:$0xf]
    %v3174 = vld [vmem:[%s23 + $0x4] sm:$0xf]
    %v3175 = vld [vmem:[%s23 + $0x8] sm:$0xf]
    %v3176 = vld [vmem:[%s23 + $0xc] sm:$0xf]
    %v3177 = vpack.c.bf16 %v3172, %v3172
    %v3178 = vld [vmem:[%s24] sm:$0x1]
    %v3180 = vlaneseq
    %v3181 = vshrl.u32 %v3180, 7
    %v3182 = vsub.s32 0, %v3181
    %v3183 = vrot.slane %v3178, %v3182
    %v3189 = vunpack.c.l.b16 %v3173
    %v3190 = vunpack.c.l.b16 %v3174
    %v3191 = vunpack.c.l.b16 %v3175
    %v3192 = vunpack.c.l.b16 %v3176
    %v3193 = vpack.c.b16 %v3190, %v3189
    %v3194 = vpack.c.b16 %v3192, %v3191
    %v3198 = vsel %vm442, %v3177, 0
    %3200 = vmatprep.subr.bf16.mxu0 0
    %3201 = vmatpush1.bf16.msra.mxu0 %v3193
    %3202 = vmatprep.subr.bf16.mxu0 0
    %3203 = vmatpush1.bf16.msra.mxu0 %v3194
    %3204 = vmatprep.subr.bf16.mxu0 0
    %3205 = vmatpush1.bf16.msra.mxu0 0
    %3206 = vmatprep.subr.bf16.mxu0 0
    %3207 = vmatpush1.bf16.msra.mxu0 0
    %3208 = vmatprep.subr.bf16.mxu0 0
    %3209 = vmatpush1.bf16.msra.mxu0 0
    %3210 = vmatprep.subr.bf16.mxu0 0
    %3211 = vmatpush1.bf16.msra.mxu0 0
    %3212 = vmatprep.subr.bf16.mxu0 0
    %3213 = vmatpush1.bf16.msra.mxu0 0
    %3214 = vmatprep.subr.bf16.mxu0 0
    %3215 = vmatpush1.bf16.msra.mxu0 0
    %3216 = vmatprep.subr.bf16.mxu0 0
    %3217 = vmatpush1.bf16.msra.mxu0 0
    %3218 = vmatprep.subr.bf16.mxu0 0
    %3219 = vmatpush1.bf16.msra.mxu0 0
    %3220 = vmatprep.subr.bf16.mxu0 0
    %3221 = vmatpush1.bf16.msra.mxu0 0
    %3222 = vmatprep.subr.bf16.mxu0 0
    %3223 = vmatpush1.bf16.msra.mxu0 0
    %3224 = vmatprep.subr.bf16.mxu0 0
    %3225 = vmatpush1.bf16.msra.mxu0 0
    %3226 = vmatprep.subr.bf16.mxu0 0
    %3227 = vmatpush1.bf16.msra.mxu0 0
    %3228 = vmatprep.subr.bf16.mxu0 0
    %3229 = vmatpush1.bf16.msra.mxu0 0
    %3230 = vmatprep.subr.bf16.mxu0 0
    %3231 = vmatpush1.bf16.msra.mxu0 0
    %3232 = vmatprep.mubr.bf16.mxu0 0
    %3233 = vmatmul.mubr.bf16.gmra.mrb[0].mxu0 %v3198
    %v3234 = vpop.f32.mrb[0].mxu0
    %v3235 = vadd.f32 %v3183, %v3234
    %v3236 = vpop.f32.mrb[0].mxu0
    %v3237 = vpop.f32.mrb[0].mxu0
    %v3238 = vpop.f32.mrb[0].mxu0
    %3239 = vdwg.mxu0
    %vm3240 = vcmask 125952
    %3241 = vst.msk [vmem:[#allocation23] sm:$0xf] %vm3240, %v3235
    // Predicated region
    $region162: #{tpu_custom_call.1} parent=1 // pred_check
      _
    $region163: #{tpu_custom_call.1} parent=1 // pred_check_branch
      %3243 = sbr.rel (0) target = $region165
    $region164: #{tpu_custom_call.1} parent=1 // pred_region
      %s3245 = ssub.s32 64, 64
      %3246 = vsyncadd [#allocation4], %s3245
      %s3248 = sshll.u32 [#allocation23], 4
      %s3249 = int_to_ptr.vmem [resolvable:$true] %s3248
      %3251 = dma.vmem_to_hbm [thread:$0]  %s3249, 64, %s27, [#allocation4]
    $region165: #{tpu_custom_call.1} parent=1 // pred_fallthru
      _
    // Predicated region
    $region166: #{tpu_custom_call.1} parent=1 // pred_check
      _
    $region167: #{tpu_custom_call.1} parent=1 // pred_check_branch
      %3253 = sbr.rel (0) target = $region169
    $region168: #{tpu_custom_call.1} parent=1 // pred_region
      %3254 = dma.done [#allocation4], 64
    $region169: #{tpu_custom_call.1} parent=1 // pred_fallthru
      _
    %3255 = vsyncpa [#allocation3], 1
    %3256 = vsyncpa [#allocation6], 1
    %3257 = vsyncpa [#allocation9], 1
    %3258 = vsyncpa [#allocation12], 1
    %3259 = vsyncpa [#allocation15], 1
    %3260 = vsyncpa [#allocation18], 1
    %3261 = vsyncpa [#allocation21], 1
    %3262 = vsyncpa [#allocation4], 1

</llo_original>
